<compile_context>
chip_gen: v7x
topology: tpu7x:2x2x1
jax: 0.10.0
libtpu: 0.0.40
codegen_flags: <defaults>
</compile_context>

<pallas_src>
import functools

import jax
import jax.numpy as jnp
from jax import lax
from jax.experimental import pallas as pl
from jax.experimental.pallas import tpu as pltpu


_N_OUT = 3  # packed miRNA embeddings, packed disease embeddings, padded Y_hat


# ---------------------------------------------------------------------------
# In-kernel building blocks (pure value math on VMEM-resident tiles)
# ---------------------------------------------------------------------------
def _mm(a, b):
    return jnp.dot(a, b, preferred_element_type=jnp.float32)


def _pad_rows(x, pad):
    """Append `pad` zero rows (static; identity when pad == 0)."""
    if pad == 0:
        return x
    return jnp.concatenate(
        [x, jnp.zeros((pad, x.shape[1]), x.dtype)], axis=0)


def _normalize_adj(a):
    """GCN normalization with self loops: D^-1/2 (A + I) D^-1/2, in-kernel.

    Row/column degree factors are computed with two reductions (avoids an
    in-kernel transpose); identical to the symmetric formula for the
    symmetric adjacencies used here.
    """
    n = a.shape[0]
    eye = (lax.broadcasted_iota(jnp.int32, (n, n), 0)
           == lax.broadcasted_iota(jnp.int32, (n, n), 1)).astype(a.dtype)
    a = a + eye
    d_row = lax.rsqrt(jnp.maximum(jnp.sum(a, axis=1, keepdims=True), 1e-12))
    d_col = lax.rsqrt(jnp.maximum(jnp.sum(a, axis=0, keepdims=True), 1e-12))
    return a * d_row * d_col


def _fc(x, p):
    """FullConnectedLayer: 3 x (Linear + ReLU); dropout(p=0) is identity."""
    h = jnp.maximum(_mm(x, p["w1"][...]) + p["b1"][...], 0.0)
    h = jnp.maximum(_mm(h, p["w2"][...]) + p["b2"][...], 0.0)
    h = jnp.maximum(_mm(h, p["w3"][...]) + p["b3"][...], 0.0)
    return h


def _sub_model(x, adj_refs, p):
    """SubModel forward at the true node count n. Returns (X, X1, X2, X3)."""
    n, feat = x.shape
    gcn_names = ("gcn1", "gcn2", "gcn3")
    adjs = [_normalize_adj(adj_refs[i][...]) for i in range(3)]

    # Fused first feature transform of the three GCN branches:
    # one (n, F) @ (F, 3F) matmul instead of three (n, F) @ (F, F).
    w1_cat = jnp.concatenate([p[g]["w1"][...] for g in gcn_names], axis=1)
    xw = _mm(x, w1_cat)                                        # (n, 3F)

    hs = []
    for i, g in enumerate(gcn_names):
        gp = p[g]
        h = jnp.maximum(
            _mm(adjs[i], xw[:, i * feat:(i + 1) * feat]) + gp["b1"][...], 0.0)
        h = jnp.maximum(
            _mm(adjs[i], _mm(h, gp["w2"][...])) + gp["b2"][...], 0.0)
        hs.append(h)

    # Shared MLP2: row-stack the three branches -> one FC chain
    # (3 matmuls with M = 3n instead of 9 matmuls with M = n).
    x123 = _fc(jnp.concatenate(hs, axis=0), p["linear2"])      # (3n, 64)
    x1, x2, x3 = x123[:n], x123[n:2 * n], x123[2 * n:]
    x0 = _fc(x, p["linear1"])                                  # (n, 64)
    return x0 + x1 + x2 + x3, x1, x2, x3


def _fused_forward_kernel(*refs, in_tree, mi_pad, d_pad):
    in_refs = refs[:len(refs) - _N_OUT]
    m_out_ref, d_out_ref, y_out_ref = refs[len(refs) - _N_OUT:]
    inp = jax.tree_util.tree_unflatten(in_tree, list(in_refs))

    m_sum, m1, m2, m3 = _sub_model(inp["mi_x"][...], inp["mi_a"], inp["mi_p"])
    d_sum, d1, d2, d3 = _sub_model(inp["d_x"][...], inp["d_a"], inp["d_p"])

    # Lane-dense packed embedding outputs (256 lanes), rows zero-padded to the
    # tile-aligned output shape; the wrapper slices out the 8 user tensors.
    m_out_ref[...] = _pad_rows(
        jnp.concatenate([m_sum, m1, m2, m3], axis=1), mi_pad)
    d_out_ref[...] = _pad_rows(
        jnp.concatenate([d_sum, d1, d2, d3], axis=1), d_pad)

    # Y_hat = m_x @ d_x.T with the transpose folded into the contraction.
    # Padded rows are exact zeros, so padded Y rows/cols are zeros and are
    # sliced off in the wrapper (nothing reduces over padded rows).
    y_out_ref[...] = lax.dot_general(
        _pad_rows(m_sum, mi_pad), _pad_rows(d_sum, d_pad),
        dimension_numbers=(((1,), (1,)), ((), ())),
        preferred_element_type=jnp.float32)


# ---------------------------------------------------------------------------
# Host-side wrapper: one pallas_call, no preprocessing ops, cheap post-slices
# ---------------------------------------------------------------------------
def _round_up(n, m=8):
    return ((n + m - 1) // m) * m


def _full_spec(shape):
    return pl.BlockSpec(shape, lambda i: (0,) * len(shape))


def _f32(x):
    return x if x.dtype == jnp.float32 else x.astype(jnp.float32)


def _prep_params(params):
    """f32 cast (no-op for f32) + keep biases 2-D (1, out).

    The (out,) -> (1, out) reshape is a zero-copy bitcast; it keeps every
    kernel operand rank-2 (robust TPU layout) without any real wrapper work.
    """
    def prep(v):
        v = _f32(v)
        return v.reshape(1, -1) if v.ndim == 1 else v
    return jax.tree_util.tree_map(prep, params)


@jax.jit
def my_model(mi_x, mi_adjs, d_x, d_adjs, mi_params, d_params):
    n_mi, n_d = mi_x.shape[0], d_x.shape[0]
    n_mi_p, n_d_p = _round_up(n_mi), _round_up(n_d)

    inputs = {
        "mi_x": _f32(mi_x),
        "d_x": _f32(d_x),
        "mi_a": tuple(_f32(a) for a in mi_adjs),   # raw adjacencies, unpadded
        "d_a": tuple(_f32(a) for a in d_adjs),
        "mi_p": _prep_params(mi_params),
        "d_p": _prep_params(d_params),
    }
    flat_in, in_tree = jax.tree_util.tree_flatten(inputs)

    out_shape = (
        jax.ShapeDtypeStruct((n_mi_p, 4 * 64), jnp.float32),   # [m|m1|m2|m3]
        jax.ShapeDtypeStruct((n_d_p, 4 * 64), jnp.float32),    # [d|d1|d2|d3]
        jax.ShapeDtypeStruct((n_mi_p, n_d_p), jnp.float32),    # padded Y_hat
    )

    kernel = functools.partial(_fused_forward_kernel, in_tree=in_tree,
                               mi_pad=n_mi_p - n_mi, d_pad=n_d_p - n_d)

    m_out, d_out, y_out = pl.pallas_call(
        kernel,
        out_shape=out_shape,
        grid=(1,),
        in_specs=[_full_spec(x.shape) for x in flat_in],
        out_specs=tuple(_full_spec(s.shape) for s in out_shape),
        compiler_params=pltpu.CompilerParams(
            dimension_semantics=("arbitrary",),
            vmem_limit_bytes=16 * 1024 * 1024),
    )(*flat_in)

    # Cheap XLA slices of the packed, padded kernel outputs.
    m_xo, m_x1, m_x2, m_x3 = (m_out[:n_mi, 64 * i:64 * (i + 1)]
                              for i in range(4))
    d_xo, d_x1, d_x2, d_x3 = (d_out[:n_d, 64 * i:64 * (i + 1)]
                              for i in range(4))
    y_hat = y_out[:n_mi, :n_d]
    return y_hat, m_xo, m_x1, m_x2, m_x3, d_xo, d_x1, d_x2, d_x3


# ---------------------------------------------------------------------------
# Deterministic parameter initialization (PyTorch nn.Linear-style uniform)
# ---------------------------------------------------------------------------
def init_linear(key, fan_in, fan_out):
    kw, kb = jax.random.split(key)
    scale = 1.0 / jnp.sqrt(fan_in)
    w = jax.random.uniform(kw, (fan_in, fan_out), jnp.float32, -scale, scale)
    b = jax.random.uniform(kb, (fan_out,), jnp.float32, -scale, scale)
    return w, b


def init_fc(key, feature_len):
    k1, k2, k3 = jax.random.split(key, 3)
    w1, b1 = init_linear(k1, feature_len, 256)
    w2, b2 = init_linear(k2, 256, 128)
    w3, b3 = init_linear(k3, 128, 64)
    return {"w1": w1, "b1": b1, "w2": w2, "b2": b2, "w3": w3, "b3": b3}


def init_gcn(key, feature_len):
    k1, k2 = jax.random.split(key)
    w1, b1 = init_linear(k1, feature_len, feature_len)
    w2, b2 = init_linear(k2, feature_len, feature_len)
    return {"w1": w1, "b1": b1, "w2": w2, "b2": b2}


def init_submodel(key, feature_len):
    keys = jax.random.split(key, 5)
    return {
        "gcn1": init_gcn(keys[0], feature_len),
        "gcn2": init_gcn(keys[1], feature_len),
        "gcn3": init_gcn(keys[2], feature_len),
        "linear1": init_fc(keys[3], feature_len),
        "linear2": init_fc(keys[4], feature_len),
    }


def random_adj(key, n):
    """Dense symmetric non-negative weighted adjacency (no self loops)."""
    a = jax.random.uniform(key, (n, n), jnp.float32)
    a = (a + a.T) * 0.5
    a = a * (a > 0.5)
    return a * (1.0 - jnp.eye(n, dtype=jnp.float32))


# ---------------------------------------------------------------------------
if __name__ == "__main__":
    key = jax.random.PRNGKey(0)
    (k_mx, k_dx, k_ma1, k_ma2, k_ma3, k_da1, k_da2, k_da3,
     k_mp, k_dp) = jax.random.split(key, 10)

    FEAT = 32          # featureLen
    N_MI = 16          # number of miRNA nodes
    N_DI = 12          # number of disease nodes

    mi_x = jax.random.normal(k_mx, (N_MI, FEAT), jnp.float32)
    d_x = jax.random.normal(k_dx, (N_DI, FEAT), jnp.float32)

    mi_adjs = [random_adj(k, N_MI) for k in (k_ma1, k_ma2, k_ma3)]
    d_adjs = [random_adj(k, N_DI) for k in (k_da1, k_da2, k_da3)]

    mi_params = init_submodel(k_mp, FEAT)
    d_params = init_submodel(k_dp, FEAT)

    outs = my_model(mi_x, mi_adjs, d_x, d_adjs, mi_params, d_params)
    outs = jax.block_until_ready(outs)

    y_hat, m_x, m_x1, m_x2, m_x3, dd_x, d_x1, d_x2, d_x3 = outs
    assert y_hat.shape == (N_MI, N_DI)
    assert m_x.shape == (N_MI, 64) and dd_x.shape == (N_DI, 64)
    assert all(t.shape == (N_MI, 64) for t in (m_x1, m_x2, m_x3))
    assert all(t.shape == (N_DI, 64) for t in (d_x1, d_x2, d_x3))
    assert all(bool(jnp.all(jnp.isfinite(t))) for t in outs)

    print("KERNEL_OK")
</pallas_src>

<mosaic_0001>
module attributes {stable_mosaic.version = 11 : i64} {
  func.func @_fused_forward_kernel(%arg0: i32, %arg1: memref<12x12xf32, #tpu.memory_space<vmem>>, %arg2: memref<12x12xf32, #tpu.memory_space<vmem>>, %arg3: memref<12x12xf32, #tpu.memory_space<vmem>>, %arg4: memref<1x32xf32, #tpu.memory_space<vmem>>, %arg5: memref<1x32xf32, #tpu.memory_space<vmem>>, %arg6: memref<32x32xf32, #tpu.memory_space<vmem>>, %arg7: memref<32x32xf32, #tpu.memory_space<vmem>>, %arg8: memref<1x32xf32, #tpu.memory_space<vmem>>, %arg9: memref<1x32xf32, #tpu.memory_space<vmem>>, %arg10: memref<32x32xf32, #tpu.memory_space<vmem>>, %arg11: memref<32x32xf32, #tpu.memory_space<vmem>>, %arg12: memref<1x32xf32, #tpu.memory_space<vmem>>, %arg13: memref<1x32xf32, #tpu.memory_space<vmem>>, %arg14: memref<32x32xf32, #tpu.memory_space<vmem>>, %arg15: memref<32x32xf32, #tpu.memory_space<vmem>>, %arg16: memref<1x256xf32, #tpu.memory_space<vmem>>, %arg17: memref<1x128xf32, #tpu.memory_space<vmem>>, %arg18: memref<1x64xf32, #tpu.memory_space<vmem>>, %arg19: memref<32x256xf32, #tpu.memory_space<vmem>>, %arg20: memref<256x128xf32, #tpu.memory_space<vmem>>, %arg21: memref<128x64xf32, #tpu.memory_space<vmem>>, %arg22: memref<1x256xf32, #tpu.memory_space<vmem>>, %arg23: memref<1x128xf32, #tpu.memory_space<vmem>>, %arg24: memref<1x64xf32, #tpu.memory_space<vmem>>, %arg25: memref<32x256xf32, #tpu.memory_space<vmem>>, %arg26: memref<256x128xf32, #tpu.memory_space<vmem>>, %arg27: memref<128x64xf32, #tpu.memory_space<vmem>>, %arg28: memref<12x32xf32, #tpu.memory_space<vmem>>, %arg29: memref<16x16xf32, #tpu.memory_space<vmem>>, %arg30: memref<16x16xf32, #tpu.memory_space<vmem>>, %arg31: memref<16x16xf32, #tpu.memory_space<vmem>>, %arg32: memref<1x32xf32, #tpu.memory_space<vmem>>, %arg33: memref<1x32xf32, #tpu.memory_space<vmem>>, %arg34: memref<32x32xf32, #tpu.memory_space<vmem>>, %arg35: memref<32x32xf32, #tpu.memory_space<vmem>>, %arg36: memref<1x32xf32, #tpu.memory_space<vmem>>, %arg37: memref<1x32xf32, #tpu.memory_space<vmem>>, %arg38: memref<32x32xf32, #tpu.memory_space<vmem>>, %arg39: memref<32x32xf32, #tpu.memory_space<vmem>>, %arg40: memref<1x32xf32, #tpu.memory_space<vmem>>, %arg41: memref<1x32xf32, #tpu.memory_space<vmem>>, %arg42: memref<32x32xf32, #tpu.memory_space<vmem>>, %arg43: memref<32x32xf32, #tpu.memory_space<vmem>>, %arg44: memref<1x256xf32, #tpu.memory_space<vmem>>, %arg45: memref<1x128xf32, #tpu.memory_space<vmem>>, %arg46: memref<1x64xf32, #tpu.memory_space<vmem>>, %arg47: memref<32x256xf32, #tpu.memory_space<vmem>>, %arg48: memref<256x128xf32, #tpu.memory_space<vmem>>, %arg49: memref<128x64xf32, #tpu.memory_space<vmem>>, %arg50: memref<1x256xf32, #tpu.memory_space<vmem>>, %arg51: memref<1x128xf32, #tpu.memory_space<vmem>>, %arg52: memref<1x64xf32, #tpu.memory_space<vmem>>, %arg53: memref<32x256xf32, #tpu.memory_space<vmem>>, %arg54: memref<256x128xf32, #tpu.memory_space<vmem>>, %arg55: memref<128x64xf32, #tpu.memory_space<vmem>>, %arg56: memref<16x32xf32, #tpu.memory_space<vmem>>, %arg57: memref<16x256xf32, #tpu.memory_space<vmem>>, %arg58: memref<16x256xf32, #tpu.memory_space<vmem>>, %arg59: memref<16x16xf32, #tpu.memory_space<vmem>>) attributes {dimension_semantics = [#tpu.dimension_semantics<arbitrary>], iteration_bounds = array<i64: 1>, scalar_prefetch = 0 : i64, scratch_operands = 0 : i64, tpu.core_type = #tpu.core_type<tc>, window_params = [{pipeline_mode = #tpu.pipeline_mode<synchronous>, transform_indices = @transform_0, window_bounds = array<i64: 12, 12>}, {pipeline_mode = #tpu.pipeline_mode<synchronous>, transform_indices = @transform_1, window_bounds = array<i64: 12, 12>}, {pipeline_mode = #tpu.pipeline_mode<synchronous>, transform_indices = @transform_2, window_bounds = array<i64: 12, 12>}, {pipeline_mode = #tpu.pipeline_mode<synchronous>, transform_indices = @transform_3, window_bounds = array<i64: 1, 32>}, {pipeline_mode = #tpu.pipeline_mode<synchronous>, transform_indices = @transform_4, window_bounds = array<i64: 1, 32>}, {pipeline_mode = #tpu.pipeline_mode<synchronous>, transform_indices = @transform_5, window_bounds = array<i64: 32, 32>}, {pipeline_mode = #tpu.pipeline_mode<synchronous>, transform_indices = @transform_6, window_bounds = array<i64: 32, 32>}, {pipeline_mode = #tpu.pipeline_mode<synchronous>, transform_indices = @transform_7, window_bounds = array<i64: 1, 32>}, {pipeline_mode = #tpu.pipeline_mode<synchronous>, transform_indices = @transform_8, window_bounds = array<i64: 1, 32>}, {pipeline_mode = #tpu.pipeline_mode<synchronous>, transform_indices = @transform_9, window_bounds = array<i64: 32, 32>}, {pipeline_mode = #tpu.pipeline_mode<synchronous>, transform_indices = @transform_10, window_bounds = array<i64: 32, 32>}, {pipeline_mode = #tpu.pipeline_mode<synchronous>, transform_indices = @transform_11, window_bounds = array<i64: 1, 32>}, {pipeline_mode = #tpu.pipeline_mode<synchronous>, transform_indices = @transform_12, window_bounds = array<i64: 1, 32>}, {pipeline_mode = #tpu.pipeline_mode<synchronous>, transform_indices = @transform_13, window_bounds = array<i64: 32, 32>}, {pipeline_mode = #tpu.pipeline_mode<synchronous>, transform_indices = @transform_14, window_bounds = array<i64: 32, 32>}, {pipeline_mode = #tpu.pipeline_mode<synchronous>, transform_indices = @transform_15, window_bounds = array<i64: 1, 256>}, {pipeline_mode = #tpu.pipeline_mode<synchronous>, transform_indices = @transform_16, window_bounds = array<i64: 1, 128>}, {pipeline_mode = #tpu.pipeline_mode<synchronous>, transform_indices = @transform_17, window_bounds = array<i64: 1, 64>}, {pipeline_mode = #tpu.pipeline_mode<synchronous>, transform_indices = @transform_18, window_bounds = array<i64: 32, 256>}, {pipeline_mode = #tpu.pipeline_mode<synchronous>, transform_indices = @transform_19, window_bounds = array<i64: 256, 128>}, {pipeline_mode = #tpu.pipeline_mode<synchronous>, transform_indices = @transform_20, window_bounds = array<i64: 128, 64>}, {pipeline_mode = #tpu.pipeline_mode<synchronous>, transform_indices = @transform_21, window_bounds = array<i64: 1, 256>}, {pipeline_mode = #tpu.pipeline_mode<synchronous>, transform_indices = @transform_22, window_bounds = array<i64: 1, 128>}, {pipeline_mode = #tpu.pipeline_mode<synchronous>, transform_indices = @transform_23, window_bounds = array<i64: 1, 64>}, {pipeline_mode = #tpu.pipeline_mode<synchronous>, transform_indices = @transform_24, window_bounds = array<i64: 32, 256>}, {pipeline_mode = #tpu.pipeline_mode<synchronous>, transform_indices = @transform_25, window_bounds = array<i64: 256, 128>}, {pipeline_mode = #tpu.pipeline_mode<synchronous>, transform_indices = @transform_26, window_bounds = array<i64: 128, 64>}, {pipeline_mode = #tpu.pipeline_mode<synchronous>, transform_indices = @transform_27, window_bounds = array<i64: 12, 32>}, {pipeline_mode = #tpu.pipeline_mode<synchronous>, transform_indices = @transform_28, window_bounds = array<i64: 16, 16>}, {pipeline_mode = #tpu.pipeline_mode<synchronous>, transform_indices = @transform_29, window_bounds = array<i64: 16, 16>}, {pipeline_mode = #tpu.pipeline_mode<synchronous>, transform_indices = @transform_30, window_bounds = array<i64: 16, 16>}, {pipeline_mode = #tpu.pipeline_mode<synchronous>, transform_indices = @transform_31, window_bounds = array<i64: 1, 32>}, {pipeline_mode = #tpu.pipeline_mode<synchronous>, transform_indices = @transform_32, window_bounds = array<i64: 1, 32>}, {pipeline_mode = #tpu.pipeline_mode<synchronous>, transform_indices = @transform_33, window_bounds = array<i64: 32, 32>}, {pipeline_mode = #tpu.pipeline_mode<synchronous>, transform_indices = @transform_34, window_bounds = array<i64: 32, 32>}, {pipeline_mode = #tpu.pipeline_mode<synchronous>, transform_indices = @transform_35, window_bounds = array<i64: 1, 32>}, {pipeline_mode = #tpu.pipeline_mode<synchronous>, transform_indices = @transform_36, window_bounds = array<i64: 1, 32>}, {pipeline_mode = #tpu.pipeline_mode<synchronous>, transform_indices = @transform_37, window_bounds = array<i64: 32, 32>}, {pipeline_mode = #tpu.pipeline_mode<synchronous>, transform_indices = @transform_38, window_bounds = array<i64: 32, 32>}, {pipeline_mode = #tpu.pipeline_mode<synchronous>, transform_indices = @transform_39, window_bounds = array<i64: 1, 32>}, {pipeline_mode = #tpu.pipeline_mode<synchronous>, transform_indices = @transform_40, window_bounds = array<i64: 1, 32>}, {pipeline_mode = #tpu.pipeline_mode<synchronous>, transform_indices = @transform_41, window_bounds = array<i64: 32, 32>}, {pipeline_mode = #tpu.pipeline_mode<synchronous>, transform_indices = @transform_42, window_bounds = array<i64: 32, 32>}, {pipeline_mode = #tpu.pipeline_mode<synchronous>, transform_indices = @transform_43, window_bounds = array<i64: 1, 256>}, {pipeline_mode = #tpu.pipeline_mode<synchronous>, transform_indices = @transform_44, window_bounds = array<i64: 1, 128>}, {pipeline_mode = #tpu.pipeline_mode<synchronous>, transform_indices = @transform_45, window_bounds = array<i64: 1, 64>}, {pipeline_mode = #tpu.pipeline_mode<synchronous>, transform_indices = @transform_46, window_bounds = array<i64: 32, 256>}, {pipeline_mode = #tpu.pipeline_mode<synchronous>, transform_indices = @transform_47, window_bounds = array<i64: 256, 128>}, {pipeline_mode = #tpu.pipeline_mode<synchronous>, transform_indices = @transform_48, window_bounds = array<i64: 128, 64>}, {pipeline_mode = #tpu.pipeline_mode<synchronous>, transform_indices = @transform_49, window_bounds = array<i64: 1, 256>}, {pipeline_mode = #tpu.pipeline_mode<synchronous>, transform_indices = @transform_50, window_bounds = array<i64: 1, 128>}, {pipeline_mode = #tpu.pipeline_mode<synchronous>, transform_indices = @transform_51, window_bounds = array<i64: 1, 64>}, {pipeline_mode = #tpu.pipeline_mode<synchronous>, transform_indices = @transform_52, window_bounds = array<i64: 32, 256>}, {pipeline_mode = #tpu.pipeline_mode<synchronous>, transform_indices = @transform_53, window_bounds = array<i64: 256, 128>}, {pipeline_mode = #tpu.pipeline_mode<synchronous>, transform_indices = @transform_54, window_bounds = array<i64: 128, 64>}, {pipeline_mode = #tpu.pipeline_mode<synchronous>, transform_indices = @transform_55, window_bounds = array<i64: 16, 32>}, {pipeline_mode = #tpu.pipeline_mode<synchronous>, transform_indices = @transform_56, window_bounds = array<i64: 16, 256>}, {pipeline_mode = #tpu.pipeline_mode<synchronous>, transform_indices = @transform_57, window_bounds = array<i64: 16, 256>}, {pipeline_mode = #tpu.pipeline_mode<synchronous>, transform_indices = @transform_58, window_bounds = array<i64: 16, 16>}]} {
    %c0 = arith.constant 0 : index
    %c0_0 = arith.constant 0 : index
    %0 = vector.load %arg56[%c0, %c0_0] : memref<16x32xf32, #tpu.memory_space<vmem>>, vector<16x32xf32>
    %c0_1 = arith.constant 0 : index
    %c0_2 = arith.constant 0 : index
    %1 = vector.load %arg29[%c0_1, %c0_2] : memref<16x16xf32, #tpu.memory_space<vmem>>, vector<16x16xf32>
    %2 = tpu.iota {dimensions = array<i32: 0>} : vector<16x16xi32>
    %3 = tpu.iota {dimensions = array<i32: 1>} : vector<16x16xi32>
    %4 = arith.cmpi eq, %2, %3 : vector<16x16xi32>
    %5 = arith.extui %4 : vector<16x16xi1> to vector<16x16xi32>
    %6 = arith.sitofp %5 : vector<16x16xi32> to vector<16x16xf32>
    %7 = arith.addf %1, %6 : vector<16x16xf32>
    %cst = arith.constant dense<0.000000e+00> : vector<16xf32>
    %8 = vector.multi_reduction <add>, %7, %cst [1] : vector<16x16xf32> to vector<16xf32>
    %9 = vector.shape_cast %8 : vector<16xf32> to vector<16x1xf32>
    %cst_3 = arith.constant 9.99999996E-13 : f32
    %10 = vector.broadcast %cst_3 : f32 to vector<16x1xf32>
    %11 = arith.maximumf %9, %10 : vector<16x1xf32>
    %12 = math.rsqrt %11 : vector<16x1xf32>
    %cst_4 = arith.constant dense<0.000000e+00> : vector<16xf32>
    %13 = vector.multi_reduction <add>, %7, %cst_4 [0] : vector<16x16xf32> to vector<16xf32>
    %14 = vector.shape_cast %13 : vector<16xf32> to vector<1x16xf32>
    %cst_5 = arith.constant 9.99999996E-13 : f32
    %15 = vector.broadcast %cst_5 : f32 to vector<1x16xf32>
    %16 = arith.maximumf %14, %15 : vector<1x16xf32>
    %17 = math.rsqrt %16 : vector<1x16xf32>
    %18 = vector.broadcast %12 : vector<16x1xf32> to vector<16x16xf32>
    %19 = arith.mulf %7, %18 : vector<16x16xf32>
    %20 = vector.broadcast %17 : vector<1x16xf32> to vector<16x16xf32>
    %21 = arith.mulf %19, %20 : vector<16x16xf32>
    %c0_6 = arith.constant 0 : index
    %c0_7 = arith.constant 0 : index
    %22 = vector.load %arg30[%c0_6, %c0_7] : memref<16x16xf32, #tpu.memory_space<vmem>>, vector<16x16xf32>
    %23 = tpu.iota {dimensions = array<i32: 0>} : vector<16x16xi32>
    %24 = tpu.iota {dimensions = array<i32: 1>} : vector<16x16xi32>
    %25 = arith.cmpi eq, %23, %24 : vector<16x16xi32>
    %26 = arith.extui %25 : vector<16x16xi1> to vector<16x16xi32>
    %27 = arith.sitofp %26 : vector<16x16xi32> to vector<16x16xf32>
    %28 = arith.addf %22, %27 : vector<16x16xf32>
    %cst_8 = arith.constant dense<0.000000e+00> : vector<16xf32>
    %29 = vector.multi_reduction <add>, %28, %cst_8 [1] : vector<16x16xf32> to vector<16xf32>
    %30 = vector.shape_cast %29 : vector<16xf32> to vector<16x1xf32>
    %cst_9 = arith.constant 9.99999996E-13 : f32
    %31 = vector.broadcast %cst_9 : f32 to vector<16x1xf32>
    %32 = arith.maximumf %30, %31 : vector<16x1xf32>
    %33 = math.rsqrt %32 : vector<16x1xf32>
    %cst_10 = arith.constant dense<0.000000e+00> : vector<16xf32>
    %34 = vector.multi_reduction <add>, %28, %cst_10 [0] : vector<16x16xf32> to vector<16xf32>
    %35 = vector.shape_cast %34 : vector<16xf32> to vector<1x16xf32>
    %cst_11 = arith.constant 9.99999996E-13 : f32
    %36 = vector.broadcast %cst_11 : f32 to vector<1x16xf32>
    %37 = arith.maximumf %35, %36 : vector<1x16xf32>
    %38 = math.rsqrt %37 : vector<1x16xf32>
    %39 = vector.broadcast %33 : vector<16x1xf32> to vector<16x16xf32>
    %40 = arith.mulf %28, %39 : vector<16x16xf32>
    %41 = vector.broadcast %38 : vector<1x16xf32> to vector<16x16xf32>
    %42 = arith.mulf %40, %41 : vector<16x16xf32>
    %c0_12 = arith.constant 0 : index
    %c0_13 = arith.constant 0 : index
    %43 = vector.load %arg31[%c0_12, %c0_13] : memref<16x16xf32, #tpu.memory_space<vmem>>, vector<16x16xf32>
    %44 = tpu.iota {dimensions = array<i32: 0>} : vector<16x16xi32>
    %45 = tpu.iota {dimensions = array<i32: 1>} : vector<16x16xi32>
    %46 = arith.cmpi eq, %44, %45 : vector<16x16xi32>
    %47 = arith.extui %46 : vector<16x16xi1> to vector<16x16xi32>
    %48 = arith.sitofp %47 : vector<16x16xi32> to vector<16x16xf32>
    %49 = arith.addf %43, %48 : vector<16x16xf32>
    %cst_14 = arith.constant dense<0.000000e+00> : vector<16xf32>
    %50 = vector.multi_reduction <add>, %49, %cst_14 [1] : vector<16x16xf32> to vector<16xf32>
    %51 = vector.shape_cast %50 : vector<16xf32> to vector<16x1xf32>
    %cst_15 = arith.constant 9.99999996E-13 : f32
    %52 = vector.broadcast %cst_15 : f32 to vector<16x1xf32>
    %53 = arith.maximumf %51, %52 : vector<16x1xf32>
    %54 = math.rsqrt %53 : vector<16x1xf32>
    %cst_16 = arith.constant dense<0.000000e+00> : vector<16xf32>
    %55 = vector.multi_reduction <add>, %49, %cst_16 [0] : vector<16x16xf32> to vector<16xf32>
    %56 = vector.shape_cast %55 : vector<16xf32> to vector<1x16xf32>
    %cst_17 = arith.constant 9.99999996E-13 : f32
    %57 = vector.broadcast %cst_17 : f32 to vector<1x16xf32>
    %58 = arith.maximumf %56, %57 : vector<1x16xf32>
    %59 = math.rsqrt %58 : vector<1x16xf32>
    %60 = vector.broadcast %54 : vector<16x1xf32> to vector<16x16xf32>
    %61 = arith.mulf %49, %60 : vector<16x16xf32>
    %62 = vector.broadcast %59 : vector<1x16xf32> to vector<16x16xf32>
    %63 = arith.mulf %61, %62 : vector<16x16xf32>
    %c0_18 = arith.constant 0 : index
    %c0_19 = arith.constant 0 : index
    %64 = vector.load %arg34[%c0_18, %c0_19] : memref<32x32xf32, #tpu.memory_space<vmem>>, vector<32x32xf32>
    %c0_20 = arith.constant 0 : index
    %c0_21 = arith.constant 0 : index
    %65 = vector.load %arg38[%c0_20, %c0_21] : memref<32x32xf32, #tpu.memory_space<vmem>>, vector<32x32xf32>
    %c0_22 = arith.constant 0 : index
    %c0_23 = arith.constant 0 : index
    %66 = vector.load %arg42[%c0_22, %c0_23] : memref<32x32xf32, #tpu.memory_space<vmem>>, vector<32x32xf32>
    %67 = tpu.concatenate %64, %65, %66 in 1 : vector<32x32xf32>, vector<32x32xf32>, vector<32x32xf32> -> vector<32x96xf32>
    %cst_24 = arith.constant dense<0.000000e+00> : vector<16x96xf32>
    %68 = tpu.matmul %0, %67, %cst_24 {dimension_numbers = #tpu.dot_dimension_numbers<[1], [0], [0], [1], [0, 0, 1, 1], [], []>} : vector<16x32xf32>, vector<32x96xf32>, vector<16x96xf32> -> vector<16x96xf32>
    %69 = vector.extract_strided_slice %68 {offsets = [0, 0], sizes = [16, 32], strides = [1, 1]} : vector<16x96xf32> to vector<16x32xf32>
    %cst_25 = arith.constant dense<0.000000e+00> : vector<16x32xf32>
    %70 = tpu.matmul %21, %69, %cst_25 {dimension_numbers = #tpu.dot_dimension_numbers<[1], [0], [0], [1], [0, 0, 1, 1], [], []>} : vector<16x16xf32>, vector<16x32xf32>, vector<16x32xf32> -> vector<16x32xf32>
    %c0_26 = arith.constant 0 : index
    %c0_27 = arith.constant 0 : index
    %71 = vector.load %arg32[%c0_26, %c0_27] : memref<1x32xf32, #tpu.memory_space<vmem>>, vector<1x32xf32>
    %72 = vector.broadcast %71 : vector<1x32xf32> to vector<16x32xf32>
    %73 = arith.addf %70, %72 : vector<16x32xf32>
    %cst_28 = arith.constant 0.000000e+00 : f32
    %74 = vector.broadcast %cst_28 : f32 to vector<16x32xf32>
    %75 = arith.maximumf %73, %74 : vector<16x32xf32>
    %c0_29 = arith.constant 0 : index
    %c0_30 = arith.constant 0 : index
    %76 = vector.load %arg35[%c0_29, %c0_30] : memref<32x32xf32, #tpu.memory_space<vmem>>, vector<32x32xf32>
    %cst_31 = arith.constant dense<0.000000e+00> : vector<16x32xf32>
    %77 = tpu.matmul %75, %76, %cst_31 {dimension_numbers = #tpu.dot_dimension_numbers<[1], [0], [0], [1], [0, 0, 1, 1], [], []>} : vector<16x32xf32>, vector<32x32xf32>, vector<16x32xf32> -> vector<16x32xf32>
    %cst_32 = arith.constant dense<0.000000e+00> : vector<16x32xf32>
    %78 = tpu.matmul %21, %77, %cst_32 {dimension_numbers = #tpu.dot_dimension_numbers<[1], [0], [0], [1], [0, 0, 1, 1], [], []>} : vector<16x16xf32>, vector<16x32xf32>, vector<16x32xf32> -> vector<16x32xf32>
    %c0_33 = arith.constant 0 : index
    %c0_34 = arith.constant 0 : index
    %79 = vector.load %arg33[%c0_33, %c0_34] : memref<1x32xf32, #tpu.memory_space<vmem>>, vector<1x32xf32>
    %80 = vector.broadcast %79 : vector<1x32xf32> to vector<16x32xf32>
    %81 = arith.addf %78, %80 : vector<16x32xf32>
    %cst_35 = arith.constant 0.000000e+00 : f32
    %82 = vector.broadcast %cst_35 : f32 to vector<16x32xf32>
    %83 = arith.maximumf %81, %82 : vector<16x32xf32>
    %84 = vector.extract_strided_slice %68 {offsets = [0, 32], sizes = [16, 32], strides = [1, 1]} : vector<16x96xf32> to vector<16x32xf32>
    %cst_36 = arith.constant dense<0.000000e+00> : vector<16x32xf32>
    %85 = tpu.matmul %42, %84, %cst_36 {dimension_numbers = #tpu.dot_dimension_numbers<[1], [0], [0], [1], [0, 0, 1, 1], [], []>} : vector<16x16xf32>, vector<16x32xf32>, vector<16x32xf32> -> vector<16x32xf32>
    %c0_37 = arith.constant 0 : index
    %c0_38 = arith.constant 0 : index
    %86 = vector.load %arg36[%c0_37, %c0_38] : memref<1x32xf32, #tpu.memory_space<vmem>>, vector<1x32xf32>
    %87 = vector.broadcast %86 : vector<1x32xf32> to vector<16x32xf32>
    %88 = arith.addf %85, %87 : vector<16x32xf32>
    %cst_39 = arith.constant 0.000000e+00 : f32
    %89 = vector.broadcast %cst_39 : f32 to vector<16x32xf32>
    %90 = arith.maximumf %88, %89 : vector<16x32xf32>
    %c0_40 = arith.constant 0 : index
    %c0_41 = arith.constant 0 : index
    %91 = vector.load %arg39[%c0_40, %c0_41] : memref<32x32xf32, #tpu.memory_space<vmem>>, vector<32x32xf32>
    %cst_42 = arith.constant dense<0.000000e+00> : vector<16x32xf32>
    %92 = tpu.matmul %90, %91, %cst_42 {dimension_numbers = #tpu.dot_dimension_numbers<[1], [0], [0], [1], [0, 0, 1, 1], [], []>} : vector<16x32xf32>, vector<32x32xf32>, vector<16x32xf32> -> vector<16x32xf32>
    %cst_43 = arith.constant dense<0.000000e+00> : vector<16x32xf32>
    %93 = tpu.matmul %42, %92, %cst_43 {dimension_numbers = #tpu.dot_dimension_numbers<[1], [0], [0], [1], [0, 0, 1, 1], [], []>} : vector<16x16xf32>, vector<16x32xf32>, vector<16x32xf32> -> vector<16x32xf32>
    %c0_44 = arith.constant 0 : index
    %c0_45 = arith.constant 0 : index
    %94 = vector.load %arg37[%c0_44, %c0_45] : memref<1x32xf32, #tpu.memory_space<vmem>>, vector<1x32xf32>
    %95 = vector.broadcast %94 : vector<1x32xf32> to vector<16x32xf32>
    %96 = arith.addf %93, %95 : vector<16x32xf32>
    %cst_46 = arith.constant 0.000000e+00 : f32
    %97 = vector.broadcast %cst_46 : f32 to vector<16x32xf32>
    %98 = arith.maximumf %96, %97 : vector<16x32xf32>
    %99 = vector.extract_strided_slice %68 {offsets = [0, 64], sizes = [16, 32], strides = [1, 1]} : vector<16x96xf32> to vector<16x32xf32>
    %cst_47 = arith.constant dense<0.000000e+00> : vector<16x32xf32>
    %100 = tpu.matmul %63, %99, %cst_47 {dimension_numbers = #tpu.dot_dimension_numbers<[1], [0], [0], [1], [0, 0, 1, 1], [], []>} : vector<16x16xf32>, vector<16x32xf32>, vector<16x32xf32> -> vector<16x32xf32>
    %c0_48 = arith.constant 0 : index
    %c0_49 = arith.constant 0 : index
    %101 = vector.load %arg40[%c0_48, %c0_49] : memref<1x32xf32, #tpu.memory_space<vmem>>, vector<1x32xf32>
    %102 = vector.broadcast %101 : vector<1x32xf32> to vector<16x32xf32>
    %103 = arith.addf %100, %102 : vector<16x32xf32>
    %cst_50 = arith.constant 0.000000e+00 : f32
    %104 = vector.broadcast %cst_50 : f32 to vector<16x32xf32>
    %105 = arith.maximumf %103, %104 : vector<16x32xf32>
    %c0_51 = arith.constant 0 : index
    %c0_52 = arith.constant 0 : index
    %106 = vector.load %arg43[%c0_51, %c0_52] : memref<32x32xf32, #tpu.memory_space<vmem>>, vector<32x32xf32>
    %cst_53 = arith.constant dense<0.000000e+00> : vector<16x32xf32>
    %107 = tpu.matmul %105, %106, %cst_53 {dimension_numbers = #tpu.dot_dimension_numbers<[1], [0], [0], [1], [0, 0, 1, 1], [], []>} : vector<16x32xf32>, vector<32x32xf32>, vector<16x32xf32> -> vector<16x32xf32>
    %cst_54 = arith.constant dense<0.000000e+00> : vector<16x32xf32>
    %108 = tpu.matmul %63, %107, %cst_54 {dimension_numbers = #tpu.dot_dimension_numbers<[1], [0], [0], [1], [0, 0, 1, 1], [], []>} : vector<16x16xf32>, vector<16x32xf32>, vector<16x32xf32> -> vector<16x32xf32>
    %c0_55 = arith.constant 0 : index
    %c0_56 = arith.constant 0 : index
    %109 = vector.load %arg41[%c0_55, %c0_56] : memref<1x32xf32, #tpu.memory_space<vmem>>, vector<1x32xf32>
    %110 = vector.broadcast %109 : vector<1x32xf32> to vector<16x32xf32>
    %111 = arith.addf %108, %110 : vector<16x32xf32>
    %cst_57 = arith.constant 0.000000e+00 : f32
    %112 = vector.broadcast %cst_57 : f32 to vector<16x32xf32>
    %113 = arith.maximumf %111, %112 : vector<16x32xf32>
    %114 = tpu.concatenate %83, %98, %113 in 0 : vector<16x32xf32>, vector<16x32xf32>, vector<16x32xf32> -> vector<48x32xf32>
    %c0_58 = arith.constant 0 : index
    %c0_59 = arith.constant 0 : index
    %115 = vector.load %arg53[%c0_58, %c0_59] : memref<32x256xf32, #tpu.memory_space<vmem>>, vector<32x256xf32>
    %cst_60 = arith.constant dense<0.000000e+00> : vector<48x256xf32>
    %116 = tpu.matmul %114, %115, %cst_60 {dimension_numbers = #tpu.dot_dimension_numbers<[1], [0], [0], [1], [0, 0, 1, 1], [], []>} : vector<48x32xf32>, vector<32x256xf32>, vector<48x256xf32> -> vector<48x256xf32>
    %c0_61 = arith.constant 0 : index
    %c0_62 = arith.constant 0 : index
    %117 = vector.load %arg50[%c0_61, %c0_62] : memref<1x256xf32, #tpu.memory_space<vmem>>, vector<1x256xf32>
    %118 = vector.broadcast %117 : vector<1x256xf32> to vector<48x256xf32>
    %119 = arith.addf %116, %118 : vector<48x256xf32>
    %cst_63 = arith.constant 0.000000e+00 : f32
    %120 = vector.broadcast %cst_63 : f32 to vector<48x256xf32>
    %121 = arith.maximumf %119, %120 : vector<48x256xf32>
    %c0_64 = arith.constant 0 : index
    %c0_65 = arith.constant 0 : index
    %122 = vector.load %arg54[%c0_64, %c0_65] : memref<256x128xf32, #tpu.memory_space<vmem>>, vector<256x128xf32>
    %cst_66 = arith.constant dense<0.000000e+00> : vector<48x128xf32>
    %123 = tpu.matmul %121, %122, %cst_66 {dimension_numbers = #tpu.dot_dimension_numbers<[1], [0], [0], [1], [0, 0, 1, 1], [], []>} : vector<48x256xf32>, vector<256x128xf32>, vector<48x128xf32> -> vector<48x128xf32>
    %c0_67 = arith.constant 0 : index
    %c0_68 = arith.constant 0 : index
    %124 = vector.load %arg51[%c0_67, %c0_68] : memref<1x128xf32, #tpu.memory_space<vmem>>, vector<1x128xf32>
    %125 = vector.broadcast %124 : vector<1x128xf32> to vector<48x128xf32>
    %126 = arith.addf %123, %125 : vector<48x128xf32>
    %cst_69 = arith.constant 0.000000e+00 : f32
    %127 = vector.broadcast %cst_69 : f32 to vector<48x128xf32>
    %128 = arith.maximumf %126, %127 : vector<48x128xf32>
    %c0_70 = arith.constant 0 : index
    %c0_71 = arith.constant 0 : index
    %129 = vector.load %arg55[%c0_70, %c0_71] : memref<128x64xf32, #tpu.memory_space<vmem>>, vector<128x64xf32>
    %cst_72 = arith.constant dense<0.000000e+00> : vector<48x64xf32>
    %130 = tpu.matmul %128, %129, %cst_72 {dimension_numbers = #tpu.dot_dimension_numbers<[1], [0], [0], [1], [0, 0, 1, 1], [], []>} : vector<48x128xf32>, vector<128x64xf32>, vector<48x64xf32> -> vector<48x64xf32>
    %c0_73 = arith.constant 0 : index
    %c0_74 = arith.constant 0 : index
    %131 = vector.load %arg52[%c0_73, %c0_74] : memref<1x64xf32, #tpu.memory_space<vmem>>, vector<1x64xf32>
    %132 = vector.broadcast %131 : vector<1x64xf32> to vector<48x64xf32>
    %133 = arith.addf %130, %132 : vector<48x64xf32>
    %cst_75 = arith.constant 0.000000e+00 : f32
    %134 = vector.broadcast %cst_75 : f32 to vector<48x64xf32>
    %135 = arith.maximumf %133, %134 : vector<48x64xf32>
    %136 = vector.extract_strided_slice %135 {offsets = [0, 0], sizes = [16, 64], strides = [1, 1]} : vector<48x64xf32> to vector<16x64xf32>
    %137 = vector.extract_strided_slice %135 {offsets = [16, 0], sizes = [16, 64], strides = [1, 1]} : vector<48x64xf32> to vector<16x64xf32>
    %138 = vector.extract_strided_slice %135 {offsets = [32, 0], sizes = [16, 64], strides = [1, 1]} : vector<48x64xf32> to vector<16x64xf32>
    %c0_76 = arith.constant 0 : index
    %c0_77 = arith.constant 0 : index
    %139 = vector.load %arg47[%c0_76, %c0_77] : memref<32x256xf32, #tpu.memory_space<vmem>>, vector<32x256xf32>
    %cst_78 = arith.constant dense<0.000000e+00> : vector<16x256xf32>
    %140 = tpu.matmul %0, %139, %cst_78 {dimension_numbers = #tpu.dot_dimension_numbers<[1], [0], [0], [1], [0, 0, 1, 1], [], []>} : vector<16x32xf32>, vector<32x256xf32>, vector<16x256xf32> -> vector<16x256xf32>
    %c0_79 = arith.constant 0 : index
    %c0_80 = arith.constant 0 : index
    %141 = vector.load %arg44[%c0_79, %c0_80] : memref<1x256xf32, #tpu.memory_space<vmem>>, vector<1x256xf32>
    %142 = vector.broadcast %141 : vector<1x256xf32> to vector<16x256xf32>
    %143 = arith.addf %140, %142 : vector<16x256xf32>
    %cst_81 = arith.constant 0.000000e+00 : f32
    %144 = vector.broadcast %cst_81 : f32 to vector<16x256xf32>
    %145 = arith.maximumf %143, %144 : vector<16x256xf32>
    %c0_82 = arith.constant 0 : index
    %c0_83 = arith.constant 0 : index
    %146 = vector.load %arg48[%c0_82, %c0_83] : memref<256x128xf32, #tpu.memory_space<vmem>>, vector<256x128xf32>
    %cst_84 = arith.constant dense<0.000000e+00> : vector<16x128xf32>
    %147 = tpu.matmul %145, %146, %cst_84 {dimension_numbers = #tpu.dot_dimension_numbers<[1], [0], [0], [1], [0, 0, 1, 1], [], []>} : vector<16x256xf32>, vector<256x128xf32>, vector<16x128xf32> -> vector<16x128xf32>
    %c0_85 = arith.constant 0 : index
    %c0_86 = arith.constant 0 : index
    %148 = vector.load %arg45[%c0_85, %c0_86] : memref<1x128xf32, #tpu.memory_space<vmem>>, vector<1x128xf32>
    %149 = vector.broadcast %148 : vector<1x128xf32> to vector<16x128xf32>
    %150 = arith.addf %147, %149 : vector<16x128xf32>
    %cst_87 = arith.constant 0.000000e+00 : f32
    %151 = vector.broadcast %cst_87 : f32 to vector<16x128xf32>
    %152 = arith.maximumf %150, %151 : vector<16x128xf32>
    %c0_88 = arith.constant 0 : index
    %c0_89 = arith.constant 0 : index
    %153 = vector.load %arg49[%c0_88, %c0_89] : memref<128x64xf32, #tpu.memory_space<vmem>>, vector<128x64xf32>
    %cst_90 = arith.constant dense<0.000000e+00> : vector<16x64xf32>
    %154 = tpu.matmul %152, %153, %cst_90 {dimension_numbers = #tpu.dot_dimension_numbers<[1], [0], [0], [1], [0, 0, 1, 1], [], []>} : vector<16x128xf32>, vector<128x64xf32>, vector<16x64xf32> -> vector<16x64xf32>
    %c0_91 = arith.constant 0 : index
    %c0_92 = arith.constant 0 : index
    %155 = vector.load %arg46[%c0_91, %c0_92] : memref<1x64xf32, #tpu.memory_space<vmem>>, vector<1x64xf32>
    %156 = vector.broadcast %155 : vector<1x64xf32> to vector<16x64xf32>
    %157 = arith.addf %154, %156 : vector<16x64xf32>
    %cst_93 = arith.constant 0.000000e+00 : f32
    %158 = vector.broadcast %cst_93 : f32 to vector<16x64xf32>
    %159 = arith.maximumf %157, %158 : vector<16x64xf32>
    %160 = arith.addf %159, %136 : vector<16x64xf32>
    %161 = arith.addf %160, %137 : vector<16x64xf32>
    %162 = arith.addf %161, %138 : vector<16x64xf32>
    %c0_94 = arith.constant 0 : index
    %c0_95 = arith.constant 0 : index
    %163 = vector.load %arg28[%c0_94, %c0_95] : memref<12x32xf32, #tpu.memory_space<vmem>>, vector<12x32xf32>
    %c0_96 = arith.constant 0 : index
    %c0_97 = arith.constant 0 : index
    %164 = vector.load %arg1[%c0_96, %c0_97] : memref<12x12xf32, #tpu.memory_space<vmem>>, vector<12x12xf32>
    %165 = tpu.iota {dimensions = array<i32: 0>} : vector<12x12xi32>
    %166 = tpu.iota {dimensions = array<i32: 1>} : vector<12x12xi32>
    %167 = arith.cmpi eq, %165, %166 : vector<12x12xi32>
    %168 = arith.extui %167 : vector<12x12xi1> to vector<12x12xi32>
    %169 = arith.sitofp %168 : vector<12x12xi32> to vector<12x12xf32>
    %170 = arith.addf %164, %169 : vector<12x12xf32>
    %cst_98 = arith.constant dense<0.000000e+00> : vector<12xf32>
    %171 = vector.multi_reduction <add>, %170, %cst_98 [1] : vector<12x12xf32> to vector<12xf32>
    %172 = vector.shape_cast %171 : vector<12xf32> to vector<12x1xf32>
    %cst_99 = arith.constant 9.99999996E-13 : f32
    %173 = vector.broadcast %cst_99 : f32 to vector<12x1xf32>
    %174 = arith.maximumf %172, %173 : vector<12x1xf32>
    %175 = math.rsqrt %174 : vector<12x1xf32>
    %cst_100 = arith.constant dense<0.000000e+00> : vector<12xf32>
    %176 = vector.multi_reduction <add>, %170, %cst_100 [0] : vector<12x12xf32> to vector<12xf32>
    %177 = vector.shape_cast %176 : vector<12xf32> to vector<1x12xf32>
    %cst_101 = arith.constant 9.99999996E-13 : f32
    %178 = vector.broadcast %cst_101 : f32 to vector<1x12xf32>
    %179 = arith.maximumf %177, %178 : vector<1x12xf32>
    %180 = math.rsqrt %179 : vector<1x12xf32>
    %181 = vector.broadcast %175 : vector<12x1xf32> to vector<12x12xf32>
    %182 = arith.mulf %170, %181 : vector<12x12xf32>
    %183 = vector.broadcast %180 : vector<1x12xf32> to vector<12x12xf32>
    %184 = arith.mulf %182, %183 : vector<12x12xf32>
    %c0_102 = arith.constant 0 : index
    %c0_103 = arith.constant 0 : index
    %185 = vector.load %arg2[%c0_102, %c0_103] : memref<12x12xf32, #tpu.memory_space<vmem>>, vector<12x12xf32>
    %186 = tpu.iota {dimensions = array<i32: 0>} : vector<12x12xi32>
    %187 = tpu.iota {dimensions = array<i32: 1>} : vector<12x12xi32>
    %188 = arith.cmpi eq, %186, %187 : vector<12x12xi32>
    %189 = arith.extui %188 : vector<12x12xi1> to vector<12x12xi32>
    %190 = arith.sitofp %189 : vector<12x12xi32> to vector<12x12xf32>
    %191 = arith.addf %185, %190 : vector<12x12xf32>
    %cst_104 = arith.constant dense<0.000000e+00> : vector<12xf32>
    %192 = vector.multi_reduction <add>, %191, %cst_104 [1] : vector<12x12xf32> to vector<12xf32>
    %193 = vector.shape_cast %192 : vector<12xf32> to vector<12x1xf32>
    %cst_105 = arith.constant 9.99999996E-13 : f32
    %194 = vector.broadcast %cst_105 : f32 to vector<12x1xf32>
    %195 = arith.maximumf %193, %194 : vector<12x1xf32>
    %196 = math.rsqrt %195 : vector<12x1xf32>
    %cst_106 = arith.constant dense<0.000000e+00> : vector<12xf32>
    %197 = vector.multi_reduction <add>, %191, %cst_106 [0] : vector<12x12xf32> to vector<12xf32>
    %198 = vector.shape_cast %197 : vector<12xf32> to vector<1x12xf32>
    %cst_107 = arith.constant 9.99999996E-13 : f32
    %199 = vector.broadcast %cst_107 : f32 to vector<1x12xf32>
    %200 = arith.maximumf %198, %199 : vector<1x12xf32>
    %201 = math.rsqrt %200 : vector<1x12xf32>
    %202 = vector.broadcast %196 : vector<12x1xf32> to vector<12x12xf32>
    %203 = arith.mulf %191, %202 : vector<12x12xf32>
    %204 = vector.broadcast %201 : vector<1x12xf32> to vector<12x12xf32>
    %205 = arith.mulf %203, %204 : vector<12x12xf32>
    %c0_108 = arith.constant 0 : index
    %c0_109 = arith.constant 0 : index
    %206 = vector.load %arg3[%c0_108, %c0_109] : memref<12x12xf32, #tpu.memory_space<vmem>>, vector<12x12xf32>
    %207 = tpu.iota {dimensions = array<i32: 0>} : vector<12x12xi32>
    %208 = tpu.iota {dimensions = array<i32: 1>} : vector<12x12xi32>
    %209 = arith.cmpi eq, %207, %208 : vector<12x12xi32>
    %210 = arith.extui %209 : vector<12x12xi1> to vector<12x12xi32>
    %211 = arith.sitofp %210 : vector<12x12xi32> to vector<12x12xf32>
    %212 = arith.addf %206, %211 : vector<12x12xf32>
    %cst_110 = arith.constant dense<0.000000e+00> : vector<12xf32>
    %213 = vector.multi_reduction <add>, %212, %cst_110 [1] : vector<12x12xf32> to vector<12xf32>
    %214 = vector.shape_cast %213 : vector<12xf32> to vector<12x1xf32>
    %cst_111 = arith.constant 9.99999996E-13 : f32
    %215 = vector.broadcast %cst_111 : f32 to vector<12x1xf32>
    %216 = arith.maximumf %214, %215 : vector<12x1xf32>
    %217 = math.rsqrt %216 : vector<12x1xf32>
    %cst_112 = arith.constant dense<0.000000e+00> : vector<12xf32>
    %218 = vector.multi_reduction <add>, %212, %cst_112 [0] : vector<12x12xf32> to vector<12xf32>
    %219 = vector.shape_cast %218 : vector<12xf32> to vector<1x12xf32>
    %cst_113 = arith.constant 9.99999996E-13 : f32
    %220 = vector.broadcast %cst_113 : f32 to vector<1x12xf32>
    %221 = arith.maximumf %219, %220 : vector<1x12xf32>
    %222 = math.rsqrt %221 : vector<1x12xf32>
    %223 = vector.broadcast %217 : vector<12x1xf32> to vector<12x12xf32>
    %224 = arith.mulf %212, %223 : vector<12x12xf32>
    %225 = vector.broadcast %222 : vector<1x12xf32> to vector<12x12xf32>
    %226 = arith.mulf %224, %225 : vector<12x12xf32>
    %c0_114 = arith.constant 0 : index
    %c0_115 = arith.constant 0 : index
    %227 = vector.load %arg6[%c0_114, %c0_115] : memref<32x32xf32, #tpu.memory_space<vmem>>, vector<32x32xf32>
    %c0_116 = arith.constant 0 : index
    %c0_117 = arith.constant 0 : index
    %228 = vector.load %arg10[%c0_116, %c0_117] : memref<32x32xf32, #tpu.memory_space<vmem>>, vector<32x32xf32>
    %c0_118 = arith.constant 0 : index
    %c0_119 = arith.constant 0 : index
    %229 = vector.load %arg14[%c0_118, %c0_119] : memref<32x32xf32, #tpu.memory_space<vmem>>, vector<32x32xf32>
    %230 = tpu.concatenate %227, %228, %229 in 1 : vector<32x32xf32>, vector<32x32xf32>, vector<32x32xf32> -> vector<32x96xf32>
    %cst_120 = arith.constant dense<0.000000e+00> : vector<12x96xf32>
    %231 = tpu.matmul %163, %230, %cst_120 {dimension_numbers = #tpu.dot_dimension_numbers<[1], [0], [0], [1], [0, 0, 1, 1], [], []>} : vector<12x32xf32>, vector<32x96xf32>, vector<12x96xf32> -> vector<12x96xf32>
    %232 = vector.extract_strided_slice %231 {offsets = [0, 0], sizes = [12, 32], strides = [1, 1]} : vector<12x96xf32> to vector<12x32xf32>
    %cst_121 = arith.constant dense<0.000000e+00> : vector<12x32xf32>
    %233 = tpu.matmul %184, %232, %cst_121 {dimension_numbers = #tpu.dot_dimension_numbers<[1], [0], [0], [1], [0, 0, 1, 1], [], []>} : vector<12x12xf32>, vector<12x32xf32>, vector<12x32xf32> -> vector<12x32xf32>
    %c0_122 = arith.constant 0 : index
    %c0_123 = arith.constant 0 : index
    %234 = vector.load %arg4[%c0_122, %c0_123] : memref<1x32xf32, #tpu.memory_space<vmem>>, vector<1x32xf32>
    %235 = vector.broadcast %234 : vector<1x32xf32> to vector<12x32xf32>
    %236 = arith.addf %233, %235 : vector<12x32xf32>
    %cst_124 = arith.constant 0.000000e+00 : f32
    %237 = vector.broadcast %cst_124 : f32 to vector<12x32xf32>
    %238 = arith.maximumf %236, %237 : vector<12x32xf32>
    %c0_125 = arith.constant 0 : index
    %c0_126 = arith.constant 0 : index
    %239 = vector.load %arg7[%c0_125, %c0_126] : memref<32x32xf32, #tpu.memory_space<vmem>>, vector<32x32xf32>
    %cst_127 = arith.constant dense<0.000000e+00> : vector<12x32xf32>
    %240 = tpu.matmul %238, %239, %cst_127 {dimension_numbers = #tpu.dot_dimension_numbers<[1], [0], [0], [1], [0, 0, 1, 1], [], []>} : vector<12x32xf32>, vector<32x32xf32>, vector<12x32xf32> -> vector<12x32xf32>
    %cst_128 = arith.constant dense<0.000000e+00> : vector<12x32xf32>
    %241 = tpu.matmul %184, %240, %cst_128 {dimension_numbers = #tpu.dot_dimension_numbers<[1], [0], [0], [1], [0, 0, 1, 1], [], []>} : vector<12x12xf32>, vector<12x32xf32>, vector<12x32xf32> -> vector<12x32xf32>
    %c0_129 = arith.constant 0 : index
    %c0_130 = arith.constant 0 : index
    %242 = vector.load %arg5[%c0_129, %c0_130] : memref<1x32xf32, #tpu.memory_space<vmem>>, vector<1x32xf32>
    %243 = vector.broadcast %242 : vector<1x32xf32> to vector<12x32xf32>
    %244 = arith.addf %241, %243 : vector<12x32xf32>
    %cst_131 = arith.constant 0.000000e+00 : f32
    %245 = vector.broadcast %cst_131 : f32 to vector<12x32xf32>
    %246 = arith.maximumf %244, %245 : vector<12x32xf32>
    %247 = vector.extract_strided_slice %231 {offsets = [0, 32], sizes = [12, 32], strides = [1, 1]} : vector<12x96xf32> to vector<12x32xf32>
    %cst_132 = arith.constant dense<0.000000e+00> : vector<12x32xf32>
    %248 = tpu.matmul %205, %247, %cst_132 {dimension_numbers = #tpu.dot_dimension_numbers<[1], [0], [0], [1], [0, 0, 1, 1], [], []>} : vector<12x12xf32>, vector<12x32xf32>, vector<12x32xf32> -> vector<12x32xf32>
    %c0_133 = arith.constant 0 : index
    %c0_134 = arith.constant 0 : index
    %249 = vector.load %arg8[%c0_133, %c0_134] : memref<1x32xf32, #tpu.memory_space<vmem>>, vector<1x32xf32>
    %250 = vector.broadcast %249 : vector<1x32xf32> to vector<12x32xf32>
    %251 = arith.addf %248, %250 : vector<12x32xf32>
    %cst_135 = arith.constant 0.000000e+00 : f32
    %252 = vector.broadcast %cst_135 : f32 to vector<12x32xf32>
    %253 = arith.maximumf %251, %252 : vector<12x32xf32>
    %c0_136 = arith.constant 0 : index
    %c0_137 = arith.constant 0 : index
    %254 = vector.load %arg11[%c0_136, %c0_137] : memref<32x32xf32, #tpu.memory_space<vmem>>, vector<32x32xf32>
    %cst_138 = arith.constant dense<0.000000e+00> : vector<12x32xf32>
    %255 = tpu.matmul %253, %254, %cst_138 {dimension_numbers = #tpu.dot_dimension_numbers<[1], [0], [0], [1], [0, 0, 1, 1], [], []>} : vector<12x32xf32>, vector<32x32xf32>, vector<12x32xf32> -> vector<12x32xf32>
    %cst_139 = arith.constant dense<0.000000e+00> : vector<12x32xf32>
    %256 = tpu.matmul %205, %255, %cst_139 {dimension_numbers = #tpu.dot_dimension_numbers<[1], [0], [0], [1], [0, 0, 1, 1], [], []>} : vector<12x12xf32>, vector<12x32xf32>, vector<12x32xf32> -> vector<12x32xf32>
    %c0_140 = arith.constant 0 : index
    %c0_141 = arith.constant 0 : index
    %257 = vector.load %arg9[%c0_140, %c0_141] : memref<1x32xf32, #tpu.memory_space<vmem>>, vector<1x32xf32>
    %258 = vector.broadcast %257 : vector<1x32xf32> to vector<12x32xf32>
    %259 = arith.addf %256, %258 : vector<12x32xf32>
    %cst_142 = arith.constant 0.000000e+00 : f32
    %260 = vector.broadcast %cst_142 : f32 to vector<12x32xf32>
    %261 = arith.maximumf %259, %260 : vector<12x32xf32>
    %262 = vector.extract_strided_slice %231 {offsets = [0, 64], sizes = [12, 32], strides = [1, 1]} : vector<12x96xf32> to vector<12x32xf32>
    %cst_143 = arith.constant dense<0.000000e+00> : vector<12x32xf32>
    %263 = tpu.matmul %226, %262, %cst_143 {dimension_numbers = #tpu.dot_dimension_numbers<[1], [0], [0], [1], [0, 0, 1, 1], [], []>} : vector<12x12xf32>, vector<12x32xf32>, vector<12x32xf32> -> vector<12x32xf32>
    %c0_144 = arith.constant 0 : index
    %c0_145 = arith.constant 0 : index
    %264 = vector.load %arg12[%c0_144, %c0_145] : memref<1x32xf32, #tpu.memory_space<vmem>>, vector<1x32xf32>
    %265 = vector.broadcast %264 : vector<1x32xf32> to vector<12x32xf32>
    %266 = arith.addf %263, %265 : vector<12x32xf32>
    %cst_146 = arith.constant 0.000000e+00 : f32
    %267 = vector.broadcast %cst_146 : f32 to vector<12x32xf32>
    %268 = arith.maximumf %266, %267 : vector<12x32xf32>
    %c0_147 = arith.constant 0 : index
    %c0_148 = arith.constant 0 : index
    %269 = vector.load %arg15[%c0_147, %c0_148] : memref<32x32xf32, #tpu.memory_space<vmem>>, vector<32x32xf32>
    %cst_149 = arith.constant dense<0.000000e+00> : vector<12x32xf32>
    %270 = tpu.matmul %268, %269, %cst_149 {dimension_numbers = #tpu.dot_dimension_numbers<[1], [0], [0], [1], [0, 0, 1, 1], [], []>} : vector<12x32xf32>, vector<32x32xf32>, vector<12x32xf32> -> vector<12x32xf32>
    %cst_150 = arith.constant dense<0.000000e+00> : vector<12x32xf32>
    %271 = tpu.matmul %226, %270, %cst_150 {dimension_numbers = #tpu.dot_dimension_numbers<[1], [0], [0], [1], [0, 0, 1, 1], [], []>} : vector<12x12xf32>, vector<12x32xf32>, vector<12x32xf32> -> vector<12x32xf32>
    %c0_151 = arith.constant 0 : index
    %c0_152 = arith.constant 0 : index
    %272 = vector.load %arg13[%c0_151, %c0_152] : memref<1x32xf32, #tpu.memory_space<vmem>>, vector<1x32xf32>
    %273 = vector.broadcast %272 : vector<1x32xf32> to vector<12x32xf32>
    %274 = arith.addf %271, %273 : vector<12x32xf32>
    %cst_153 = arith.constant 0.000000e+00 : f32
    %275 = vector.broadcast %cst_153 : f32 to vector<12x32xf32>
    %276 = arith.maximumf %274, %275 : vector<12x32xf32>
    %277 = tpu.concatenate %246, %261, %276 in 0 : vector<12x32xf32>, vector<12x32xf32>, vector<12x32xf32> -> vector<36x32xf32>
    %c0_154 = arith.constant 0 : index
    %c0_155 = arith.constant 0 : index
    %278 = vector.load %arg25[%c0_154, %c0_155] : memref<32x256xf32, #tpu.memory_space<vmem>>, vector<32x256xf32>
    %cst_156 = arith.constant dense<0.000000e+00> : vector<36x256xf32>
    %279 = tpu.matmul %277, %278, %cst_156 {dimension_numbers = #tpu.dot_dimension_numbers<[1], [0], [0], [1], [0, 0, 1, 1], [], []>} : vector<36x32xf32>, vector<32x256xf32>, vector<36x256xf32> -> vector<36x256xf32>
    %c0_157 = arith.constant 0 : index
    %c0_158 = arith.constant 0 : index
    %280 = vector.load %arg22[%c0_157, %c0_158] : memref<1x256xf32, #tpu.memory_space<vmem>>, vector<1x256xf32>
    %281 = vector.broadcast %280 : vector<1x256xf32> to vector<36x256xf32>
    %282 = arith.addf %279, %281 : vector<36x256xf32>
    %cst_159 = arith.constant 0.000000e+00 : f32
    %283 = vector.broadcast %cst_159 : f32 to vector<36x256xf32>
    %284 = arith.maximumf %282, %283 : vector<36x256xf32>
    %c0_160 = arith.constant 0 : index
    %c0_161 = arith.constant 0 : index
    %285 = vector.load %arg26[%c0_160, %c0_161] : memref<256x128xf32, #tpu.memory_space<vmem>>, vector<256x128xf32>
    %cst_162 = arith.constant dense<0.000000e+00> : vector<36x128xf32>
    %286 = tpu.matmul %284, %285, %cst_162 {dimension_numbers = #tpu.dot_dimension_numbers<[1], [0], [0], [1], [0, 0, 1, 1], [], []>} : vector<36x256xf32>, vector<256x128xf32>, vector<36x128xf32> -> vector<36x128xf32>
    %c0_163 = arith.constant 0 : index
    %c0_164 = arith.constant 0 : index
    %287 = vector.load %arg23[%c0_163, %c0_164] : memref<1x128xf32, #tpu.memory_space<vmem>>, vector<1x128xf32>
    %288 = vector.broadcast %287 : vector<1x128xf32> to vector<36x128xf32>
    %289 = arith.addf %286, %288 : vector<36x128xf32>
    %cst_165 = arith.constant 0.000000e+00 : f32
    %290 = vector.broadcast %cst_165 : f32 to vector<36x128xf32>
    %291 = arith.maximumf %289, %290 : vector<36x128xf32>
    %c0_166 = arith.constant 0 : index
    %c0_167 = arith.constant 0 : index
    %292 = vector.load %arg27[%c0_166, %c0_167] : memref<128x64xf32, #tpu.memory_space<vmem>>, vector<128x64xf32>
    %cst_168 = arith.constant dense<0.000000e+00> : vector<36x64xf32>
    %293 = tpu.matmul %291, %292, %cst_168 {dimension_numbers = #tpu.dot_dimension_numbers<[1], [0], [0], [1], [0, 0, 1, 1], [], []>} : vector<36x128xf32>, vector<128x64xf32>, vector<36x64xf32> -> vector<36x64xf32>
    %c0_169 = arith.constant 0 : index
    %c0_170 = arith.constant 0 : index
    %294 = vector.load %arg24[%c0_169, %c0_170] : memref<1x64xf32, #tpu.memory_space<vmem>>, vector<1x64xf32>
    %295 = vector.broadcast %294 : vector<1x64xf32> to vector<36x64xf32>
    %296 = arith.addf %293, %295 : vector<36x64xf32>
    %cst_171 = arith.constant 0.000000e+00 : f32
    %297 = vector.broadcast %cst_171 : f32 to vector<36x64xf32>
    %298 = arith.maximumf %296, %297 : vector<36x64xf32>
    %299 = vector.extract_strided_slice %298 {offsets = [0, 0], sizes = [12, 64], strides = [1, 1]} : vector<36x64xf32> to vector<12x64xf32>
    %300 = vector.extract_strided_slice %298 {offsets = [12, 0], sizes = [12, 64], strides = [1, 1]} : vector<36x64xf32> to vector<12x64xf32>
    %301 = vector.extract_strided_slice %298 {offsets = [24, 0], sizes = [12, 64], strides = [1, 1]} : vector<36x64xf32> to vector<12x64xf32>
    %c0_172 = arith.constant 0 : index
    %c0_173 = arith.constant 0 : index
    %302 = vector.load %arg19[%c0_172, %c0_173] : memref<32x256xf32, #tpu.memory_space<vmem>>, vector<32x256xf32>
    %cst_174 = arith.constant dense<0.000000e+00> : vector<12x256xf32>
    %303 = tpu.matmul %163, %302, %cst_174 {dimension_numbers = #tpu.dot_dimension_numbers<[1], [0], [0], [1], [0, 0, 1, 1], [], []>} : vector<12x32xf32>, vector<32x256xf32>, vector<12x256xf32> -> vector<12x256xf32>
    %c0_175 = arith.constant 0 : index
    %c0_176 = arith.constant 0 : index
    %304 = vector.load %arg16[%c0_175, %c0_176] : memref<1x256xf32, #tpu.memory_space<vmem>>, vector<1x256xf32>
    %305 = vector.broadcast %304 : vector<1x256xf32> to vector<12x256xf32>
    %306 = arith.addf %303, %305 : vector<12x256xf32>
    %cst_177 = arith.constant 0.000000e+00 : f32
    %307 = vector.broadcast %cst_177 : f32 to vector<12x256xf32>
    %308 = arith.maximumf %306, %307 : vector<12x256xf32>
    %c0_178 = arith.constant 0 : index
    %c0_179 = arith.constant 0 : index
    %309 = vector.load %arg20[%c0_178, %c0_179] : memref<256x128xf32, #tpu.memory_space<vmem>>, vector<256x128xf32>
    %cst_180 = arith.constant dense<0.000000e+00> : vector<12x128xf32>
    %310 = tpu.matmul %308, %309, %cst_180 {dimension_numbers = #tpu.dot_dimension_numbers<[1], [0], [0], [1], [0, 0, 1, 1], [], []>} : vector<12x256xf32>, vector<256x128xf32>, vector<12x128xf32> -> vector<12x128xf32>
    %c0_181 = arith.constant 0 : index
    %c0_182 = arith.constant 0 : index
    %311 = vector.load %arg17[%c0_181, %c0_182] : memref<1x128xf32, #tpu.memory_space<vmem>>, vector<1x128xf32>
    %312 = vector.broadcast %311 : vector<1x128xf32> to vector<12x128xf32>
    %313 = arith.addf %310, %312 : vector<12x128xf32>
    %cst_183 = arith.constant 0.000000e+00 : f32
    %314 = vector.broadcast %cst_183 : f32 to vector<12x128xf32>
    %315 = arith.maximumf %313, %314 : vector<12x128xf32>
    %c0_184 = arith.constant 0 : index
    %c0_185 = arith.constant 0 : index
    %316 = vector.load %arg21[%c0_184, %c0_185] : memref<128x64xf32, #tpu.memory_space<vmem>>, vector<128x64xf32>
    %cst_186 = arith.constant dense<0.000000e+00> : vector<12x64xf32>
    %317 = tpu.matmul %315, %316, %cst_186 {dimension_numbers = #tpu.dot_dimension_numbers<[1], [0], [0], [1], [0, 0, 1, 1], [], []>} : vector<12x128xf32>, vector<128x64xf32>, vector<12x64xf32> -> vector<12x64xf32>
    %c0_187 = arith.constant 0 : index
    %c0_188 = arith.constant 0 : index
    %318 = vector.load %arg18[%c0_187, %c0_188] : memref<1x64xf32, #tpu.memory_space<vmem>>, vector<1x64xf32>
    %319 = vector.broadcast %318 : vector<1x64xf32> to vector<12x64xf32>
    %320 = arith.addf %317, %319 : vector<12x64xf32>
    %cst_189 = arith.constant 0.000000e+00 : f32
    %321 = vector.broadcast %cst_189 : f32 to vector<12x64xf32>
    %322 = arith.maximumf %320, %321 : vector<12x64xf32>
    %323 = arith.addf %322, %299 : vector<12x64xf32>
    %324 = arith.addf %323, %300 : vector<12x64xf32>
    %325 = arith.addf %324, %301 : vector<12x64xf32>
    %326 = tpu.concatenate %162, %136, %137, %138 in 1 : vector<16x64xf32>, vector<16x64xf32>, vector<16x64xf32>, vector<16x64xf32> -> vector<16x256xf32>
    %c0_190 = arith.constant 0 : index
    %c0_191 = arith.constant 0 : index
    %327 = vector.load %arg57[%c0_190, %c0_191] : memref<16x256xf32, #tpu.memory_space<vmem>>, vector<16x256xf32>
    tpu.vector_store %arg57[%c0_190, %c0_191], %326 {strides = array<i32>} : memref<16x256xf32, #tpu.memory_space<vmem>>, vector<16x256xf32>,
    %328 = tpu.concatenate %325, %299, %300, %301 in 1 : vector<12x64xf32>, vector<12x64xf32>, vector<12x64xf32>, vector<12x64xf32> -> vector<12x256xf32>
    %cst_192 = arith.constant 0.000000e+00 : f32
    %329 = vector.broadcast %cst_192 : f32 to vector<4x256xf32>
    %330 = tpu.concatenate %328, %329 in 0 : vector<12x256xf32>, vector<4x256xf32> -> vector<16x256xf32>
    %c0_193 = arith.constant 0 : index
    %c0_194 = arith.constant 0 : index
    %331 = vector.load %arg58[%c0_193, %c0_194] : memref<16x256xf32, #tpu.memory_space<vmem>>, vector<16x256xf32>
    tpu.vector_store %arg58[%c0_193, %c0_194], %330 {strides = array<i32>} : memref<16x256xf32, #tpu.memory_space<vmem>>, vector<16x256xf32>,
    %cst_195 = arith.constant 0.000000e+00 : f32
    %332 = vector.broadcast %cst_195 : f32 to vector<4x64xf32>
    %333 = tpu.concatenate %325, %332 in 0 : vector<12x64xf32>, vector<4x64xf32> -> vector<16x64xf32>
    %cst_196 = arith.constant dense<0.000000e+00> : vector<16x16xf32>
    %334 = tpu.matmul %162, %333, %cst_196 {dimension_numbers = #tpu.dot_dimension_numbers<[1], [1], [0], [0], [0, 0, 1, 0], [], []>} : vector<16x64xf32>, vector<16x64xf32>, vector<16x16xf32> -> vector<16x16xf32>
    %c0_197 = arith.constant 0 : index
    %c0_198 = arith.constant 0 : index
    %335 = vector.load %arg59[%c0_197, %c0_198] : memref<16x16xf32, #tpu.memory_space<vmem>>, vector<16x16xf32>
    tpu.vector_store %arg59[%c0_197, %c0_198], %334 {strides = array<i32>} : memref<16x16xf32, #tpu.memory_space<vmem>>, vector<16x16xf32>,
    return
  }
  func.func @transform_0(%arg0: i32) -> (i32, i32) {
    %c0_i32 = arith.constant 0 : i32
    %c0_i32_0 = arith.constant 0 : i32
    %c0_i32_1 = arith.constant 0 : i32
    return %c0_i32, %c0_i32_0 : i32, i32
  }
  func.func @transform_1(%arg0: i32) -> (i32, i32) {
    %c0_i32 = arith.constant 0 : i32
    %c0_i32_0 = arith.constant 0 : i32
    %c0_i32_1 = arith.constant 0 : i32
    return %c0_i32, %c0_i32_0 : i32, i32
  }
  func.func @transform_2(%arg0: i32) -> (i32, i32) {
    %c0_i32 = arith.constant 0 : i32
    %c0_i32_0 = arith.constant 0 : i32
    %c0_i32_1 = arith.constant 0 : i32
    return %c0_i32, %c0_i32_0 : i32, i32
  }
  func.func @transform_3(%arg0: i32) -> (i32, i32) {
    %c0_i32 = arith.constant 0 : i32
    %c0_i32_0 = arith.constant 0 : i32
    %c0_i32_1 = arith.constant 0 : i32
    return %c0_i32, %c0_i32_0 : i32, i32
  }
  func.func @transform_4(%arg0: i32) -> (i32, i32) {
    %c0_i32 = arith.constant 0 : i32
    %c0_i32_0 = arith.constant 0 : i32
    %c0_i32_1 = arith.constant 0 : i32
    return %c0_i32, %c0_i32_0 : i32, i32
  }
  func.func @transform_5(%arg0: i32) -> (i32, i32) {
    %c0_i32 = arith.constant 0 : i32
    %c0_i32_0 = arith.constant 0 : i32
    %c0_i32_1 = arith.constant 0 : i32
    return %c0_i32, %c0_i32_0 : i32, i32
  }
  func.func @transform_6(%arg0: i32) -> (i32, i32) {
    %c0_i32 = arith.constant 0 : i32
    %c0_i32_0 = arith.constant 0 : i32
    %c0_i32_1 = arith.constant 0 : i32
    return %c0_i32, %c0_i32_0 : i32, i32
  }
  func.func @transform_7(%arg0: i32) -> (i32, i32) {
    %c0_i32 = arith.constant 0 : i32
    %c0_i32_0 = arith.constant 0 : i32
    %c0_i32_1 = arith.constant 0 : i32
    return %c0_i32, %c0_i32_0 : i32, i32
  }
  func.func @transform_8(%arg0: i32) -> (i32, i32) {
    %c0_i32 = arith.constant 0 : i32
    %c0_i32_0 = arith.constant 0 : i32
    %c0_i32_1 = arith.constant 0 : i32
    return %c0_i32, %c0_i32_0 : i32, i32
  }
  func.func @transform_9(%arg0: i32) -> (i32, i32) {
    %c0_i32 = arith.constant 0 : i32
    %c0_i32_0 = arith.constant 0 : i32
    %c0_i32_1 = arith.constant 0 : i32
    return %c0_i32, %c0_i32_0 : i32, i32
  }
  func.func @transform_10(%arg0: i32) -> (i32, i32) {
    %c0_i32 = arith.constant 0 : i32
    %c0_i32_0 = arith.constant 0 : i32
    %c0_i32_1 = arith.constant 0 : i32
    return %c0_i32, %c0_i32_0 : i32, i32
  }
  func.func @transform_11(%arg0: i32) -> (i32, i32) {
    %c0_i32 = arith.constant 0 : i32
    %c0_i32_0 = arith.constant 0 : i32
    %c0_i32_1 = arith.constant 0 : i32
    return %c0_i32, %c0_i32_0 : i32, i32
  }
  func.func @transform_12(%arg0: i32) -> (i32, i32) {
    %c0_i32 = arith.constant 0 : i32
    %c0_i32_0 = arith.constant 0 : i32
    %c0_i32_1 = arith.constant 0 : i32
    return %c0_i32, %c0_i32_0 : i32, i32
  }
  func.func @transform_13(%arg0: i32) -> (i32, i32) {
    %c0_i32 = arith.constant 0 : i32
    %c0_i32_0 = arith.constant 0 : i32
    %c0_i32_1 = arith.constant 0 : i32
    return %c0_i32, %c0_i32_0 : i32, i32
  }
  func.func @transform_14(%arg0: i32) -> (i32, i32) {
    %c0_i32 = arith.constant 0 : i32
    %c0_i32_0 = arith.constant 0 : i32
    %c0_i32_1 = arith.constant 0 : i32
    return %c0_i32, %c0_i32_0 : i32, i32
  }
  func.func @transform_15(%arg0: i32) -> (i32, i32) {
    %c0_i32 = arith.constant 0 : i32
    %c0_i32_0 = arith.constant 0 : i32
    %c0_i32_1 = arith.constant 0 : i32
    return %c0_i32, %c0_i32_0 : i32, i32
  }
  func.func @transform_16(%arg0: i32) -> (i32, i32) {
    %c0_i32 = arith.constant 0 : i32
    %c0_i32_0 = arith.constant 0 : i32
    %c0_i32_1 = arith.constant 0 : i32
    return %c0_i32, %c0_i32_0 : i32, i32
  }
  func.func @transform_17(%arg0: i32) -> (i32, i32) {
    %c0_i32 = arith.constant 0 : i32
    %c0_i32_0 = arith.constant 0 : i32
    %c0_i32_1 = arith.constant 0 : i32
    return %c0_i32, %c0_i32_0 : i32, i32
  }
  func.func @transform_18(%arg0: i32) -> (i32, i32) {
    %c0_i32 = arith.constant 0 : i32
    %c0_i32_0 = arith.constant 0 : i32
    %c0_i32_1 = arith.constant 0 : i32
    return %c0_i32, %c0_i32_0 : i32, i32
  }
  func.func @transform_19(%arg0: i32) -> (i32, i32) {
    %c0_i32 = arith.constant 0 : i32
    %c0_i32_0 = arith.constant 0 : i32
    %c0_i32_1 = arith.constant 0 : i32
    return %c0_i32, %c0_i32_0 : i32, i32
  }
  func.func @transform_20(%arg0: i32) -> (i32, i32) {
    %c0_i32 = arith.constant 0 : i32
    %c0_i32_0 = arith.constant 0 : i32
    %c0_i32_1 = arith.constant 0 : i32
    return %c0_i32, %c0_i32_0 : i32, i32
  }
  func.func @transform_21(%arg0: i32) -> (i32, i32) {
    %c0_i32 = arith.constant 0 : i32
    %c0_i32_0 = arith.constant 0 : i32
    %c0_i32_1 = arith.constant 0 : i32
    return %c0_i32, %c0_i32_0 : i32, i32
  }
  func.func @transform_22(%arg0: i32) -> (i32, i32) {
    %c0_i32 = arith.constant 0 : i32
    %c0_i32_0 = arith.constant 0 : i32
    %c0_i32_1 = arith.constant 0 : i32
    return %c0_i32, %c0_i32_0 : i32, i32
  }
  func.func @transform_23(%arg0: i32) -> (i32, i32) {
    %c0_i32 = arith.constant 0 : i32
    %c0_i32_0 = arith.constant 0 : i32
    %c0_i32_1 = arith.constant 0 : i32
    return %c0_i32, %c0_i32_0 : i32, i32
  }
  func.func @transform_24(%arg0: i32) -> (i32, i32) {
    %c0_i32 = arith.constant 0 : i32
    %c0_i32_0 = arith.constant 0 : i32
    %c0_i32_1 = arith.constant 0 : i32
    return %c0_i32, %c0_i32_0 : i32, i32
  }
  func.func @transform_25(%arg0: i32) -> (i32, i32) {
    %c0_i32 = arith.constant 0 : i32
    %c0_i32_0 = arith.constant 0 : i32
    %c0_i32_1 = arith.constant 0 : i32
    return %c0_i32, %c0_i32_0 : i32, i32
  }
  func.func @transform_26(%arg0: i32) -> (i32, i32) {
    %c0_i32 = arith.constant 0 : i32
    %c0_i32_0 = arith.constant 0 : i32
    %c0_i32_1 = arith.constant 0 : i32
    return %c0_i32, %c0_i32_0 : i32, i32
  }
  func.func @transform_27(%arg0: i32) -> (i32, i32) {
    %c0_i32 = arith.constant 0 : i32
    %c0_i32_0 = arith.constant 0 : i32
    %c0_i32_1 = arith.constant 0 : i32
    return %c0_i32, %c0_i32_0 : i32, i32
  }
  func.func @transform_28(%arg0: i32) -> (i32, i32) {
    %c0_i32 = arith.constant 0 : i32
    %c0_i32_0 = arith.constant 0 : i32
    %c0_i32_1 = arith.constant 0 : i32
    return %c0_i32, %c0_i32_0 : i32, i32
  }
  func.func @transform_29(%arg0: i32) -> (i32, i32) {
    %c0_i32 = arith.constant 0 : i32
    %c0_i32_0 = arith.constant 0 : i32
    %c0_i32_1 = arith.constant 0 : i32
    return %c0_i32, %c0_i32_0 : i32, i32
  }
  func.func @transform_30(%arg0: i32) -> (i32, i32) {
    %c0_i32 = arith.constant 0 : i32
    %c0_i32_0 = arith.constant 0 : i32
    %c0_i32_1 = arith.constant 0 : i32
    return %c0_i32, %c0_i32_0 : i32, i32
  }
  func.func @transform_31(%arg0: i32) -> (i32, i32) {
    %c0_i32 = arith.constant 0 : i32
    %c0_i32_0 = arith.constant 0 : i32
    %c0_i32_1 = arith.constant 0 : i32
    return %c0_i32, %c0_i32_0 : i32, i32
  }
  func.func @transform_32(%arg0: i32) -> (i32, i32) {
    %c0_i32 = arith.constant 0 : i32
    %c0_i32_0 = arith.constant 0 : i32
    %c0_i32_1 = arith.constant 0 : i32
    return %c0_i32, %c0_i32_0 : i32, i32
  }
  func.func @transform_33(%arg0: i32) -> (i32, i32) {
    %c0_i32 = arith.constant 0 : i32
    %c0_i32_0 = arith.constant 0 : i32
    %c0_i32_1 = arith.constant 0 : i32
    return %c0_i32, %c0_i32_0 : i32, i32
  }
  func.func @transform_34(%arg0: i32) -> (i32, i32) {
    %c0_i32 = arith.constant 0 : i32
    %c0_i32_0 = arith.constant 0 : i32
    %c0_i32_1 = arith.constant 0 : i32
    return %c0_i32, %c0_i32_0 : i32, i32
  }
  func.func @transform_35(%arg0: i32) -> (i32, i32) {
    %c0_i32 = arith.constant 0 : i32
    %c0_i32_0 = arith.constant 0 : i32
    %c0_i32_1 = arith.constant 0 : i32
    return %c0_i32, %c0_i32_0 : i32, i32
  }
  func.func @transform_36(%arg0: i32) -> (i32, i32) {
    %c0_i32 = arith.constant 0 : i32
    %c0_i32_0 = arith.constant 0 : i32
    %c0_i32_1 = arith.constant 0 : i32
    return %c0_i32, %c0_i32_0 : i32, i32
  }
  func.func @transform_37(%arg0: i32) -> (i32, i32) {
    %c0_i32 = arith.constant 0 : i32
    %c0_i32_0 = arith.constant 0 : i32
    %c0_i32_1 = arith.constant 0 : i32
    return %c0_i32, %c0_i32_0 : i32, i32
  }
  func.func @transform_38(%arg0: i32) -> (i32, i32) {
    %c0_i32 = arith.constant 0 : i32
    %c0_i32_0 = arith.constant 0 : i32
    %c0_i32_1 = arith.constant 0 : i32
    return %c0_i32, %c0_i32_0 : i32, i32
  }
  func.func @transform_39(%arg0: i32) -> (i32, i32) {
    %c0_i32 = arith.constant 0 : i32
    %c0_i32_0 = arith.constant 0 : i32
    %c0_i32_1 = arith.constant 0 : i32
    return %c0_i32, %c0_i32_0 : i32, i32
  }
  func.func @transform_40(%arg0: i32) -> (i32, i32) {
    %c0_i32 = arith.constant 0 : i32
    %c0_i32_0 = arith.constant 0 : i32
    %c0_i32_1 = arith.constant 0 : i32
    return %c0_i32, %c0_i32_0 : i32, i32
  }
  func.func @transform_41(%arg0: i32) -> (i32, i32) {
    %c0_i32 = arith.constant 0 : i32
    %c0_i32_0 = arith.constant 0 : i32
    %c0_i32_1 = arith.constant 0 : i32
    return %c0_i32, %c0_i32_0 : i32, i32
  }
  func.func @transform_42(%arg0: i32) -> (i32, i32) {
    %c0_i32 = arith.constant 0 : i32
    %c0_i32_0 = arith.constant 0 : i32
    %c0_i32_1 = arith.constant 0 : i32
    return %c0_i32, %c0_i32_0 : i32, i32
  }
  func.func @transform_43(%arg0: i32) -> (i32, i32) {
    %c0_i32 = arith.constant 0 : i32
    %c0_i32_0 = arith.constant 0 : i32
    %c0_i32_1 = arith.constant 0 : i32
    return %c0_i32, %c0_i32_0 : i32, i32
  }
  func.func @transform_44(%arg0: i32) -> (i32, i32) {
    %c0_i32 = arith.constant 0 : i32
    %c0_i32_0 = arith.constant 0 : i32
    %c0_i32_1 = arith.constant 0 : i32
    return %c0_i32, %c0_i32_0 : i32, i32
  }
  func.func @transform_45(%arg0: i32) -> (i32, i32) {
    %c0_i32 = arith.constant 0 : i32
    %c0_i32_0 = arith.constant 0 : i32
    %c0_i32_1 = arith.constant 0 : i32
    return %c0_i32, %c0_i32_0 : i32, i32
  }
  func.func @transform_46(%arg0: i32) -> (i32, i32) {
    %c0_i32 = arith.constant 0 : i32
    %c0_i32_0 = arith.constant 0 : i32
    %c0_i32_1 = arith.constant 0 : i32
    return %c0_i32, %c0_i32_0 : i32, i32
  }
  func.func @transform_47(%arg0: i32) -> (i32, i32) {
    %c0_i32 = arith.constant 0 : i32
    %c0_i32_0 = arith.constant 0 : i32
    %c0_i32_1 = arith.constant 0 : i32
    return %c0_i32, %c0_i32_0 : i32, i32
  }
  func.func @transform_48(%arg0: i32) -> (i32, i32) {
    %c0_i32 = arith.constant 0 : i32
    %c0_i32_0 = arith.constant 0 : i32
    %c0_i32_1 = arith.constant 0 : i32
    return %c0_i32, %c0_i32_0 : i32, i32
  }
  func.func @transform_49(%arg0: i32) -> (i32, i32) {
    %c0_i32 = arith.constant 0 : i32
    %c0_i32_0 = arith.constant 0 : i32
    %c0_i32_1 = arith.constant 0 : i32
    return %c0_i32, %c0_i32_0 : i32, i32
  }
  func.func @transform_50(%arg0: i32) -> (i32, i32) {
    %c0_i32 = arith.constant 0 : i32
    %c0_i32_0 = arith.constant 0 : i32
    %c0_i32_1 = arith.constant 0 : i32
    return %c0_i32, %c0_i32_0 : i32, i32
  }
  func.func @transform_51(%arg0: i32) -> (i32, i32) {
    %c0_i32 = arith.constant 0 : i32
    %c0_i32_0 = arith.constant 0 : i32
    %c0_i32_1 = arith.constant 0 : i32
    return %c0_i32, %c0_i32_0 : i32, i32
  }
  func.func @transform_52(%arg0: i32) -> (i32, i32) {
    %c0_i32 = arith.constant 0 : i32
    %c0_i32_0 = arith.constant 0 : i32
    %c0_i32_1 = arith.constant 0 : i32
    return %c0_i32, %c0_i32_0 : i32, i32
  }
  func.func @transform_53(%arg0: i32) -> (i32, i32) {
    %c0_i32 = arith.constant 0 : i32
    %c0_i32_0 = arith.constant 0 : i32
    %c0_i32_1 = arith.constant 0 : i32
    return %c0_i32, %c0_i32_0 : i32, i32
  }
  func.func @transform_54(%arg0: i32) -> (i32, i32) {
    %c0_i32 = arith.constant 0 : i32
    %c0_i32_0 = arith.constant 0 : i32
    %c0_i32_1 = arith.constant 0 : i32
    return %c0_i32, %c0_i32_0 : i32, i32
  }
  func.func @transform_55(%arg0: i32) -> (i32, i32) {
    %c0_i32 = arith.constant 0 : i32
    %c0_i32_0 = arith.constant 0 : i32
    %c0_i32_1 = arith.constant 0 : i32
    return %c0_i32, %c0_i32_0 : i32, i32
  }
  func.func @transform_56(%arg0: i32) -> (i32, i32) {
    %c0_i32 = arith.constant 0 : i32
    %c0_i32_0 = arith.constant 0 : i32
    %c0_i32_1 = arith.constant 0 : i32
    return %c0_i32, %c0_i32_0 : i32, i32
  }
  func.func @transform_57(%arg0: i32) -> (i32, i32) {
    %c0_i32 = arith.constant 0 : i32
    %c0_i32_0 = arith.constant 0 : i32
    %c0_i32_1 = arith.constant 0 : i32
    return %c0_i32, %c0_i32_0 : i32, i32
  }
  func.func @transform_58(%arg0: i32) -> (i32, i32) {
    %c0_i32 = arith.constant 0 : i32
    %c0_i32_0 = arith.constant 0 : i32
    %c0_i32_1 = arith.constant 0 : i32
    return %c0_i32, %c0_i32_0 : i32, i32
  }
}

</mosaic_0001>

<llo_original>
// kernel: my_model.1
$region0: #{my_model.1}
  #allocation0 [shape = 'u32[]', space=smem, size = 0x4, offset = 0x4, fixed_abs, tag = 'smem constant byte address 0x4 - core index']
  #allocation1 [shape = 'u32[144,128]{1,0:T(1,128)}', space=vmem, size = 0x12000, scoped, tag = 'internal scratch']
  %s0 = inlined_call_operand.smem [shape: u32[59], index: -1, kind: input, shape index: {}]
  %s1 = sld [smem:[%s0]]
  %s2 = scalar_lea.smem %s0, 1
  %s3 = sld [smem:[%s2]]
  %s4 = scalar_lea.smem %s0, 2
  %s5 = sld [smem:[%s4]]
  %s6 = scalar_lea.smem %s0, 3
  %s7 = sld [smem:[%s6]]
  %s8 = scalar_lea.smem %s0, 4
  %s9 = sld [smem:[%s8]]
  %s10 = scalar_lea.smem %s0, 5
  %s11 = sld [smem:[%s10]]
  %s12 = scalar_lea.smem %s0, 6
  %s13 = sld [smem:[%s12]]
  %s14 = scalar_lea.smem %s0, 7
  %s15 = sld [smem:[%s14]]
  %s16 = scalar_lea.smem %s0, 8
  %s17 = sld [smem:[%s16]]
  %s18 = scalar_lea.smem %s0, 9
  %s19 = sld [smem:[%s18]]
  %s20 = scalar_lea.smem %s0, 10
  %s21 = sld [smem:[%s20]]
  %s22 = scalar_lea.smem %s0, 11
  %s23 = sld [smem:[%s22]]
  %s24 = scalar_lea.smem %s0, 12
  %s25 = sld [smem:[%s24]]
  %s26 = scalar_lea.smem %s0, 13
  %s27 = sld [smem:[%s26]]
  %s28 = scalar_lea.smem %s0, 14
  %s29 = sld [smem:[%s28]]
  %s30 = scalar_lea.smem %s0, 15
  %s31 = sld [smem:[%s30]]
  %s32 = scalar_lea.smem %s0, 16
  %s33 = sld [smem:[%s32]]
  %s34 = scalar_lea.smem %s0, 17
  %s35 = sld [smem:[%s34]]
  %s36 = scalar_lea.smem %s0, 18
  %s37 = sld [smem:[%s36]]
  %s38 = scalar_lea.smem %s0, 19
  %s39 = sld [smem:[%s38]]
  %s40 = scalar_lea.smem %s0, 20
  %s41 = sld [smem:[%s40]]
  %s42 = scalar_lea.smem %s0, 21
  %s43 = sld [smem:[%s42]]
  %s44 = scalar_lea.smem %s0, 22
  %s45 = sld [smem:[%s44]]
  %s46 = scalar_lea.smem %s0, 23
  %s47 = sld [smem:[%s46]]
  %s48 = scalar_lea.smem %s0, 24
  %s49 = sld [smem:[%s48]]
  %s50 = scalar_lea.smem %s0, 25
  %s51 = sld [smem:[%s50]]
  %s52 = scalar_lea.smem %s0, 26
  %s53 = sld [smem:[%s52]]
  %s54 = scalar_lea.smem %s0, 27
  %s55 = sld [smem:[%s54]]
  %s56 = scalar_lea.smem %s0, 28
  %s57 = sld [smem:[%s56]]
  %s58 = scalar_lea.smem %s0, 29
  %s59 = sld [smem:[%s58]]
  %s60 = scalar_lea.smem %s0, 30
  %s61 = sld [smem:[%s60]]
  %s62 = scalar_lea.smem %s0, 31
  %s63 = sld [smem:[%s62]]
  %s64 = scalar_lea.smem %s0, 32
  %s65 = sld [smem:[%s64]]
  %s66 = scalar_lea.smem %s0, 33
  %s67 = sld [smem:[%s66]]
  %s68 = scalar_lea.smem %s0, 34
  %s69 = sld [smem:[%s68]]
  %s70 = scalar_lea.smem %s0, 35
  %s71 = sld [smem:[%s70]]
  %s72 = scalar_lea.smem %s0, 36
  %s73 = sld [smem:[%s72]]
  %s74 = scalar_lea.smem %s0, 37
  %s75 = sld [smem:[%s74]]
  %s76 = scalar_lea.smem %s0, 38
  %s77 = sld [smem:[%s76]]
  %s78 = scalar_lea.smem %s0, 39
  %s79 = sld [smem:[%s78]]
  %s80 = scalar_lea.smem %s0, 40
  %s81 = sld [smem:[%s80]]
  %s82 = scalar_lea.smem %s0, 41
  %s83 = sld [smem:[%s82]]
  %s84 = scalar_lea.smem %s0, 42
  %s85 = sld [smem:[%s84]]
  %s86 = scalar_lea.smem %s0, 43
  %s87 = sld [smem:[%s86]]
  %s88 = scalar_lea.smem %s0, 44
  %s89 = sld [smem:[%s88]]
  %s90 = scalar_lea.smem %s0, 45
  %s91 = sld [smem:[%s90]]
  %s92 = scalar_lea.smem %s0, 46
  %s93 = sld [smem:[%s92]]
  %s94 = scalar_lea.smem %s0, 47
  %s95 = sld [smem:[%s94]]
  %s96 = scalar_lea.smem %s0, 48
  %s97 = sld [smem:[%s96]]
  %s98 = scalar_lea.smem %s0, 49
  %s99 = sld [smem:[%s98]]
  %s100 = scalar_lea.smem %s0, 50
  %s101 = sld [smem:[%s100]]
  %s102 = scalar_lea.smem %s0, 51
  %s103 = sld [smem:[%s102]]
  %s104 = scalar_lea.smem %s0, 52
  %s105 = sld [smem:[%s104]]
  %s106 = scalar_lea.smem %s0, 53
  %s107 = sld [smem:[%s106]]
  %s108 = scalar_lea.smem %s0, 54
  %s109 = sld [smem:[%s108]]
  %s110 = scalar_lea.smem %s0, 55
  %s111 = sld [smem:[%s110]]
  %s112 = scalar_lea.smem %s0, 56
  %s113 = sld [smem:[%s112]]
  %s114 = scalar_lea.smem %s0, 57
  %s115 = sld [smem:[%s114]]
  %s116 = scalar_lea.smem %s0, 58
  %s117 = sld [smem:[%s116]]
  %118 = xla_tuple %s113, %s115, %s117
  %s119 = sld [smem:[#allocation0]]
  $region426: #{my_model.1} parent=0
    _
  %s121 = ssub.s32 1, %s119
  %s122 = scalar_select 0, %s121, %s119
  $region1: #{my_model.1} parent=0
    #allocation2 [shape = 'u8[8192]{0}', space=vmem, size = 0x2000, scoped, tag = 'input window, operand 0, single buffered']
    #allocation3 [shape = 's32[1]{0}', space=sflag, size = 0x4, scoped, tag = 'scoped memory for my_model.1']
    #allocation4 [shape = 's32[1]{0}', space=sflag, size = 0x4, scoped, tag = 'scoped memory for my_model.1']
    #allocation5 [shape = 'u8[8192]{0}', space=vmem, size = 0x2000, scoped, tag = 'input window, operand 1, single buffered']
    #allocation6 [shape = 's32[1]{0}', space=sflag, size = 0x4, scoped, tag = 'scoped memory for my_model.1']
    #allocation7 [shape = 'u8[8192]{0}', space=vmem, size = 0x2000, scoped, tag = 'input window, operand 2, single buffered']
    #allocation8 [shape = 'u8[512]{0}', space=vmem, size = 0x400, scoped, tag = 'input window, operand 4, single buffered']
    #allocation9 [shape = 's32[1]{0}', space=sflag, size = 0x4, scoped, tag = 'scoped memory for my_model.1']
    #allocation10 [shape = 'u8[16384]{0}', space=vmem, size = 0x4000, scoped, tag = 'input window, operand 5, single buffered']
    #allocation11 [shape = 'u8[16384]{0}', space=vmem, size = 0x4000, scoped, tag = 'input window, operand 6, single buffered']
    #allocation12 [shape = 's32[1]{0}', space=sflag, size = 0x4, scoped, tag = 'scoped memory for my_model.1']
    #allocation13 [shape = 'u8[512]{0}', space=vmem, size = 0x400, scoped, tag = 'input window, operand 7, single buffered']
    #allocation14 [shape = 'u8[512]{0}', space=vmem, size = 0x400, scoped, tag = 'input window, operand 8, single buffered']
    #allocation15 [shape = 's32[1]{0}', space=sflag, size = 0x4, scoped, tag = 'scoped memory for my_model.1']
    #allocation16 [shape = 'u8[16384]{0}', space=vmem, size = 0x4000, scoped, tag = 'input window, operand 9, single buffered']
    #allocation17 [shape = 'u8[16384]{0}', space=vmem, size = 0x4000, scoped, tag = 'input window, operand 10, single buffered']
    #allocation18 [shape = 's32[1]{0}', space=sflag, size = 0x4, scoped, tag = 'scoped memory for my_model.1']
    #allocation19 [shape = 'u8[512]{0}', space=vmem, size = 0x400, scoped, tag = 'input window, operand 11, single buffered']
    #allocation20 [shape = 'u8[512]{0}', space=vmem, size = 0x400, scoped, tag = 'input window, operand 12, single buffered']
    #allocation21 [shape = 's32[1]{0}', space=sflag, size = 0x4, scoped, tag = 'scoped memory for my_model.1']
    #allocation22 [shape = 'u8[16384]{0}', space=vmem, size = 0x4000, scoped, tag = 'input window, operand 13, single buffered']
    #allocation23 [shape = 'u8[16384]{0}', space=vmem, size = 0x4000, scoped, tag = 'input window, operand 14, single buffered']
    #allocation24 [shape = 's32[1]{0}', space=sflag, size = 0x4, scoped, tag = 'scoped memory for my_model.1']
    #allocation25 [shape = 'u8[512]{0}', space=vmem, size = 0x400, scoped, tag = 'input window, operand 16, single buffered']
    #allocation26 [shape = 'u8[512]{0}', space=vmem, size = 0x400, scoped, tag = 'input window, operand 17, single buffered']
    #allocation27 [shape = 's32[1]{0}', space=sflag, size = 0x4, scoped, tag = 'scoped memory for my_model.1']
    #allocation28 [shape = 'u8[32768]{0}', space=vmem, size = 0x8000, scoped, tag = 'input window, operand 18, single buffered']
    #allocation29 [shape = 'u8[32768]{0}', space=vmem, size = 0x8000, scoped, tag = 'input window, operand 24, single buffered']
    #allocation30 [shape = 's32[1]{0}', space=sflag, size = 0x4, scoped, tag = 'scoped memory for my_model.1']
    #allocation31 [shape = 'u8[8192]{0}', space=vmem, size = 0x2000, scoped, tag = 'input window, operand 27, single buffered']
    #allocation32 [shape = 'u8[8192]{0}', space=vmem, size = 0x2000, scoped, tag = 'input window, operand 28, single buffered']
    #allocation33 [shape = 's32[1]{0}', space=sflag, size = 0x4, scoped, tag = 'scoped memory for my_model.1']
    #allocation34 [shape = 'u8[8192]{0}', space=vmem, size = 0x2000, scoped, tag = 'input window, operand 29, single buffered']
    #allocation35 [shape = 'u8[8192]{0}', space=vmem, size = 0x2000, scoped, tag = 'input window, operand 30, single buffered']
    #allocation36 [shape = 's32[1]{0}', space=sflag, size = 0x4, scoped, tag = 'scoped memory for my_model.1']
    #allocation37 [shape = 'u8[512]{0}', space=vmem, size = 0x400, scoped, tag = 'input window, operand 31, single buffered']
    #allocation38 [shape = 'u8[512]{0}', space=vmem, size = 0x400, scoped, tag = 'input window, operand 32, single buffered']
    #allocation39 [shape = 's32[1]{0}', space=sflag, size = 0x4, scoped, tag = 'scoped memory for my_model.1']
    #allocation40 [shape = 'u8[16384]{0}', space=vmem, size = 0x4000, scoped, tag = 'input window, operand 33, single buffered']
    #allocation41 [shape = 'u8[16384]{0}', space=vmem, size = 0x4000, scoped, tag = 'input window, operand 34, single buffered']
    #allocation42 [shape = 's32[1]{0}', space=sflag, size = 0x4, scoped, tag = 'scoped memory for my_model.1']
    #allocation43 [shape = 'u8[512]{0}', space=vmem, size = 0x400, scoped, tag = 'input window, operand 35, single buffered']
    #allocation44 [shape = 'u8[512]{0}', space=vmem, size = 0x400, scoped, tag = 'input window, operand 36, single buffered']
    #allocation45 [shape = 's32[1]{0}', space=sflag, size = 0x4, scoped, tag = 'scoped memory for my_model.1']
    #allocation46 [shape = 'u8[16384]{0}', space=vmem, size = 0x4000, scoped, tag = 'input window, operand 37, single buffered']
    #allocation47 [shape = 'u8[16384]{0}', space=vmem, size = 0x4000, scoped, tag = 'input window, operand 38, single buffered']
    #allocation48 [shape = 's32[1]{0}', space=sflag, size = 0x4, scoped, tag = 'scoped memory for my_model.1']
    #allocation49 [shape = 'u8[512]{0}', space=vmem, size = 0x400, scoped, tag = 'input window, operand 39, single buffered']
    #allocation50 [shape = 'u8[512]{0}', space=vmem, size = 0x400, scoped, tag = 'input window, operand 40, single buffered']
    #allocation51 [shape = 's32[1]{0}', space=sflag, size = 0x4, scoped, tag = 'scoped memory for my_model.1']
    #allocation52 [shape = 'u8[16384]{0}', space=vmem, size = 0x4000, scoped, tag = 'input window, operand 41, single buffered']
    #allocation53 [shape = 'u8[16384]{0}', space=vmem, size = 0x4000, scoped, tag = 'input window, operand 42, single buffered']
    #allocation54 [shape = 's32[1]{0}', space=sflag, size = 0x4, scoped, tag = 'scoped memory for my_model.1']
    #allocation55 [shape = 'u8[1024]{0}', space=vmem, size = 0x400, scoped, tag = 'input window, operand 43, single buffered']
    #allocation56 [shape = 'u8[512]{0}', space=vmem, size = 0x400, scoped, tag = 'input window, operand 44, single buffered']
    #allocation57 [shape = 's32[1]{0}', space=sflag, size = 0x4, scoped, tag = 'scoped memory for my_model.1']
    #allocation58 [shape = 'u8[512]{0}', space=vmem, size = 0x400, scoped, tag = 'input window, operand 45, single buffered']
    #allocation59 [shape = 'u8[32768]{0}', space=vmem, size = 0x8000, scoped, tag = 'input window, operand 46, single buffered']
    #allocation60 [shape = 's32[1]{0}', space=sflag, size = 0x4, scoped, tag = 'scoped memory for my_model.1']
    #allocation61 [shape = 'u8[1024]{0}', space=vmem, size = 0x400, scoped, tag = 'input window, operand 49, single buffered']
    #allocation62 [shape = 'u8[512]{0}', space=vmem, size = 0x400, scoped, tag = 'input window, operand 50, single buffered']
    #allocation63 [shape = 's32[1]{0}', space=sflag, size = 0x4, scoped, tag = 'scoped memory for my_model.1']
    #allocation64 [shape = 'u8[512]{0}', space=vmem, size = 0x400, scoped, tag = 'input window, operand 51, single buffered']
    #allocation65 [shape = 'u8[32768]{0}', space=vmem, size = 0x8000, scoped, tag = 'input window, operand 52, single buffered']
    #allocation66 [shape = 's32[1]{0}', space=sflag, size = 0x4, scoped, tag = 'scoped memory for my_model.1']
    #allocation67 [shape = 'u8[131072]{0}', space=vmem, size = 0x20000, scoped, tag = 'input window, operand 53, single buffered']
    #allocation68 [shape = 'u8[8192]{0}', space=vmem, size = 0x2000, scoped, tag = 'input window, operand 55, single buffered']
    #allocation69 [shape = 's32[1]{0}', space=sflag, size = 0x4, scoped, tag = 'scoped memory for my_model.1']
    #allocation70 [shape = 'u8[8192]{0}', space=vmem, size = 0x2000, scoped, tag = 'output window, operand 2, single buffered']
    %123 = vsyncpa [#allocation3], 0
    %124 = vsyncpa [#allocation6], 0
    %125 = vsyncpa [#allocation9], 0
    %126 = vsyncpa [#allocation12], 0
    %127 = vsyncpa [#allocation15], 0
    %128 = vsyncpa [#allocation18], 0
    %129 = vsyncpa [#allocation21], 0
    %130 = vsyncpa [#allocation24], 0
    %131 = vsyncpa [#allocation27], 0
    %132 = vsyncpa [#allocation30], 0
    %133 = vsyncpa [#allocation33], 0
    %134 = vsyncpa [#allocation36], 0
    %135 = vsyncpa [#allocation39], 0
    %136 = vsyncpa [#allocation42], 0
    %137 = vsyncpa [#allocation45], 0
    %138 = vsyncpa [#allocation48], 0
    %139 = vsyncpa [#allocation51], 0
    %140 = vsyncpa [#allocation54], 0
    %141 = vsyncpa [#allocation57], 0
    %142 = vsyncpa [#allocation60], 0
    %143 = vsyncpa [#allocation63], 0
    %144 = vsyncpa [#allocation66], 0
    %145 = vsyncpa [#allocation69], 0
    %146 = vsyncpa [#allocation4], 0
    // Predicated region
    $region2: #{my_model.1} parent=1 // pred_check
      _
    $region3: #{my_model.1} parent=1 // pred_check_branch
      %148 = sbr.rel (0) target = $region5
    $region4: #{my_model.1} parent=1 // pred_region
      %s150 = ssub.s32 256, 256
      %151 = vsyncadd [#allocation3], %s150
      %s152 = sshll.u32 [#allocation2], 4
      %s153 = int_to_ptr.vmem [resolvable:$true] %s152
      %158 = dma.hbm_to_vmem [thread:$0]  %s1, 256, %s153, [#allocation3], 128, 128, 8
    $region5: #{my_model.1} parent=1 // pred_fallthru
      _
    // Predicated region
    $region6: #{my_model.1} parent=1 // pred_check
      _
    $region7: #{my_model.1} parent=1 // pred_check_branch
      %160 = sbr.rel (0) target = $region9
    $region8: #{my_model.1} parent=1 // pred_region
      %s162 = ssub.s32 256, 256
      %163 = vsyncadd [#allocation6], %s162
      %s164 = sshll.u32 [#allocation5], 4
      %s165 = int_to_ptr.vmem [resolvable:$true] %s164
      %170 = dma.hbm_to_vmem [thread:$0]  %s3, 256, %s165, [#allocation6], 128, 128, 8
    $region9: #{my_model.1} parent=1 // pred_fallthru
      _
    // Predicated region
    $region10: #{my_model.1} parent=1 // pred_check
      _
    $region11: #{my_model.1} parent=1 // pred_check_branch
      %172 = sbr.rel (0) target = $region13
    $region12: #{my_model.1} parent=1 // pred_region
      %s174 = ssub.s32 256, 256
      %175 = vsyncadd [#allocation6], %s174
      %s176 = sshll.u32 [#allocation7], 4
      %s177 = int_to_ptr.vmem [resolvable:$true] %s176
      %182 = dma.hbm_to_vmem [thread:$0]  %s5, 256, %s177, [#allocation6], 128, 128, 8
    $region13: #{my_model.1} parent=1 // pred_fallthru
      _
    // Predicated region
    $region14: #{my_model.1} parent=1 // pred_check
      _
    $region15: #{my_model.1} parent=1 // pred_check_branch
      %184 = sbr.rel (0) target = $region17
    $region16: #{my_model.1} parent=1 // pred_region
      _
    $region17: #{my_model.1} parent=1 // pred_fallthru
      _
    // Predicated region
    $region18: #{my_model.1} parent=1 // pred_check
      _
    $region19: #{my_model.1} parent=1 // pred_check_branch
      %186 = sbr.rel (0) target = $region21
    $region20: #{my_model.1} parent=1 // pred_region
      %s188 = ssub.s32 16, 16
      %189 = vsyncadd [#allocation9], %s188
      %s191 = sshll.u32 [#allocation8], 4
      %s192 = int_to_ptr.vmem [resolvable:$true] %s191
      %194 = dma.hbm_to_vmem [thread:$0]  %s9, 16, %s192, [#allocation9]
    $region21: #{my_model.1} parent=1 // pred_fallthru
      _
    // Predicated region
    $region22: #{my_model.1} parent=1 // pred_check
      _
    $region23: #{my_model.1} parent=1 // pred_check_branch
      %196 = sbr.rel (0) target = $region25
    $region24: #{my_model.1} parent=1 // pred_region
      %s198 = ssub.s32 512, 512
      %199 = vsyncadd [#allocation9], %s198
      %s200 = sshll.u32 [#allocation10], 4
      %s201 = int_to_ptr.vmem [resolvable:$true] %s200
      %206 = dma.hbm_to_vmem [thread:$0]  %s11, 512, %s201, [#allocation9], 128, 128, 8
    $region25: #{my_model.1} parent=1 // pred_fallthru
      _
    // Predicated region
    $region26: #{my_model.1} parent=1 // pred_check
      _
    $region27: #{my_model.1} parent=1 // pred_check_branch
      %208 = sbr.rel (0) target = $region29
    $region28: #{my_model.1} parent=1 // pred_region
      %s210 = ssub.s32 512, 512
      %211 = vsyncadd [#allocation12], %s210
      %s212 = sshll.u32 [#allocation11], 4
      %s213 = int_to_ptr.vmem [resolvable:$true] %s212
      %218 = dma.hbm_to_vmem [thread:$0]  %s13, 512, %s213, [#allocation12], 128, 128, 8
    $region29: #{my_model.1} parent=1 // pred_fallthru
      _
    // Predicated region
    $region30: #{my_model.1} parent=1 // pred_check
      _
    $region31: #{my_model.1} parent=1 // pred_check_branch
      %220 = sbr.rel (0) target = $region33
    $region32: #{my_model.1} parent=1 // pred_region
      %s222 = ssub.s32 16, 16
      %223 = vsyncadd [#allocation12], %s222
      %s225 = sshll.u32 [#allocation13], 4
      %s226 = int_to_ptr.vmem [resolvable:$true] %s225
      %228 = dma.hbm_to_vmem [thread:$0]  %s15, 16, %s226, [#allocation12]
    $region33: #{my_model.1} parent=1 // pred_fallthru
      _
    // Predicated region
    $region34: #{my_model.1} parent=1 // pred_check
      _
    $region35: #{my_model.1} parent=1 // pred_check_branch
      %230 = sbr.rel (0) target = $region37
    $region36: #{my_model.1} parent=1 // pred_region
      %s232 = ssub.s32 16, 16
      %233 = vsyncadd [#allocation15], %s232
      %s235 = sshll.u32 [#allocation14], 4
      %s236 = int_to_ptr.vmem [resolvable:$true] %s235
      %238 = dma.hbm_to_vmem [thread:$0]  %s17, 16, %s236, [#allocation15]
    $region37: #{my_model.1} parent=1 // pred_fallthru
      _
    // Predicated region
    $region38: #{my_model.1} parent=1 // pred_check
      _
    $region39: #{my_model.1} parent=1 // pred_check_branch
      %240 = sbr.rel (0) target = $region41
    $region40: #{my_model.1} parent=1 // pred_region
      %s242 = ssub.s32 512, 512
      %243 = vsyncadd [#allocation15], %s242
      %s244 = sshll.u32 [#allocation16], 4
      %s245 = int_to_ptr.vmem [resolvable:$true] %s244
      %250 = dma.hbm_to_vmem [thread:$0]  %s19, 512, %s245, [#allocation15], 128, 128, 8
    $region41: #{my_model.1} parent=1 // pred_fallthru
      _
    // Predicated region
    $region42: #{my_model.1} parent=1 // pred_check
      _
    $region43: #{my_model.1} parent=1 // pred_check_branch
      %252 = sbr.rel (0) target = $region45
    $region44: #{my_model.1} parent=1 // pred_region
      %s254 = ssub.s32 512, 512
      %255 = vsyncadd [#allocation18], %s254
      %s256 = sshll.u32 [#allocation17], 4
      %s257 = int_to_ptr.vmem [resolvable:$true] %s256
      %262 = dma.hbm_to_vmem [thread:$0]  %s21, 512, %s257, [#allocation18], 128, 128, 8
    $region45: #{my_model.1} parent=1 // pred_fallthru
      _
    // Predicated region
    $region46: #{my_model.1} parent=1 // pred_check
      _
    $region47: #{my_model.1} parent=1 // pred_check_branch
      %264 = sbr.rel (0) target = $region49
    $region48: #{my_model.1} parent=1 // pred_region
      %s266 = ssub.s32 16, 16
      %267 = vsyncadd [#allocation18], %s266
      %s269 = sshll.u32 [#allocation19], 4
      %s270 = int_to_ptr.vmem [resolvable:$true] %s269
      %272 = dma.hbm_to_vmem [thread:$0]  %s23, 16, %s270, [#allocation18]
    $region49: #{my_model.1} parent=1 // pred_fallthru
      _
    // Predicated region
    $region50: #{my_model.1} parent=1 // pred_check
      _
    $region51: #{my_model.1} parent=1 // pred_check_branch
      %274 = sbr.rel (0) target = $region53
    $region52: #{my_model.1} parent=1 // pred_region
      %s276 = ssub.s32 16, 16
      %277 = vsyncadd [#allocation21], %s276
      %s279 = sshll.u32 [#allocation20], 4
      %s280 = int_to_ptr.vmem [resolvable:$true] %s279
      %282 = dma.hbm_to_vmem [thread:$0]  %s25, 16, %s280, [#allocation21]
    $region53: #{my_model.1} parent=1 // pred_fallthru
      _
    // Predicated region
    $region54: #{my_model.1} parent=1 // pred_check
      _
    $region55: #{my_model.1} parent=1 // pred_check_branch
      %284 = sbr.rel (0) target = $region57
    $region56: #{my_model.1} parent=1 // pred_region
      %s286 = ssub.s32 512, 512
      %287 = vsyncadd [#allocation21], %s286
      %s288 = sshll.u32 [#allocation22], 4
      %s289 = int_to_ptr.vmem [resolvable:$true] %s288
      %294 = dma.hbm_to_vmem [thread:$0]  %s27, 512, %s289, [#allocation21], 128, 128, 8
    $region57: #{my_model.1} parent=1 // pred_fallthru
      _
    // Predicated region
    $region58: #{my_model.1} parent=1 // pred_check
      _
    $region59: #{my_model.1} parent=1 // pred_check_branch
      %296 = sbr.rel (0) target = $region61
    $region60: #{my_model.1} parent=1 // pred_region
      %s298 = ssub.s32 512, 512
      %299 = vsyncadd [#allocation24], %s298
      %s300 = sshll.u32 [#allocation23], 4
      %s301 = int_to_ptr.vmem [resolvable:$true] %s300
      %306 = dma.hbm_to_vmem [thread:$0]  %s29, 512, %s301, [#allocation24], 128, 128, 8
    $region61: #{my_model.1} parent=1 // pred_fallthru
      _
    // Predicated region
    $region62: #{my_model.1} parent=1 // pred_check
      _
    $region63: #{my_model.1} parent=1 // pred_check_branch
      %308 = sbr.rel (0) target = $region65
    $region64: #{my_model.1} parent=1 // pred_region
      _
    $region65: #{my_model.1} parent=1 // pred_fallthru
      _
    // Predicated region
    $region66: #{my_model.1} parent=1 // pred_check
      _
    $region67: #{my_model.1} parent=1 // pred_check_branch
      %310 = sbr.rel (0) target = $region69
    $region68: #{my_model.1} parent=1 // pred_region
      %s312 = ssub.s32 16, 16
      %313 = vsyncadd [#allocation24], %s312
      %s315 = sshll.u32 [#allocation25], 4
      %s316 = int_to_ptr.vmem [resolvable:$true] %s315
      %318 = dma.hbm_to_vmem [thread:$0]  %s33, 16, %s316, [#allocation24]
    $region69: #{my_model.1} parent=1 // pred_fallthru
      _
    // Predicated region
    $region70: #{my_model.1} parent=1 // pred_check
      _
    $region71: #{my_model.1} parent=1 // pred_check_branch
      %320 = sbr.rel (0) target = $region73
    $region72: #{my_model.1} parent=1 // pred_region
      %s322 = ssub.s32 16, 16
      %323 = vsyncadd [#allocation27], %s322
      %s325 = sshll.u32 [#allocation26], 4
      %s326 = int_to_ptr.vmem [resolvable:$true] %s325
      %328 = dma.hbm_to_vmem [thread:$0]  %s35, 16, %s326, [#allocation27]
    $region73: #{my_model.1} parent=1 // pred_fallthru
      _
    // Predicated region
    $region74: #{my_model.1} parent=1 // pred_check
      _
    $region75: #{my_model.1} parent=1 // pred_check_branch
      %330 = sbr.rel (0) target = $region77
    $region76: #{my_model.1} parent=1 // pred_region
      %s332 = ssub.s32 1024, 1024
      %333 = vsyncadd [#allocation27], %s332
      %s334 = sshll.u32 [#allocation28], 4
      %s335 = int_to_ptr.vmem [resolvable:$true] %s334
      %340 = dma.hbm_to_vmem [thread:$0]  %s37, 1024, %s335, [#allocation27], 256, 256, 16
    $region77: #{my_model.1} parent=1 // pred_fallthru
      _
    // Predicated region
    $region78: #{my_model.1} parent=1 // pred_check
      _
    $region79: #{my_model.1} parent=1 // pred_check_branch
      %342 = sbr.rel (0) target = $region81
    $region80: #{my_model.1} parent=1 // pred_region
      _
    $region81: #{my_model.1} parent=1 // pred_fallthru
      _
    // Predicated region
    $region82: #{my_model.1} parent=1 // pred_check
      _
    $region83: #{my_model.1} parent=1 // pred_check_branch
      %344 = sbr.rel (0) target = $region85
    $region84: #{my_model.1} parent=1 // pred_region
      _
    $region85: #{my_model.1} parent=1 // pred_fallthru
      _
    // Predicated region
    $region86: #{my_model.1} parent=1 // pred_check
      _
    $region87: #{my_model.1} parent=1 // pred_check_branch
      %346 = sbr.rel (0) target = $region89
    $region88: #{my_model.1} parent=1 // pred_region
      _
    $region89: #{my_model.1} parent=1 // pred_fallthru
      _
    // Predicated region
    $region90: #{my_model.1} parent=1 // pred_check
      _
    $region91: #{my_model.1} parent=1 // pred_check_branch
      %348 = sbr.rel (0) target = $region93
    $region92: #{my_model.1} parent=1 // pred_region
      _
    $region93: #{my_model.1} parent=1 // pred_fallthru
      _
    // Predicated region
    $region94: #{my_model.1} parent=1 // pred_check
      _
    $region95: #{my_model.1} parent=1 // pred_check_branch
      %350 = sbr.rel (0) target = $region97
    $region96: #{my_model.1} parent=1 // pred_region
      _
    $region97: #{my_model.1} parent=1 // pred_fallthru
      _
    // Predicated region
    $region98: #{my_model.1} parent=1 // pred_check
      _
    $region99: #{my_model.1} parent=1 // pred_check_branch
      %352 = sbr.rel (0) target = $region101
    $region100: #{my_model.1} parent=1 // pred_region
      %s354 = ssub.s32 1024, 1024
      %355 = vsyncadd [#allocation30], %s354
      %s356 = sshll.u32 [#allocation29], 4
      %s357 = int_to_ptr.vmem [resolvable:$true] %s356
      %362 = dma.hbm_to_vmem [thread:$0]  %s49, 1024, %s357, [#allocation30], 256, 256, 16
    $region101: #{my_model.1} parent=1 // pred_fallthru
      _
    // Predicated region
    $region102: #{my_model.1} parent=1 // pred_check
      _
    $region103: #{my_model.1} parent=1 // pred_check_branch
      %364 = sbr.rel (0) target = $region105
    $region104: #{my_model.1} parent=1 // pred_region
      _
    $region105: #{my_model.1} parent=1 // pred_fallthru
      _
    // Predicated region
    $region106: #{my_model.1} parent=1 // pred_check
      _
    $region107: #{my_model.1} parent=1 // pred_check_branch
      %366 = sbr.rel (0) target = $region109
    $region108: #{my_model.1} parent=1 // pred_region
      _
    $region109: #{my_model.1} parent=1 // pred_fallthru
      _
    // Predicated region
    $region110: #{my_model.1} parent=1 // pred_check
      _
    $region111: #{my_model.1} parent=1 // pred_check_branch
      %368 = sbr.rel (0) target = $region113
    $region112: #{my_model.1} parent=1 // pred_region
      %s370 = ssub.s32 256, 256
      %371 = vsyncadd [#allocation30], %s370
      %s372 = sshll.u32 [#allocation31], 4
      %s373 = int_to_ptr.vmem [resolvable:$true] %s372
      %378 = dma.hbm_to_vmem [thread:$0]  %s55, 256, %s373, [#allocation30], 128, 128, 8
    $region113: #{my_model.1} parent=1 // pred_fallthru
      _
    // Predicated region
    $region114: #{my_model.1} parent=1 // pred_check
      _
    $region115: #{my_model.1} parent=1 // pred_check_branch
      %380 = sbr.rel (0) target = $region117
    $region116: #{my_model.1} parent=1 // pred_region
      %s382 = ssub.s32 256, 256
      %383 = vsyncadd [#allocation33], %s382
      %s384 = sshll.u32 [#allocation32], 4
      %s385 = int_to_ptr.vmem [resolvable:$true] %s384
      %390 = dma.hbm_to_vmem [thread:$0]  %s57, 256, %s385, [#allocation33], 128, 128, 8
    $region117: #{my_model.1} parent=1 // pred_fallthru
      _
    // Predicated region
    $region118: #{my_model.1} parent=1 // pred_check
      _
    $region119: #{my_model.1} parent=1 // pred_check_branch
      %392 = sbr.rel (0) target = $region121
    $region120: #{my_model.1} parent=1 // pred_region
      %s394 = ssub.s32 256, 256
      %395 = vsyncadd [#allocation33], %s394
      %s396 = sshll.u32 [#allocation34], 4
      %s397 = int_to_ptr.vmem [resolvable:$true] %s396
      %402 = dma.hbm_to_vmem [thread:$0]  %s59, 256, %s397, [#allocation33], 128, 128, 8
    $region121: #{my_model.1} parent=1 // pred_fallthru
      _
    // Predicated region
    $region122: #{my_model.1} parent=1 // pred_check
      _
    $region123: #{my_model.1} parent=1 // pred_check_branch
      %404 = sbr.rel (0) target = $region125
    $region124: #{my_model.1} parent=1 // pred_region
      %s406 = ssub.s32 256, 256
      %407 = vsyncadd [#allocation36], %s406
      %s408 = sshll.u32 [#allocation35], 4
      %s409 = int_to_ptr.vmem [resolvable:$true] %s408
      %414 = dma.hbm_to_vmem [thread:$0]  %s61, 256, %s409, [#allocation36], 128, 128, 8
    $region125: #{my_model.1} parent=1 // pred_fallthru
      _
    // Predicated region
    $region126: #{my_model.1} parent=1 // pred_check
      _
    $region127: #{my_model.1} parent=1 // pred_check_branch
      %416 = sbr.rel (0) target = $region129
    $region128: #{my_model.1} parent=1 // pred_region
      %s418 = ssub.s32 16, 16
      %419 = vsyncadd [#allocation36], %s418
      %s421 = sshll.u32 [#allocation37], 4
      %s422 = int_to_ptr.vmem [resolvable:$true] %s421
      %424 = dma.hbm_to_vmem [thread:$0]  %s63, 16, %s422, [#allocation36]
    $region129: #{my_model.1} parent=1 // pred_fallthru
      _
    // Predicated region
    $region130: #{my_model.1} parent=1 // pred_check
      _
    $region131: #{my_model.1} parent=1 // pred_check_branch
      %426 = sbr.rel (0) target = $region133
    $region132: #{my_model.1} parent=1 // pred_region
      %s428 = ssub.s32 16, 16
      %429 = vsyncadd [#allocation39], %s428
      %s431 = sshll.u32 [#allocation38], 4
      %s432 = int_to_ptr.vmem [resolvable:$true] %s431
      %434 = dma.hbm_to_vmem [thread:$0]  %s65, 16, %s432, [#allocation39]
    $region133: #{my_model.1} parent=1 // pred_fallthru
      _
    // Predicated region
    $region134: #{my_model.1} parent=1 // pred_check
      _
    $region135: #{my_model.1} parent=1 // pred_check_branch
      %436 = sbr.rel (0) target = $region137
    $region136: #{my_model.1} parent=1 // pred_region
      %s438 = ssub.s32 512, 512
      %439 = vsyncadd [#allocation39], %s438
      %s440 = sshll.u32 [#allocation40], 4
      %s441 = int_to_ptr.vmem [resolvable:$true] %s440
      %446 = dma.hbm_to_vmem [thread:$0]  %s67, 512, %s441, [#allocation39], 128, 128, 8
    $region137: #{my_model.1} parent=1 // pred_fallthru
      _
    // Predicated region
    $region138: #{my_model.1} parent=1 // pred_check
      _
    $region139: #{my_model.1} parent=1 // pred_check_branch
      %448 = sbr.rel (0) target = $region141
    $region140: #{my_model.1} parent=1 // pred_region
      %s450 = ssub.s32 512, 512
      %451 = vsyncadd [#allocation42], %s450
      %s452 = sshll.u32 [#allocation41], 4
      %s453 = int_to_ptr.vmem [resolvable:$true] %s452
      %458 = dma.hbm_to_vmem [thread:$0]  %s69, 512, %s453, [#allocation42], 128, 128, 8
    $region141: #{my_model.1} parent=1 // pred_fallthru
      _
    // Predicated region
    $region142: #{my_model.1} parent=1 // pred_check
      _
    $region143: #{my_model.1} parent=1 // pred_check_branch
      %460 = sbr.rel (0) target = $region145
    $region144: #{my_model.1} parent=1 // pred_region
      %s462 = ssub.s32 16, 16
      %463 = vsyncadd [#allocation42], %s462
      %s465 = sshll.u32 [#allocation43], 4
      %s466 = int_to_ptr.vmem [resolvable:$true] %s465
      %468 = dma.hbm_to_vmem [thread:$0]  %s71, 16, %s466, [#allocation42]
    $region145: #{my_model.1} parent=1 // pred_fallthru
      _
    // Predicated region
    $region146: #{my_model.1} parent=1 // pred_check
      _
    $region147: #{my_model.1} parent=1 // pred_check_branch
      %470 = sbr.rel (0) target = $region149
    $region148: #{my_model.1} parent=1 // pred_region
      %s472 = ssub.s32 16, 16
      %473 = vsyncadd [#allocation45], %s472
      %s475 = sshll.u32 [#allocation44], 4
      %s476 = int_to_ptr.vmem [resolvable:$true] %s475
      %478 = dma.hbm_to_vmem [thread:$0]  %s73, 16, %s476, [#allocation45]
    $region149: #{my_model.1} parent=1 // pred_fallthru
      _
    // Predicated region
    $region150: #{my_model.1} parent=1 // pred_check
      _
    $region151: #{my_model.1} parent=1 // pred_check_branch
      %480 = sbr.rel (0) target = $region153
    $region152: #{my_model.1} parent=1 // pred_region
      %s482 = ssub.s32 512, 512
      %483 = vsyncadd [#allocation45], %s482
      %s484 = sshll.u32 [#allocation46], 4
      %s485 = int_to_ptr.vmem [resolvable:$true] %s484
      %490 = dma.hbm_to_vmem [thread:$0]  %s75, 512, %s485, [#allocation45], 128, 128, 8
    $region153: #{my_model.1} parent=1 // pred_fallthru
      _
    // Predicated region
    $region154: #{my_model.1} parent=1 // pred_check
      _
    $region155: #{my_model.1} parent=1 // pred_check_branch
      %492 = sbr.rel (0) target = $region157
    $region156: #{my_model.1} parent=1 // pred_region
      %s494 = ssub.s32 512, 512
      %495 = vsyncadd [#allocation48], %s494
      %s496 = sshll.u32 [#allocation47], 4
      %s497 = int_to_ptr.vmem [resolvable:$true] %s496
      %502 = dma.hbm_to_vmem [thread:$0]  %s77, 512, %s497, [#allocation48], 128, 128, 8
    $region157: #{my_model.1} parent=1 // pred_fallthru
      _
    // Predicated region
    $region158: #{my_model.1} parent=1 // pred_check
      _
    $region159: #{my_model.1} parent=1 // pred_check_branch
      %504 = sbr.rel (0) target = $region161
    $region160: #{my_model.1} parent=1 // pred_region
      %s506 = ssub.s32 16, 16
      %507 = vsyncadd [#allocation48], %s506
      %s509 = sshll.u32 [#allocation49], 4
      %s510 = int_to_ptr.vmem [resolvable:$true] %s509
      %512 = dma.hbm_to_vmem [thread:$0]  %s79, 16, %s510, [#allocation48]
    $region161: #{my_model.1} parent=1 // pred_fallthru
      _
    // Predicated region
    $region162: #{my_model.1} parent=1 // pred_check
      _
    $region163: #{my_model.1} parent=1 // pred_check_branch
      %514 = sbr.rel (0) target = $region165
    $region164: #{my_model.1} parent=1 // pred_region
      %s516 = ssub.s32 16, 16
      %517 = vsyncadd [#allocation51], %s516
      %s519 = sshll.u32 [#allocation50], 4
      %s520 = int_to_ptr.vmem [resolvable:$true] %s519
      %522 = dma.hbm_to_vmem [thread:$0]  %s81, 16, %s520, [#allocation51]
    $region165: #{my_model.1} parent=1 // pred_fallthru
      _
    // Predicated region
    $region166: #{my_model.1} parent=1 // pred_check
      _
    $region167: #{my_model.1} parent=1 // pred_check_branch
      %524 = sbr.rel (0) target = $region169
    $region168: #{my_model.1} parent=1 // pred_region
      %s526 = ssub.s32 512, 512
      %527 = vsyncadd [#allocation51], %s526
      %s528 = sshll.u32 [#allocation52], 4
      %s529 = int_to_ptr.vmem [resolvable:$true] %s528
      %534 = dma.hbm_to_vmem [thread:$0]  %s83, 512, %s529, [#allocation51], 128, 128, 8
    $region169: #{my_model.1} parent=1 // pred_fallthru
      _
    // Predicated region
    $region170: #{my_model.1} parent=1 // pred_check
      _
    $region171: #{my_model.1} parent=1 // pred_check_branch
      %536 = sbr.rel (0) target = $region173
    $region172: #{my_model.1} parent=1 // pred_region
      %s538 = ssub.s32 512, 512
      %539 = vsyncadd [#allocation54], %s538
      %s540 = sshll.u32 [#allocation53], 4
      %s541 = int_to_ptr.vmem [resolvable:$true] %s540
      %546 = dma.hbm_to_vmem [thread:$0]  %s85, 512, %s541, [#allocation54], 128, 128, 8
    $region173: #{my_model.1} parent=1 // pred_fallthru
      _
    // Predicated region
    $region174: #{my_model.1} parent=1 // pred_check
      _
    $region175: #{my_model.1} parent=1 // pred_check_branch
      %548 = sbr.rel (0) target = $region177
    $region176: #{my_model.1} parent=1 // pred_region
      %s550 = ssub.s32 32, 32
      %551 = vsyncadd [#allocation54], %s550
      %s553 = sshll.u32 [#allocation55], 4
      %s554 = int_to_ptr.vmem [resolvable:$true] %s553
      %556 = dma.hbm_to_vmem [thread:$0]  %s87, 32, %s554, [#allocation54]
    $region177: #{my_model.1} parent=1 // pred_fallthru
      _
    // Predicated region
    $region178: #{my_model.1} parent=1 // pred_check
      _
    $region179: #{my_model.1} parent=1 // pred_check_branch
      %558 = sbr.rel (0) target = $region181
    $region180: #{my_model.1} parent=1 // pred_region
      %s560 = ssub.s32 16, 16
      %561 = vsyncadd [#allocation57], %s560
      %s563 = sshll.u32 [#allocation56], 4
      %s564 = int_to_ptr.vmem [resolvable:$true] %s563
      %566 = dma.hbm_to_vmem [thread:$0]  %s89, 16, %s564, [#allocation57]
    $region181: #{my_model.1} parent=1 // pred_fallthru
      _
    // Predicated region
    $region182: #{my_model.1} parent=1 // pred_check
      _
    $region183: #{my_model.1} parent=1 // pred_check_branch
      %568 = sbr.rel (0) target = $region185
    $region184: #{my_model.1} parent=1 // pred_region
      %s570 = ssub.s32 16, 16
      %571 = vsyncadd [#allocation57], %s570
      %s573 = sshll.u32 [#allocation58], 4
      %s574 = int_to_ptr.vmem [resolvable:$true] %s573
      %576 = dma.hbm_to_vmem [thread:$0]  %s91, 16, %s574, [#allocation57]
    $region185: #{my_model.1} parent=1 // pred_fallthru
      _
    // Predicated region
    $region186: #{my_model.1} parent=1 // pred_check
      _
    $region187: #{my_model.1} parent=1 // pred_check_branch
      %578 = sbr.rel (0) target = $region189
    $region188: #{my_model.1} parent=1 // pred_region
      %s580 = ssub.s32 1024, 1024
      %581 = vsyncadd [#allocation60], %s580
      %s582 = sshll.u32 [#allocation59], 4
      %s583 = int_to_ptr.vmem [resolvable:$true] %s582
      %588 = dma.hbm_to_vmem [thread:$0]  %s93, 1024, %s583, [#allocation60], 256, 256, 16
    $region189: #{my_model.1} parent=1 // pred_fallthru
      _
    // Predicated region
    $region190: #{my_model.1} parent=1 // pred_check
      _
    $region191: #{my_model.1} parent=1 // pred_check_branch
      %590 = sbr.rel (0) target = $region193
    $region192: #{my_model.1} parent=1 // pred_region
      _
    $region193: #{my_model.1} parent=1 // pred_fallthru
      _
    // Predicated region
    $region194: #{my_model.1} parent=1 // pred_check
      _
    $region195: #{my_model.1} parent=1 // pred_check_branch
      %592 = sbr.rel (0) target = $region197
    $region196: #{my_model.1} parent=1 // pred_region
      _
    $region197: #{my_model.1} parent=1 // pred_fallthru
      _
    // Predicated region
    $region198: #{my_model.1} parent=1 // pred_check
      _
    $region199: #{my_model.1} parent=1 // pred_check_branch
      %594 = sbr.rel (0) target = $region201
    $region200: #{my_model.1} parent=1 // pred_region
      %s596 = ssub.s32 32, 32
      %597 = vsyncadd [#allocation60], %s596
      %s599 = sshll.u32 [#allocation61], 4
      %s600 = int_to_ptr.vmem [resolvable:$true] %s599
      %602 = dma.hbm_to_vmem [thread:$0]  %s99, 32, %s600, [#allocation60]
    $region201: #{my_model.1} parent=1 // pred_fallthru
      _
    // Predicated region
    $region202: #{my_model.1} parent=1 // pred_check
      _
    $region203: #{my_model.1} parent=1 // pred_check_branch
      %604 = sbr.rel (0) target = $region205
    $region204: #{my_model.1} parent=1 // pred_region
      %s606 = ssub.s32 16, 16
      %607 = vsyncadd [#allocation63], %s606
      %s609 = sshll.u32 [#allocation62], 4
      %s610 = int_to_ptr.vmem [resolvable:$true] %s609
      %612 = dma.hbm_to_vmem [thread:$0]  %s101, 16, %s610, [#allocation63]
    $region205: #{my_model.1} parent=1 // pred_fallthru
      _
    // Predicated region
    $region206: #{my_model.1} parent=1 // pred_check
      _
    $region207: #{my_model.1} parent=1 // pred_check_branch
      %614 = sbr.rel (0) target = $region209
    $region208: #{my_model.1} parent=1 // pred_region
      %s616 = ssub.s32 16, 16
      %617 = vsyncadd [#allocation63], %s616
      %s619 = sshll.u32 [#allocation64], 4
      %s620 = int_to_ptr.vmem [resolvable:$true] %s619
      %622 = dma.hbm_to_vmem [thread:$0]  %s103, 16, %s620, [#allocation63]
    $region209: #{my_model.1} parent=1 // pred_fallthru
      _
    // Predicated region
    $region210: #{my_model.1} parent=1 // pred_check
      _
    $region211: #{my_model.1} parent=1 // pred_check_branch
      %624 = sbr.rel (0) target = $region213
    $region212: #{my_model.1} parent=1 // pred_region
      %s626 = ssub.s32 1024, 1024
      %627 = vsyncadd [#allocation66], %s626
      %s628 = sshll.u32 [#allocation65], 4
      %s629 = int_to_ptr.vmem [resolvable:$true] %s628
      %634 = dma.hbm_to_vmem [thread:$0]  %s105, 1024, %s629, [#allocation66], 256, 256, 16
    $region213: #{my_model.1} parent=1 // pred_fallthru
      _
    // Predicated region
    $region214: #{my_model.1} parent=1 // pred_check
      _
    $region215: #{my_model.1} parent=1 // pred_check_branch
      %636 = sbr.rel (0) target = $region217
    $region216: #{my_model.1} parent=1 // pred_region
      %s638 = ssub.s32 4096, 4096
      %639 = vsyncadd [#allocation66], %s638
      %s640 = sshll.u32 [#allocation67], 4
      %s641 = int_to_ptr.vmem [resolvable:$true] %s640
      %646 = dma.hbm_to_vmem [thread:$0]  %s107, 4096, %s641, [#allocation66], 128, 128, 8
    $region217: #{my_model.1} parent=1 // pred_fallthru
      _
    // Predicated region
    $region218: #{my_model.1} parent=1 // pred_check
      _
    $region219: #{my_model.1} parent=1 // pred_check_branch
      %648 = sbr.rel (0) target = $region221
    $region220: #{my_model.1} parent=1 // pred_region
      _
    $region221: #{my_model.1} parent=1 // pred_fallthru
      _
    // Predicated region
    $region222: #{my_model.1} parent=1 // pred_check
      _
    $region223: #{my_model.1} parent=1 // pred_check_branch
      %650 = sbr.rel (0) target = $region225
    $region224: #{my_model.1} parent=1 // pred_region
      %s652 = ssub.s32 256, 256
      %653 = vsyncadd [#allocation69], %s652
      %s654 = sshll.u32 [#allocation68], 4
      %s655 = int_to_ptr.vmem [resolvable:$true] %s654
      %660 = dma.hbm_to_vmem [thread:$0]  %s111, 256, %s655, [#allocation69], 128, 128, 8
    $region225: #{my_model.1} parent=1 // pred_fallthru
      _
    // Predicated region
    $region226: #{my_model.1} parent=1 // pred_check
      _
    $region227: #{my_model.1} parent=1 // pred_check_branch
      %662 = sbr.rel (0) target = $region229
    $region228: #{my_model.1} parent=1 // pred_region
      %663 = dma.done [#allocation3], 256
    $region229: #{my_model.1} parent=1 // pred_fallthru
      _
    // Predicated region
    $region230: #{my_model.1} parent=1 // pred_check
      _
    $region231: #{my_model.1} parent=1 // pred_check_branch
      %665 = sbr.rel (0) target = $region233
    $region232: #{my_model.1} parent=1 // pred_region
      %666 = dma.done [#allocation6], 256
    $region233: #{my_model.1} parent=1 // pred_fallthru
      _
    // Predicated region
    $region234: #{my_model.1} parent=1 // pred_check
      _
    $region235: #{my_model.1} parent=1 // pred_check_branch
      %668 = sbr.rel (0) target = $region237
    $region236: #{my_model.1} parent=1 // pred_region
      %669 = dma.done [#allocation6], 256
    $region237: #{my_model.1} parent=1 // pred_fallthru
      _
    // Predicated region
    $region238: #{my_model.1} parent=1 // pred_check
      _
    $region239: #{my_model.1} parent=1 // pred_check_branch
      %671 = sbr.rel (0) target = $region241
    $region240: #{my_model.1} parent=1 // pred_region
      %672 = dma.done [#allocation9], 16
    $region241: #{my_model.1} parent=1 // pred_fallthru
      _
    // Predicated region
    $region242: #{my_model.1} parent=1 // pred_check
      _
    $region243: #{my_model.1} parent=1 // pred_check_branch
      %674 = sbr.rel (0) target = $region245
    $region244: #{my_model.1} parent=1 // pred_region
      %675 = dma.done [#allocation9], 512
    $region245: #{my_model.1} parent=1 // pred_fallthru
      _
    // Predicated region
    $region246: #{my_model.1} parent=1 // pred_check
      _
    $region247: #{my_model.1} parent=1 // pred_check_branch
      %677 = sbr.rel (0) target = $region249
    $region248: #{my_model.1} parent=1 // pred_region
      %678 = dma.done [#allocation12], 512
    $region249: #{my_model.1} parent=1 // pred_fallthru
      _
    // Predicated region
    $region250: #{my_model.1} parent=1 // pred_check
      _
    $region251: #{my_model.1} parent=1 // pred_check_branch
      %680 = sbr.rel (0) target = $region253
    $region252: #{my_model.1} parent=1 // pred_region
      %681 = dma.done [#allocation12], 16
    $region253: #{my_model.1} parent=1 // pred_fallthru
      _
    // Predicated region
    $region254: #{my_model.1} parent=1 // pred_check
      _
    $region255: #{my_model.1} parent=1 // pred_check_branch
      %683 = sbr.rel (0) target = $region257
    $region256: #{my_model.1} parent=1 // pred_region
      %684 = dma.done [#allocation15], 16
    $region257: #{my_model.1} parent=1 // pred_fallthru
      _
    // Predicated region
    $region258: #{my_model.1} parent=1 // pred_check
      _
    $region259: #{my_model.1} parent=1 // pred_check_branch
      %686 = sbr.rel (0) target = $region261
    $region260: #{my_model.1} parent=1 // pred_region
      %687 = dma.done [#allocation15], 512
    $region261: #{my_model.1} parent=1 // pred_fallthru
      _
    // Predicated region
    $region262: #{my_model.1} parent=1 // pred_check
      _
    $region263: #{my_model.1} parent=1 // pred_check_branch
      %689 = sbr.rel (0) target = $region265
    $region264: #{my_model.1} parent=1 // pred_region
      %690 = dma.done [#allocation18], 512
    $region265: #{my_model.1} parent=1 // pred_fallthru
      _
    // Predicated region
    $region266: #{my_model.1} parent=1 // pred_check
      _
    $region267: #{my_model.1} parent=1 // pred_check_branch
      %692 = sbr.rel (0) target = $region269
    $region268: #{my_model.1} parent=1 // pred_region
      %693 = dma.done [#allocation18], 16
    $region269: #{my_model.1} parent=1 // pred_fallthru
      _
    // Predicated region
    $region270: #{my_model.1} parent=1 // pred_check
      _
    $region271: #{my_model.1} parent=1 // pred_check_branch
      %695 = sbr.rel (0) target = $region273
    $region272: #{my_model.1} parent=1 // pred_region
      %696 = dma.done [#allocation21], 16
    $region273: #{my_model.1} parent=1 // pred_fallthru
      _
    // Predicated region
    $region274: #{my_model.1} parent=1 // pred_check
      _
    $region275: #{my_model.1} parent=1 // pred_check_branch
      %698 = sbr.rel (0) target = $region277
    $region276: #{my_model.1} parent=1 // pred_region
      %699 = dma.done [#allocation21], 512
    $region277: #{my_model.1} parent=1 // pred_fallthru
      _
    // Predicated region
    $region278: #{my_model.1} parent=1 // pred_check
      _
    $region279: #{my_model.1} parent=1 // pred_check_branch
      %701 = sbr.rel (0) target = $region281
    $region280: #{my_model.1} parent=1 // pred_region
      %702 = dma.done [#allocation24], 512
    $region281: #{my_model.1} parent=1 // pred_fallthru
      _
    // Predicated region
    $region282: #{my_model.1} parent=1 // pred_check
      _
    $region283: #{my_model.1} parent=1 // pred_check_branch
      %704 = sbr.rel (0) target = $region285
    $region284: #{my_model.1} parent=1 // pred_region
      %705 = dma.done [#allocation24], 16
    $region285: #{my_model.1} parent=1 // pred_fallthru
      _
    // Predicated region
    $region286: #{my_model.1} parent=1 // pred_check
      _
    $region287: #{my_model.1} parent=1 // pred_check_branch
      %707 = sbr.rel (0) target = $region289
    $region288: #{my_model.1} parent=1 // pred_region
      %708 = dma.done [#allocation27], 16
    $region289: #{my_model.1} parent=1 // pred_fallthru
      _
    // Predicated region
    $region290: #{my_model.1} parent=1 // pred_check
      _
    $region291: #{my_model.1} parent=1 // pred_check_branch
      %710 = sbr.rel (0) target = $region293
    $region292: #{my_model.1} parent=1 // pred_region
      %711 = dma.done [#allocation27], 1024
    $region293: #{my_model.1} parent=1 // pred_fallthru
      _
    // Predicated region
    $region294: #{my_model.1} parent=1 // pred_check
      _
    $region295: #{my_model.1} parent=1 // pred_check_branch
      %713 = sbr.rel (0) target = $region297
    $region296: #{my_model.1} parent=1 // pred_region
      %714 = dma.done [#allocation30], 1024
    $region297: #{my_model.1} parent=1 // pred_fallthru
      _
    // Predicated region
    $region298: #{my_model.1} parent=1 // pred_check
      _
    $region299: #{my_model.1} parent=1 // pred_check_branch
      %716 = sbr.rel (0) target = $region301
    $region300: #{my_model.1} parent=1 // pred_region
      %717 = dma.done [#allocation30], 256
    $region301: #{my_model.1} parent=1 // pred_fallthru
      _
    // Predicated region
    $region302: #{my_model.1} parent=1 // pred_check
      _
    $region303: #{my_model.1} parent=1 // pred_check_branch
      %719 = sbr.rel (0) target = $region305
    $region304: #{my_model.1} parent=1 // pred_region
      %720 = dma.done [#allocation33], 256
    $region305: #{my_model.1} parent=1 // pred_fallthru
      _
    // Predicated region
    $region306: #{my_model.1} parent=1 // pred_check
      _
    $region307: #{my_model.1} parent=1 // pred_check_branch
      %722 = sbr.rel (0) target = $region309
    $region308: #{my_model.1} parent=1 // pred_region
      %723 = dma.done [#allocation33], 256
    $region309: #{my_model.1} parent=1 // pred_fallthru
      _
    // Predicated region
    $region310: #{my_model.1} parent=1 // pred_check
      _
    $region311: #{my_model.1} parent=1 // pred_check_branch
      %725 = sbr.rel (0) target = $region313
    $region312: #{my_model.1} parent=1 // pred_region
      %726 = dma.done [#allocation36], 256
    $region313: #{my_model.1} parent=1 // pred_fallthru
      _
    // Predicated region
    $region314: #{my_model.1} parent=1 // pred_check
      _
    $region315: #{my_model.1} parent=1 // pred_check_branch
      %728 = sbr.rel (0) target = $region317
    $region316: #{my_model.1} parent=1 // pred_region
      %729 = dma.done [#allocation36], 16
    $region317: #{my_model.1} parent=1 // pred_fallthru
      _
    // Predicated region
    $region318: #{my_model.1} parent=1 // pred_check
      _
    $region319: #{my_model.1} parent=1 // pred_check_branch
      %731 = sbr.rel (0) target = $region321
    $region320: #{my_model.1} parent=1 // pred_region
      %732 = dma.done [#allocation39], 16
    $region321: #{my_model.1} parent=1 // pred_fallthru
      _
    // Predicated region
    $region322: #{my_model.1} parent=1 // pred_check
      _
    $region323: #{my_model.1} parent=1 // pred_check_branch
      %734 = sbr.rel (0) target = $region325
    $region324: #{my_model.1} parent=1 // pred_region
      %735 = dma.done [#allocation39], 512
    $region325: #{my_model.1} parent=1 // pred_fallthru
      _
    // Predicated region
    $region326: #{my_model.1} parent=1 // pred_check
      _
    $region327: #{my_model.1} parent=1 // pred_check_branch
      %737 = sbr.rel (0) target = $region329
    $region328: #{my_model.1} parent=1 // pred_region
      %738 = dma.done [#allocation42], 512
    $region329: #{my_model.1} parent=1 // pred_fallthru
      _
    // Predicated region
    $region330: #{my_model.1} parent=1 // pred_check
      _
    $region331: #{my_model.1} parent=1 // pred_check_branch
      %740 = sbr.rel (0) target = $region333
    $region332: #{my_model.1} parent=1 // pred_region
      %741 = dma.done [#allocation42], 16
    $region333: #{my_model.1} parent=1 // pred_fallthru
      _
    // Predicated region
    $region334: #{my_model.1} parent=1 // pred_check
      _
    $region335: #{my_model.1} parent=1 // pred_check_branch
      %743 = sbr.rel (0) target = $region337
    $region336: #{my_model.1} parent=1 // pred_region
      %744 = dma.done [#allocation45], 16
    $region337: #{my_model.1} parent=1 // pred_fallthru
      _
    // Predicated region
    $region338: #{my_model.1} parent=1 // pred_check
      _
    $region339: #{my_model.1} parent=1 // pred_check_branch
      %746 = sbr.rel (0) target = $region341
    $region340: #{my_model.1} parent=1 // pred_region
      %747 = dma.done [#allocation45], 512
    $region341: #{my_model.1} parent=1 // pred_fallthru
      _
    // Predicated region
    $region342: #{my_model.1} parent=1 // pred_check
      _
    $region343: #{my_model.1} parent=1 // pred_check_branch
      %749 = sbr.rel (0) target = $region345
    $region344: #{my_model.1} parent=1 // pred_region
      %750 = dma.done [#allocation48], 512
    $region345: #{my_model.1} parent=1 // pred_fallthru
      _
    // Predicated region
    $region346: #{my_model.1} parent=1 // pred_check
      _
    $region347: #{my_model.1} parent=1 // pred_check_branch
      %752 = sbr.rel (0) target = $region349
    $region348: #{my_model.1} parent=1 // pred_region
      %753 = dma.done [#allocation48], 16
    $region349: #{my_model.1} parent=1 // pred_fallthru
      _
    // Predicated region
    $region350: #{my_model.1} parent=1 // pred_check
      _
    $region351: #{my_model.1} parent=1 // pred_check_branch
      %755 = sbr.rel (0) target = $region353
    $region352: #{my_model.1} parent=1 // pred_region
      %756 = dma.done [#allocation51], 16
    $region353: #{my_model.1} parent=1 // pred_fallthru
      _
    // Predicated region
    $region354: #{my_model.1} parent=1 // pred_check
      _
    $region355: #{my_model.1} parent=1 // pred_check_branch
      %758 = sbr.rel (0) target = $region357
    $region356: #{my_model.1} parent=1 // pred_region
      %759 = dma.done [#allocation51], 512
    $region357: #{my_model.1} parent=1 // pred_fallthru
      _
    // Predicated region
    $region358: #{my_model.1} parent=1 // pred_check
      _
    $region359: #{my_model.1} parent=1 // pred_check_branch
      %761 = sbr.rel (0) target = $region361
    $region360: #{my_model.1} parent=1 // pred_region
      %762 = dma.done [#allocation54], 512
    $region361: #{my_model.1} parent=1 // pred_fallthru
      _
    // Predicated region
    $region362: #{my_model.1} parent=1 // pred_check
      _
    $region363: #{my_model.1} parent=1 // pred_check_branch
      %764 = sbr.rel (0) target = $region365
    $region364: #{my_model.1} parent=1 // pred_region
      %765 = dma.done [#allocation54], 32
    $region365: #{my_model.1} parent=1 // pred_fallthru
      _
    // Predicated region
    $region366: #{my_model.1} parent=1 // pred_check
      _
    $region367: #{my_model.1} parent=1 // pred_check_branch
      %767 = sbr.rel (0) target = $region369
    $region368: #{my_model.1} parent=1 // pred_region
      %768 = dma.done [#allocation57], 16
    $region369: #{my_model.1} parent=1 // pred_fallthru
      _
    // Predicated region
    $region370: #{my_model.1} parent=1 // pred_check
      _
    $region371: #{my_model.1} parent=1 // pred_check_branch
      %770 = sbr.rel (0) target = $region373
    $region372: #{my_model.1} parent=1 // pred_region
      %771 = dma.done [#allocation57], 16
    $region373: #{my_model.1} parent=1 // pred_fallthru
      _
    // Predicated region
    $region374: #{my_model.1} parent=1 // pred_check
      _
    $region375: #{my_model.1} parent=1 // pred_check_branch
      %773 = sbr.rel (0) target = $region377
    $region376: #{my_model.1} parent=1 // pred_region
      %774 = dma.done [#allocation60], 1024
    $region377: #{my_model.1} parent=1 // pred_fallthru
      _
    // Predicated region
    $region378: #{my_model.1} parent=1 // pred_check
      _
    $region379: #{my_model.1} parent=1 // pred_check_branch
      %776 = sbr.rel (0) target = $region381
    $region380: #{my_model.1} parent=1 // pred_region
      %777 = dma.done [#allocation60], 32
    $region381: #{my_model.1} parent=1 // pred_fallthru
      _
    // Predicated region
    $region382: #{my_model.1} parent=1 // pred_check
      _
    $region383: #{my_model.1} parent=1 // pred_check_branch
      %779 = sbr.rel (0) target = $region385
    $region384: #{my_model.1} parent=1 // pred_region
      %780 = dma.done [#allocation63], 16
    $region385: #{my_model.1} parent=1 // pred_fallthru
      _
    // Predicated region
    $region386: #{my_model.1} parent=1 // pred_check
      _
    $region387: #{my_model.1} parent=1 // pred_check_branch
      %782 = sbr.rel (0) target = $region389
    $region388: #{my_model.1} parent=1 // pred_region
      %783 = dma.done [#allocation63], 16
    $region389: #{my_model.1} parent=1 // pred_fallthru
      _
    // Predicated region
    $region390: #{my_model.1} parent=1 // pred_check
      _
    $region391: #{my_model.1} parent=1 // pred_check_branch
      %785 = sbr.rel (0) target = $region393
    $region392: #{my_model.1} parent=1 // pred_region
      %786 = dma.done [#allocation66], 1024
    $region393: #{my_model.1} parent=1 // pred_fallthru
      _
    // Predicated region
    $region394: #{my_model.1} parent=1 // pred_check
      _
    $region395: #{my_model.1} parent=1 // pred_check_branch
      %788 = sbr.rel (0) target = $region397
    $region396: #{my_model.1} parent=1 // pred_region
      %789 = dma.done [#allocation66], 4096
    $region397: #{my_model.1} parent=1 // pred_fallthru
      _
    // Predicated region
    $region398: #{my_model.1} parent=1 // pred_check
      _
    $region399: #{my_model.1} parent=1 // pred_check_branch
      %791 = sbr.rel (0) target = $region401
    $region400: #{my_model.1} parent=1 // pred_region
      %792 = dma.done [#allocation69], 256
    $region401: #{my_model.1} parent=1 // pred_fallthru
      _
    %v793 = vld [vmem:[#allocation68] sm:$0xff]
    %v794 = vld [vmem:[#allocation68 + $0x8] sm:$0xff]
    %v795 = vld [vmem:[#allocation32] sm:$0xff]
    %v796 = vld [vmem:[#allocation32 + $0x8] sm:$0xff]
    %v797 = vlaneseq
    %v798 = vshrl.u32 %v797, 7
    %v799 = vadd.s32 %v798, 8
    %v800 = vlaneseq
    %v801 = vand.u32 %v800, 127
    %vm802 = vcmp.eq.s32.totalorder %v798, %v801
    %vm803 = vcmp.eq.s32.totalorder %v799, %v801
    %v804 = vsel %vm802, 1, 0
    %v805 = vsel %vm803, 1, 0
    %v806 = vcvt.s32.f32 %v804
    %v807 = vcvt.s32.f32 %v805
    %v808 = vadd.f32 %v795, %v806
    %v809 = vadd.f32 %v796, %v807
    %vm810 = vcmask 130048
    %v811 = vsel %vm810, %v808, 0.0
    %812 = vadd.xlane.f32.xlu0 %v811
    %v813 = vpop.xlane.xlu0 %812
    %v814 = vsel %vm810, %v809, 0.0
    %815 = vadd.xlane.f32.xlu0 %v814
    %v816 = vpop.xlane.xlu0 %815
    %v817 = vmax.f32 %v813, 1e-12
    %v818 = vmax.f32 %v816, 1e-12
    %v819 = vrsqrt.pop %v817
    %v820 = vrsqrt.pop %v818
    %v821 = vadd.f32 %v811, %v814
    %v822 = vrot.slane %v821, 4
    %v823 = vadd.f32 %v821, %v822
    %v824 = vrot.slane %v823, 2
    %v825 = vadd.f32 %v823, %v824
    %v826 = vrot.slane %v825, 1
    %v827 = vadd.f32 %v825, %v826
    %v828 = vmax.f32 %v827, 1e-12
    %v829 = vrsqrt.pop %v828
    %v830 = vmul.f32 %v808, %v819
    %v831 = vmul.f32 %v809, %v820
    %v832 = vmul.f32 %v830, %v829
    %v833 = vmul.f32 %v831, %v829
    %v834 = vld [vmem:[#allocation34] sm:$0xff]
    %v835 = vld [vmem:[#allocation34 + $0x8] sm:$0xff]
    %v836 = vadd.f32 %v834, %v806
    %v837 = vadd.f32 %v835, %v807
    %v838 = vsel %vm810, %v836, 0.0
    %839 = vadd.xlane.f32.xlu0 %v838
    %v840 = vpop.xlane.xlu0 %839
    %v841 = vsel %vm810, %v837, 0.0
    %842 = vadd.xlane.f32.xlu0 %v841
    %v843 = vpop.xlane.xlu0 %842
    %v844 = vmax.f32 %v840, 1e-12
    %v845 = vmax.f32 %v843, 1e-12
    %v846 = vrsqrt.pop %v844
    %v847 = vrsqrt.pop %v845
    %v848 = vadd.f32 %v838, %v841
    %v849 = vrot.slane %v848, 4
    %v850 = vadd.f32 %v848, %v849
    %v851 = vrot.slane %v850, 2
    %v852 = vadd.f32 %v850, %v851
    %v853 = vrot.slane %v852, 1
    %v854 = vadd.f32 %v852, %v853
    %v855 = vmax.f32 %v854, 1e-12
    %v856 = vrsqrt.pop %v855
    %v857 = vmul.f32 %v836, %v846
    %v858 = vmul.f32 %v837, %v847
    %v859 = vmul.f32 %v857, %v856
    %v860 = vmul.f32 %v858, %v856
    %v861 = vld [vmem:[#allocation35] sm:$0xff]
    %v862 = vld [vmem:[#allocation35 + $0x8] sm:$0xff]
    %v863 = vadd.f32 %v861, %v806
    %v864 = vadd.f32 %v862, %v807
    %v865 = vsel %vm810, %v863, 0.0
    %866 = vadd.xlane.f32.xlu0 %v865
    %v867 = vpop.xlane.xlu0 %866
    %v868 = vsel %vm810, %v864, 0.0
    %869 = vadd.xlane.f32.xlu0 %v868
    %v870 = vpop.xlane.xlu0 %869
    %v871 = vmax.f32 %v867, 1e-12
    %v872 = vmax.f32 %v870, 1e-12
    %v873 = vrsqrt.pop %v871
    %v874 = vrsqrt.pop %v872
    %v875 = vadd.f32 %v865, %v868
    %v876 = vrot.slane %v875, 4
    %v877 = vadd.f32 %v875, %v876
    %v878 = vrot.slane %v877, 2
    %v879 = vadd.f32 %v877, %v878
    %v880 = vrot.slane %v879, 1
    %v881 = vadd.f32 %v879, %v880
    %v882 = vmax.f32 %v881, 1e-12
    %v883 = vrsqrt.pop %v882
    %v884 = vmul.f32 %v863, %v873
    %v885 = vmul.f32 %v864, %v874
    %v886 = vmul.f32 %v884, %v883
    %v887 = vmul.f32 %v885, %v883
    %v888 = vld [vmem:[#allocation40] sm:$0xff]
    %v889 = vld [vmem:[#allocation40 + $0x8] sm:$0xff]
    %v890 = vld [vmem:[#allocation40 + $0x10] sm:$0xff]
    %v891 = vld [vmem:[#allocation40 + $0x18] sm:$0xff]
    %v892 = vld [vmem:[#allocation46] sm:$0xff]
    %v893 = vld [vmem:[#allocation46 + $0x8] sm:$0xff]
    %v894 = vld [vmem:[#allocation46 + $0x10] sm:$0xff]
    %v895 = vld [vmem:[#allocation46 + $0x18] sm:$0xff]
    %v896 = vld [vmem:[#allocation52] sm:$0xff]
    %v897 = vld [vmem:[#allocation52 + $0x8] sm:$0xff]
    %v898 = vld [vmem:[#allocation52 + $0x10] sm:$0xff]
    %v899 = vld [vmem:[#allocation52 + $0x18] sm:$0xff]
    %904 = vrot.lane.b32.xlu0 %v892, 32
    %v905 = vpop.permute.xlu0 %904
    %906 = vrot.lane.b32.xlu0 %v893, 32
    %v907 = vpop.permute.xlu0 %906
    %908 = vrot.lane.b32.xlu0 %v894, 32
    %v909 = vpop.permute.xlu0 %908
    %910 = vrot.lane.b32.xlu0 %v895, 32
    %v911 = vpop.permute.xlu0 %910
    %920 = vrot.lane.b32.xlu0 %v896, 64
    %v921 = vpop.permute.xlu0 %920
    %922 = vrot.lane.b32.xlu0 %v897, 64
    %v923 = vpop.permute.xlu0 %922
    %924 = vrot.lane.b32.xlu0 %v898, 64
    %v925 = vpop.permute.xlu0 %924
    %926 = vrot.lane.b32.xlu0 %v899, 64
    %v927 = vpop.permute.xlu0 %926
    %vm932 = vcmask 261120
    %v933 = vsel %vm932, %v888, %v905
    %v934 = vsel %vm932, %v889, %v907
    %v935 = vsel %vm932, %v890, %v909
    %v936 = vsel %vm932, %v891, %v911
    %vm937 = vcmask 523264
    %v938 = vsel %vm937, %v933, %v921
    %v939 = vsel %vm937, %v934, %v923
    %v940 = vsel %vm937, %v935, %v925
    %v941 = vsel %vm937, %v936, %v927
    %v943 = vsel %vm932, %v793, 0
    %v946 = vsel %vm932, %v794, 0
    %948 = vmatprep.subr.mxu0 0.0
    %949 = vmatpush1.msra.mxu0 %v938
    %950 = vmatprep.subr.mxu0 0.0
    %951 = vmatpush1.msra.mxu0 %v939
    %952 = vmatprep.subr.mxu0 0.0
    %953 = vmatpush1.msra.mxu0 %v940
    %954 = vmatprep.subr.mxu0 0.0
    %955 = vmatpush1.msra.mxu0 %v941
    %956 = vmatprep.subr.mxu0 0.0
    %957 = vmatpush1.msra.mxu0 0.0
    %958 = vmatprep.subr.mxu0 0.0
    %959 = vmatpush1.msra.mxu0 0.0
    %960 = vmatprep.subr.mxu0 0.0
    %961 = vmatpush1.msra.mxu0 0.0
    %962 = vmatprep.subr.mxu0 0.0
    %963 = vmatpush1.msra.mxu0 0.0
    %964 = vmatprep.subr.mxu0 0.0
    %965 = vmatpush1.msra.mxu0 0.0
    %966 = vmatprep.subr.mxu0 0.0
    %967 = vmatpush1.msra.mxu0 0.0
    %968 = vmatprep.subr.mxu0 0.0
    %969 = vmatpush1.msra.mxu0 0.0
    %970 = vmatprep.subr.mxu0 0.0
    %971 = vmatpush1.msra.mxu0 0.0
    %972 = vmatprep.subr.mxu0 0.0
    %973 = vmatpush1.msra.mxu0 0.0
    %974 = vmatprep.subr.mxu0 0.0
    %975 = vmatpush1.msra.mxu0 0.0
    %976 = vmatprep.subr.mxu0 0.0
    %977 = vmatpush1.msra.mxu0 0.0
    %978 = vmatprep.subr.mxu0 0.0
    %979 = vmatpush1.msra.mxu0 0.0
    %980 = vmatprep.subr.mxu0 0.0
    %981 = vmatpush1.msra.mxu0 0.0
    %982 = vmatprep.subr.mxu0 0.0
    %983 = vmatpush1.msra.mxu0 0.0
    %984 = vmatprep.subr.mxu0 0.0
    %985 = vmatpush1.msra.mxu0 0.0
    %986 = vmatprep.subr.mxu0 0.0
    %987 = vmatpush1.msra.mxu0 0.0
    %988 = vmatprep.subr.mxu0 0.0
    %989 = vmatpush1.msra.mxu0 0.0
    %990 = vmatprep.subr.mxu0 0.0
    %991 = vmatpush1.msra.mxu0 0.0
    %992 = vmatprep.subr.mxu0 0.0
    %993 = vmatpush1.msra.mxu0 0.0
    %994 = vmatprep.subr.mxu0 0.0
    %995 = vmatpush1.msra.mxu0 0.0
    %996 = vmatprep.subr.mxu0 0.0
    %997 = vmatpush1.msra.mxu0 0.0
    %998 = vmatprep.subr.mxu0 0.0
    %999 = vmatpush1.msra.mxu0 0.0
    %1000 = vmatprep.subr.mxu0 0.0
    %1001 = vmatpush1.msra.mxu0 0.0
    %1002 = vmatprep.subr.mxu0 0.0
    %1003 = vmatpush1.msra.mxu0 0.0
    %1004 = vmatprep.subr.mxu0 0.0
    %1005 = vmatpush1.msra.mxu0 0.0
    %1006 = vmatprep.subr.mxu0 0.0
    %1007 = vmatpush1.msra.mxu0 0.0
    %1008 = vmatprep.subr.mxu0 0.0
    %1009 = vmatpush1.msra.mxu0 0.0
    %1010 = vmatprep.subr.mxu0 0.0
    %1011 = vmatpush1.msra.mxu0 0.0
    %1012 = vmatprep.mubr.f32.mxu0 0.0
    %1013 = vmatmul.mubr.f32.gmra.mrb[0].mxu0 %v943
    %v1014 = vpop.f32.mrb[0].mxu0
    %v1015 = vadd.f32 0.0, %v1014
    %v1016 = vpop.f32.mrb[0].mxu0
    %1017 = vmatprep.mubr.f32.mxu0 0.0
    %1018 = vmatmul.mubr.f32.gmra.mrb[0].mxu0 %v946
    %v1019 = vpop.f32.mrb[0].mxu0
    %v1020 = vadd.f32 0.0, %v1019
    %v1021 = vpop.f32.mrb[0].mxu0
    %1022 = vdwg.mxu0
    %v1023 = vld [vmem:[#allocation37] sm:$0x1]
    %v1025 = vlaneseq
    %v1026 = vshrl.u32 %v1025, 7
    %v1027 = vsub.s32 0, %v1026
    %v1028 = vrot.slane %v1023, %v1027
    %v1031 = vsel %vm810, %v832, 0
    %v1034 = vsel %vm810, %v833, 0
    %1036 = vmatprep.subr.mxu0 0.0
    %1037 = vmatpush1.msra.mxu0 %v1015
    %1038 = vmatprep.subr.mxu0 0.0
    %1039 = vmatpush1.msra.mxu0 %v1020
    %1040 = vmatprep.subr.mxu0 0.0
    %1041 = vmatpush1.msra.mxu0 0.0
    %1042 = vmatprep.subr.mxu0 0.0
    %1043 = vmatpush1.msra.mxu0 0.0
    %1044 = vmatprep.subr.mxu0 0.0
    %1045 = vmatpush1.msra.mxu0 0.0
    %1046 = vmatprep.subr.mxu0 0.0
    %1047 = vmatpush1.msra.mxu0 0.0
    %1048 = vmatprep.subr.mxu0 0.0
    %1049 = vmatpush1.msra.mxu0 0.0
    %1050 = vmatprep.subr.mxu0 0.0
    %1051 = vmatpush1.msra.mxu0 0.0
    %1052 = vmatprep.subr.mxu0 0.0
    %1053 = vmatpush1.msra.mxu0 0.0
    %1054 = vmatprep.subr.mxu0 0.0
    %1055 = vmatpush1.msra.mxu0 0.0
    %1056 = vmatprep.subr.mxu0 0.0
    %1057 = vmatpush1.msra.mxu0 0.0
    %1058 = vmatprep.subr.mxu0 0.0
    %1059 = vmatpush1.msra.mxu0 0.0
    %1060 = vmatprep.subr.mxu0 0.0
    %1061 = vmatpush1.msra.mxu0 0.0
    %1062 = vmatprep.subr.mxu0 0.0
    %1063 = vmatpush1.msra.mxu0 0.0
    %1064 = vmatprep.subr.mxu0 0.0
    %1065 = vmatpush1.msra.mxu0 0.0
    %1066 = vmatprep.subr.mxu0 0.0
    %1067 = vmatpush1.msra.mxu0 0.0
    %1068 = vmatprep.subr.mxu0 0.0
    %1069 = vmatpush1.msra.mxu0 0.0
    %1070 = vmatprep.subr.mxu0 0.0
    %1071 = vmatpush1.msra.mxu0 0.0
    %1072 = vmatprep.subr.mxu0 0.0
    %1073 = vmatpush1.msra.mxu0 0.0
    %1074 = vmatprep.subr.mxu0 0.0
    %1075 = vmatpush1.msra.mxu0 0.0
    %1076 = vmatprep.subr.mxu0 0.0
    %1077 = vmatpush1.msra.mxu0 0.0
    %1078 = vmatprep.subr.mxu0 0.0
    %1079 = vmatpush1.msra.mxu0 0.0
    %1080 = vmatprep.subr.mxu0 0.0
    %1081 = vmatpush1.msra.mxu0 0.0
    %1082 = vmatprep.subr.mxu0 0.0
    %1083 = vmatpush1.msra.mxu0 0.0
    %1084 = vmatprep.subr.mxu0 0.0
    %1085 = vmatpush1.msra.mxu0 0.0
    %1086 = vmatprep.subr.mxu0 0.0
    %1087 = vmatpush1.msra.mxu0 0.0
    %1088 = vmatprep.subr.mxu0 0.0
    %1089 = vmatpush1.msra.mxu0 0.0
    %1090 = vmatprep.subr.mxu0 0.0
    %1091 = vmatpush1.msra.mxu0 0.0
    %1092 = vmatprep.subr.mxu0 0.0
    %1093 = vmatpush1.msra.mxu0 0.0
    %1094 = vmatprep.subr.mxu0 0.0
    %1095 = vmatpush1.msra.mxu0 0.0
    %1096 = vmatprep.subr.mxu0 0.0
    %1097 = vmatpush1.msra.mxu0 0.0
    %1098 = vmatprep.subr.mxu0 0.0
    %1099 = vmatpush1.msra.mxu0 0.0
    %1100 = vmatprep.mubr.f32.mxu0 0.0
    %1101 = vmatmul.mubr.f32.gmra.mrb[0].mxu0 %v1031
    %v1102 = vpop.f32.mrb[0].mxu0
    %v1103 = vadd.f32 %v1028, %v1102
    %v1104 = vpop.f32.mrb[0].mxu0
    %1105 = vmatprep.mubr.f32.mxu0 0.0
    %1106 = vmatmul.mubr.f32.gmra.mrb[0].mxu0 %v1034
    %v1107 = vpop.f32.mrb[0].mxu0
    %v1108 = vadd.f32 %v1028, %v1107
    %v1109 = vpop.f32.mrb[0].mxu0
    %1110 = vdwg.mxu0
    %v1111 = vmax.f32 %v1103, 0.0
    %v1112 = vmax.f32 %v1108, 0.0
    %v1113 = vld [vmem:[#allocation41] sm:$0xff]
    %v1114 = vld [vmem:[#allocation41 + $0x8] sm:$0xff]
    %v1115 = vld [vmem:[#allocation41 + $0x10] sm:$0xff]
    %v1116 = vld [vmem:[#allocation41 + $0x18] sm:$0xff]
    %v1118 = vsel %vm932, %v1111, 0
    %v1121 = vsel %vm932, %v1112, 0
    %1123 = vmatprep.subr.mxu0 0.0
    %1124 = vmatpush1.msra.mxu0 %v1113
    %1125 = vmatprep.subr.mxu0 0.0
    %1126 = vmatpush1.msra.mxu0 %v1114
    %1127 = vmatprep.subr.mxu0 0.0
    %1128 = vmatpush1.msra.mxu0 %v1115
    %1129 = vmatprep.subr.mxu0 0.0
    %1130 = vmatpush1.msra.mxu0 %v1116
    %1131 = vmatprep.subr.mxu0 0.0
    %1132 = vmatpush1.msra.mxu0 0.0
    %1133 = vmatprep.subr.mxu0 0.0
    %1134 = vmatpush1.msra.mxu0 0.0
    %1135 = vmatprep.subr.mxu0 0.0
    %1136 = vmatpush1.msra.mxu0 0.0
    %1137 = vmatprep.subr.mxu0 0.0
    %1138 = vmatpush1.msra.mxu0 0.0
    %1139 = vmatprep.subr.mxu0 0.0
    %1140 = vmatpush1.msra.mxu0 0.0
    %1141 = vmatprep.subr.mxu0 0.0
    %1142 = vmatpush1.msra.mxu0 0.0
    %1143 = vmatprep.subr.mxu0 0.0
    %1144 = vmatpush1.msra.mxu0 0.0
    %1145 = vmatprep.subr.mxu0 0.0
    %1146 = vmatpush1.msra.mxu0 0.0
    %1147 = vmatprep.subr.mxu0 0.0
    %1148 = vmatpush1.msra.mxu0 0.0
    %1149 = vmatprep.subr.mxu0 0.0
    %1150 = vmatpush1.msra.mxu0 0.0
    %1151 = vmatprep.subr.mxu0 0.0
    %1152 = vmatpush1.msra.mxu0 0.0
    %1153 = vmatprep.subr.mxu0 0.0
    %1154 = vmatpush1.msra.mxu0 0.0
    %1155 = vmatprep.subr.mxu0 0.0
    %1156 = vmatpush1.msra.mxu0 0.0
    %1157 = vmatprep.subr.mxu0 0.0
    %1158 = vmatpush1.msra.mxu0 0.0
    %1159 = vmatprep.subr.mxu0 0.0
    %1160 = vmatpush1.msra.mxu0 0.0
    %1161 = vmatprep.subr.mxu0 0.0
    %1162 = vmatpush1.msra.mxu0 0.0
    %1163 = vmatprep.subr.mxu0 0.0
    %1164 = vmatpush1.msra.mxu0 0.0
    %1165 = vmatprep.subr.mxu0 0.0
    %1166 = vmatpush1.msra.mxu0 0.0
    %1167 = vmatprep.subr.mxu0 0.0
    %1168 = vmatpush1.msra.mxu0 0.0
    %1169 = vmatprep.subr.mxu0 0.0
    %1170 = vmatpush1.msra.mxu0 0.0
    %1171 = vmatprep.subr.mxu0 0.0
    %1172 = vmatpush1.msra.mxu0 0.0
    %1173 = vmatprep.subr.mxu0 0.0
    %1174 = vmatpush1.msra.mxu0 0.0
    %1175 = vmatprep.subr.mxu0 0.0
    %1176 = vmatpush1.msra.mxu0 0.0
    %1177 = vmatprep.subr.mxu0 0.0
    %1178 = vmatpush1.msra.mxu0 0.0
    %1179 = vmatprep.subr.mxu0 0.0
    %1180 = vmatpush1.msra.mxu0 0.0
    %1181 = vmatprep.subr.mxu0 0.0
    %1182 = vmatpush1.msra.mxu0 0.0
    %1183 = vmatprep.subr.mxu0 0.0
    %1184 = vmatpush1.msra.mxu0 0.0
    %1185 = vmatprep.subr.mxu0 0.0
    %1186 = vmatpush1.msra.mxu0 0.0
    %1187 = vmatprep.mubr.f32.mxu0 0.0
    %1188 = vmatmul.mubr.f32.gmra.mrb[0].mxu0 %v1118
    %v1189 = vpop.f32.mrb[0].mxu0
    %v1190 = vadd.f32 0.0, %v1189
    %v1191 = vpop.f32.mrb[0].mxu0
    %1192 = vmatprep.mubr.f32.mxu0 0.0
    %1193 = vmatmul.mubr.f32.gmra.mrb[0].mxu0 %v1121
    %v1194 = vpop.f32.mrb[0].mxu0
    %v1195 = vadd.f32 0.0, %v1194
    %v1196 = vpop.f32.mrb[0].mxu0
    %1197 = vdwg.mxu0
    %v1198 = vld [vmem:[#allocation38] sm:$0x1]
    %v1200 = vlaneseq
    %v1201 = vshrl.u32 %v1200, 7
    %v1202 = vsub.s32 0, %v1201
    %v1203 = vrot.slane %v1198, %v1202
    %1205 = vmatprep.subr.mxu0 0.0
    %1206 = vmatpush1.msra.mxu0 %v1190
    %1207 = vmatprep.subr.mxu0 0.0
    %1208 = vmatpush1.msra.mxu0 %v1195
    %1209 = vmatprep.subr.mxu0 0.0
    %1210 = vmatpush1.msra.mxu0 0.0
    %1211 = vmatprep.subr.mxu0 0.0
    %1212 = vmatpush1.msra.mxu0 0.0
    %1213 = vmatprep.subr.mxu0 0.0
    %1214 = vmatpush1.msra.mxu0 0.0
    %1215 = vmatprep.subr.mxu0 0.0
    %1216 = vmatpush1.msra.mxu0 0.0
    %1217 = vmatprep.subr.mxu0 0.0
    %1218 = vmatpush1.msra.mxu0 0.0
    %1219 = vmatprep.subr.mxu0 0.0
    %1220 = vmatpush1.msra.mxu0 0.0
    %1221 = vmatprep.subr.mxu0 0.0
    %1222 = vmatpush1.msra.mxu0 0.0
    %1223 = vmatprep.subr.mxu0 0.0
    %1224 = vmatpush1.msra.mxu0 0.0
    %1225 = vmatprep.subr.mxu0 0.0
    %1226 = vmatpush1.msra.mxu0 0.0
    %1227 = vmatprep.subr.mxu0 0.0
    %1228 = vmatpush1.msra.mxu0 0.0
    %1229 = vmatprep.subr.mxu0 0.0
    %1230 = vmatpush1.msra.mxu0 0.0
    %1231 = vmatprep.subr.mxu0 0.0
    %1232 = vmatpush1.msra.mxu0 0.0
    %1233 = vmatprep.subr.mxu0 0.0
    %1234 = vmatpush1.msra.mxu0 0.0
    %1235 = vmatprep.subr.mxu0 0.0
    %1236 = vmatpush1.msra.mxu0 0.0
    %1237 = vmatprep.subr.mxu0 0.0
    %1238 = vmatpush1.msra.mxu0 0.0
    %1239 = vmatprep.subr.mxu0 0.0
    %1240 = vmatpush1.msra.mxu0 0.0
    %1241 = vmatprep.subr.mxu0 0.0
    %1242 = vmatpush1.msra.mxu0 0.0
    %1243 = vmatprep.subr.mxu0 0.0
    %1244 = vmatpush1.msra.mxu0 0.0
    %1245 = vmatprep.subr.mxu0 0.0
    %1246 = vmatpush1.msra.mxu0 0.0
    %1247 = vmatprep.subr.mxu0 0.0
    %1248 = vmatpush1.msra.mxu0 0.0
    %1249 = vmatprep.subr.mxu0 0.0
    %1250 = vmatpush1.msra.mxu0 0.0
    %1251 = vmatprep.subr.mxu0 0.0
    %1252 = vmatpush1.msra.mxu0 0.0
    %1253 = vmatprep.subr.mxu0 0.0
    %1254 = vmatpush1.msra.mxu0 0.0
    %1255 = vmatprep.subr.mxu0 0.0
    %1256 = vmatpush1.msra.mxu0 0.0
    %1257 = vmatprep.subr.mxu0 0.0
    %1258 = vmatpush1.msra.mxu0 0.0
    %1259 = vmatprep.subr.mxu0 0.0
    %1260 = vmatpush1.msra.mxu0 0.0
    %1261 = vmatprep.subr.mxu0 0.0
    %1262 = vmatpush1.msra.mxu0 0.0
    %1263 = vmatprep.subr.mxu0 0.0
    %1264 = vmatpush1.msra.mxu0 0.0
    %1265 = vmatprep.subr.mxu0 0.0
    %1266 = vmatpush1.msra.mxu0 0.0
    %1267 = vmatprep.subr.mxu0 0.0
    %1268 = vmatpush1.msra.mxu0 0.0
    %1269 = vmatprep.mubr.f32.mxu0 0.0
    %1270 = vmatmul.mubr.f32.gmra.mrb[0].mxu0 %v1031
    %v1271 = vpop.f32.mrb[0].mxu0
    %v1272 = vadd.f32 %v1203, %v1271
    %v1273 = vpop.f32.mrb[0].mxu0
    %1274 = vmatprep.mubr.f32.mxu0 0.0
    %1275 = vmatmul.mubr.f32.gmra.mrb[0].mxu0 %v1034
    %v1276 = vpop.f32.mrb[0].mxu0
    %v1277 = vadd.f32 %v1203, %v1276
    %v1278 = vpop.f32.mrb[0].mxu0
    %1279 = vdwg.mxu0
    %v1280 = vmax.f32 %v1272, 0.0
    %v1281 = vmax.f32 %v1277, 0.0
    %v1282 = vld [vmem:[#allocation43] sm:$0x1]
    %v1284 = vlaneseq
    %v1285 = vshrl.u32 %v1284, 7
    %v1286 = vsub.s32 0, %v1285
    %v1287 = vrot.slane %v1282, %v1286
    %1291 = vrot.lane.b32.xlu0 %v1015, 96
    %v1292 = vpop.permute.xlu0 %1291
    %1293 = vrot.lane.b32.xlu0 %v1020, 96
    %v1294 = vpop.permute.xlu0 %1293
    %v1298 = vsel %vm810, %v859, 0
    %v1301 = vsel %vm810, %v860, 0
    %1303 = vmatprep.subr.mxu0 0.0
    %1304 = vmatpush1.msra.mxu0 %v1292
    %1305 = vmatprep.subr.mxu0 0.0
    %1306 = vmatpush1.msra.mxu0 %v1294
    %1307 = vmatprep.subr.mxu0 0.0
    %1308 = vmatpush1.msra.mxu0 0.0
    %1309 = vmatprep.subr.mxu0 0.0
    %1310 = vmatpush1.msra.mxu0 0.0
    %1311 = vmatprep.subr.mxu0 0.0
    %1312 = vmatpush1.msra.mxu0 0.0
    %1313 = vmatprep.subr.mxu0 0.0
    %1314 = vmatpush1.msra.mxu0 0.0
    %1315 = vmatprep.subr.mxu0 0.0
    %1316 = vmatpush1.msra.mxu0 0.0
    %1317 = vmatprep.subr.mxu0 0.0
    %1318 = vmatpush1.msra.mxu0 0.0
    %1319 = vmatprep.subr.mxu0 0.0
    %1320 = vmatpush1.msra.mxu0 0.0
    %1321 = vmatprep.subr.mxu0 0.0
    %1322 = vmatpush1.msra.mxu0 0.0
    %1323 = vmatprep.subr.mxu0 0.0
    %1324 = vmatpush1.msra.mxu0 0.0
    %1325 = vmatprep.subr.mxu0 0.0
    %1326 = vmatpush1.msra.mxu0 0.0
    %1327 = vmatprep.subr.mxu0 0.0
    %1328 = vmatpush1.msra.mxu0 0.0
    %1329 = vmatprep.subr.mxu0 0.0
    %1330 = vmatpush1.msra.mxu0 0.0
    %1331 = vmatprep.subr.mxu0 0.0
    %1332 = vmatpush1.msra.mxu0 0.0
    %1333 = vmatprep.subr.mxu0 0.0
    %1334 = vmatpush1.msra.mxu0 0.0
    %1335 = vmatprep.subr.mxu0 0.0
    %1336 = vmatpush1.msra.mxu0 0.0
    %1337 = vmatprep.subr.mxu0 0.0
    %1338 = vmatpush1.msra.mxu0 0.0
    %1339 = vmatprep.subr.mxu0 0.0
    %1340 = vmatpush1.msra.mxu0 0.0
    %1341 = vmatprep.subr.mxu0 0.0
    %1342 = vmatpush1.msra.mxu0 0.0
    %1343 = vmatprep.subr.mxu0 0.0
    %1344 = vmatpush1.msra.mxu0 0.0
    %1345 = vmatprep.subr.mxu0 0.0
    %1346 = vmatpush1.msra.mxu0 0.0
    %1347 = vmatprep.subr.mxu0 0.0
    %1348 = vmatpush1.msra.mxu0 0.0
    %1349 = vmatprep.subr.mxu0 0.0
    %1350 = vmatpush1.msra.mxu0 0.0
    %1351 = vmatprep.subr.mxu0 0.0
    %1352 = vmatpush1.msra.mxu0 0.0
    %1353 = vmatprep.subr.mxu0 0.0
    %1354 = vmatpush1.msra.mxu0 0.0
    %1355 = vmatprep.subr.mxu0 0.0
    %1356 = vmatpush1.msra.mxu0 0.0
    %1357 = vmatprep.subr.mxu0 0.0
    %1358 = vmatpush1.msra.mxu0 0.0
    %1359 = vmatprep.subr.mxu0 0.0
    %1360 = vmatpush1.msra.mxu0 0.0
    %1361 = vmatprep.subr.mxu0 0.0
    %1362 = vmatpush1.msra.mxu0 0.0
    %1363 = vmatprep.subr.mxu0 0.0
    %1364 = vmatpush1.msra.mxu0 0.0
    %1365 = vmatprep.subr.mxu0 0.0
    %1366 = vmatpush1.msra.mxu0 0.0
    %1367 = vmatprep.mubr.f32.mxu0 0.0
    %1368 = vmatmul.mubr.f32.gmra.mrb[0].mxu0 %v1298
    %v1369 = vpop.f32.mrb[0].mxu0
    %v1370 = vadd.f32 %v1287, %v1369
    %v1371 = vpop.f32.mrb[0].mxu0
    %1372 = vmatprep.mubr.f32.mxu0 0.0
    %1373 = vmatmul.mubr.f32.gmra.mrb[0].mxu0 %v1301
    %v1374 = vpop.f32.mrb[0].mxu0
    %v1375 = vadd.f32 %v1287, %v1374
    %v1376 = vpop.f32.mrb[0].mxu0
    %1377 = vdwg.mxu0
    %v1378 = vmax.f32 %v1370, 0.0
    %v1379 = vmax.f32 %v1375, 0.0
    %v1380 = vld [vmem:[#allocation47] sm:$0xff]
    %v1381 = vld [vmem:[#allocation47 + $0x8] sm:$0xff]
    %v1382 = vld [vmem:[#allocation47 + $0x10] sm:$0xff]
    %v1383 = vld [vmem:[#allocation47 + $0x18] sm:$0xff]
    %v1385 = vsel %vm932, %v1378, 0
    %v1388 = vsel %vm932, %v1379, 0
    %1390 = vmatprep.subr.mxu0 0.0
    %1391 = vmatpush1.msra.mxu0 %v1380
    %1392 = vmatprep.subr.mxu0 0.0
    %1393 = vmatpush1.msra.mxu0 %v1381
    %1394 = vmatprep.subr.mxu0 0.0
    %1395 = vmatpush1.msra.mxu0 %v1382
    %1396 = vmatprep.subr.mxu0 0.0
    %1397 = vmatpush1.msra.mxu0 %v1383
    %1398 = vmatprep.subr.mxu0 0.0
    %1399 = vmatpush1.msra.mxu0 0.0
    %1400 = vmatprep.subr.mxu0 0.0
    %1401 = vmatpush1.msra.mxu0 0.0
    %1402 = vmatprep.subr.mxu0 0.0
    %1403 = vmatpush1.msra.mxu0 0.0
    %1404 = vmatprep.subr.mxu0 0.0
    %1405 = vmatpush1.msra.mxu0 0.0
    %1406 = vmatprep.subr.mxu0 0.0
    %1407 = vmatpush1.msra.mxu0 0.0
    %1408 = vmatprep.subr.mxu0 0.0
    %1409 = vmatpush1.msra.mxu0 0.0
    %1410 = vmatprep.subr.mxu0 0.0
    %1411 = vmatpush1.msra.mxu0 0.0
    %1412 = vmatprep.subr.mxu0 0.0
    %1413 = vmatpush1.msra.mxu0 0.0
    %1414 = vmatprep.subr.mxu0 0.0
    %1415 = vmatpush1.msra.mxu0 0.0
    %1416 = vmatprep.subr.mxu0 0.0
    %1417 = vmatpush1.msra.mxu0 0.0
    %1418 = vmatprep.subr.mxu0 0.0
    %1419 = vmatpush1.msra.mxu0 0.0
    %1420 = vmatprep.subr.mxu0 0.0
    %1421 = vmatpush1.msra.mxu0 0.0
    %1422 = vmatprep.subr.mxu0 0.0
    %1423 = vmatpush1.msra.mxu0 0.0
    %1424 = vmatprep.subr.mxu0 0.0
    %1425 = vmatpush1.msra.mxu0 0.0
    %1426 = vmatprep.subr.mxu0 0.0
    %1427 = vmatpush1.msra.mxu0 0.0
    %1428 = vmatprep.subr.mxu0 0.0
    %1429 = vmatpush1.msra.mxu0 0.0
    %1430 = vmatprep.subr.mxu0 0.0
    %1431 = vmatpush1.msra.mxu0 0.0
    %1432 = vmatprep.subr.mxu0 0.0
    %1433 = vmatpush1.msra.mxu0 0.0
    %1434 = vmatprep.subr.mxu0 0.0
    %1435 = vmatpush1.msra.mxu0 0.0
    %1436 = vmatprep.subr.mxu0 0.0
    %1437 = vmatpush1.msra.mxu0 0.0
    %1438 = vmatprep.subr.mxu0 0.0
    %1439 = vmatpush1.msra.mxu0 0.0
    %1440 = vmatprep.subr.mxu0 0.0
    %1441 = vmatpush1.msra.mxu0 0.0
    %1442 = vmatprep.subr.mxu0 0.0
    %1443 = vmatpush1.msra.mxu0 0.0
    %1444 = vmatprep.subr.mxu0 0.0
    %1445 = vmatpush1.msra.mxu0 0.0
    %1446 = vmatprep.subr.mxu0 0.0
    %1447 = vmatpush1.msra.mxu0 0.0
    %1448 = vmatprep.subr.mxu0 0.0
    %1449 = vmatpush1.msra.mxu0 0.0
    %1450 = vmatprep.subr.mxu0 0.0
    %1451 = vmatpush1.msra.mxu0 0.0
    %1452 = vmatprep.subr.mxu0 0.0
    %1453 = vmatpush1.msra.mxu0 0.0
    %1454 = vmatprep.mubr.f32.mxu0 0.0
    %1455 = vmatmul.mubr.f32.gmra.mrb[0].mxu0 %v1385
    %v1456 = vpop.f32.mrb[0].mxu0
    %v1457 = vadd.f32 0.0, %v1456
    %v1458 = vpop.f32.mrb[0].mxu0
    %1459 = vmatprep.mubr.f32.mxu0 0.0
    %1460 = vmatmul.mubr.f32.gmra.mrb[0].mxu0 %v1388
    %v1461 = vpop.f32.mrb[0].mxu0
    %v1462 = vadd.f32 0.0, %v1461
    %v1463 = vpop.f32.mrb[0].mxu0
    %1464 = vdwg.mxu0
    %v1465 = vld [vmem:[#allocation44] sm:$0x1]
    %v1467 = vlaneseq
    %v1468 = vshrl.u32 %v1467, 7
    %v1469 = vsub.s32 0, %v1468
    %v1470 = vrot.slane %v1465, %v1469
    %1472 = vmatprep.subr.mxu0 0.0
    %1473 = vmatpush1.msra.mxu0 %v1457
    %1474 = vmatprep.subr.mxu0 0.0
    %1475 = vmatpush1.msra.mxu0 %v1462
    %1476 = vmatprep.subr.mxu0 0.0
    %1477 = vmatpush1.msra.mxu0 0.0
    %1478 = vmatprep.subr.mxu0 0.0
    %1479 = vmatpush1.msra.mxu0 0.0
    %1480 = vmatprep.subr.mxu0 0.0
    %1481 = vmatpush1.msra.mxu0 0.0
    %1482 = vmatprep.subr.mxu0 0.0
    %1483 = vmatpush1.msra.mxu0 0.0
    %1484 = vmatprep.subr.mxu0 0.0
    %1485 = vmatpush1.msra.mxu0 0.0
    %1486 = vmatprep.subr.mxu0 0.0
    %1487 = vmatpush1.msra.mxu0 0.0
    %1488 = vmatprep.subr.mxu0 0.0
    %1489 = vmatpush1.msra.mxu0 0.0
    %1490 = vmatprep.subr.mxu0 0.0
    %1491 = vmatpush1.msra.mxu0 0.0
    %1492 = vmatprep.subr.mxu0 0.0
    %1493 = vmatpush1.msra.mxu0 0.0
    %1494 = vmatprep.subr.mxu0 0.0
    %1495 = vmatpush1.msra.mxu0 0.0
    %1496 = vmatprep.subr.mxu0 0.0
    %1497 = vmatpush1.msra.mxu0 0.0
    %1498 = vmatprep.subr.mxu0 0.0
    %1499 = vmatpush1.msra.mxu0 0.0
    %1500 = vmatprep.subr.mxu0 0.0
    %1501 = vmatpush1.msra.mxu0 0.0
    %1502 = vmatprep.subr.mxu0 0.0
    %1503 = vmatpush1.msra.mxu0 0.0
    %1504 = vmatprep.subr.mxu0 0.0
    %1505 = vmatpush1.msra.mxu0 0.0
    %1506 = vmatprep.subr.mxu0 0.0
    %1507 = vmatpush1.msra.mxu0 0.0
    %1508 = vmatprep.subr.mxu0 0.0
    %1509 = vmatpush1.msra.mxu0 0.0
    %1510 = vmatprep.subr.mxu0 0.0
    %1511 = vmatpush1.msra.mxu0 0.0
    %1512 = vmatprep.subr.mxu0 0.0
    %1513 = vmatpush1.msra.mxu0 0.0
    %1514 = vmatprep.subr.mxu0 0.0
    %1515 = vmatpush1.msra.mxu0 0.0
    %1516 = vmatprep.subr.mxu0 0.0
    %1517 = vmatpush1.msra.mxu0 0.0
    %1518 = vmatprep.subr.mxu0 0.0
    %1519 = vmatpush1.msra.mxu0 0.0
    %1520 = vmatprep.subr.mxu0 0.0
    %1521 = vmatpush1.msra.mxu0 0.0
    %1522 = vmatprep.subr.mxu0 0.0
    %1523 = vmatpush1.msra.mxu0 0.0
    %1524 = vmatprep.subr.mxu0 0.0
    %1525 = vmatpush1.msra.mxu0 0.0
    %1526 = vmatprep.subr.mxu0 0.0
    %1527 = vmatpush1.msra.mxu0 0.0
    %1528 = vmatprep.subr.mxu0 0.0
    %1529 = vmatpush1.msra.mxu0 0.0
    %1530 = vmatprep.subr.mxu0 0.0
    %1531 = vmatpush1.msra.mxu0 0.0
    %1532 = vmatprep.subr.mxu0 0.0
    %1533 = vmatpush1.msra.mxu0 0.0
    %1534 = vmatprep.subr.mxu0 0.0
    %1535 = vmatpush1.msra.mxu0 0.0
    %1536 = vmatprep.mubr.f32.mxu0 0.0
    %1537 = vmatmul.mubr.f32.gmra.mrb[0].mxu0 %v1298
    %v1538 = vpop.f32.mrb[0].mxu0
    %v1539 = vadd.f32 %v1470, %v1538
    %v1540 = vpop.f32.mrb[0].mxu0
    %1541 = vmatprep.mubr.f32.mxu0 0.0
    %1542 = vmatmul.mubr.f32.gmra.mrb[0].mxu0 %v1301
    %v1543 = vpop.f32.mrb[0].mxu0
    %v1544 = vadd.f32 %v1470, %v1543
    %v1545 = vpop.f32.mrb[0].mxu0
    %1546 = vdwg.mxu0
    %v1547 = vmax.f32 %v1539, 0.0
    %v1548 = vmax.f32 %v1544, 0.0
    %v1549 = vld [vmem:[#allocation49] sm:$0x1]
    %v1551 = vlaneseq
    %v1552 = vshrl.u32 %v1551, 7
    %v1553 = vsub.s32 0, %v1552
    %v1554 = vrot.slane %v1549, %v1553
    %1556 = vrot.lane.b32.xlu0 %v1015, 64
    %v1557 = vpop.permute.xlu0 %1556
    %1558 = vrot.lane.b32.xlu0 %v1020, 64
    %v1559 = vpop.permute.xlu0 %1558
    %v1563 = vsel %vm810, %v886, 0
    %v1566 = vsel %vm810, %v887, 0
    %1568 = vmatprep.subr.mxu0 0.0
    %1569 = vmatpush1.msra.mxu0 %v1557
    %1570 = vmatprep.subr.mxu0 0.0
    %1571 = vmatpush1.msra.mxu0 %v1559
    %1572 = vmatprep.subr.mxu0 0.0
    %1573 = vmatpush1.msra.mxu0 0.0
    %1574 = vmatprep.subr.mxu0 0.0
    %1575 = vmatpush1.msra.mxu0 0.0
    %1576 = vmatprep.subr.mxu0 0.0
    %1577 = vmatpush1.msra.mxu0 0.0
    %1578 = vmatprep.subr.mxu0 0.0
    %1579 = vmatpush1.msra.mxu0 0.0
    %1580 = vmatprep.subr.mxu0 0.0
    %1581 = vmatpush1.msra.mxu0 0.0
    %1582 = vmatprep.subr.mxu0 0.0
    %1583 = vmatpush1.msra.mxu0 0.0
    %1584 = vmatprep.subr.mxu0 0.0
    %1585 = vmatpush1.msra.mxu0 0.0
    %1586 = vmatprep.subr.mxu0 0.0
    %1587 = vmatpush1.msra.mxu0 0.0
    %1588 = vmatprep.subr.mxu0 0.0
    %1589 = vmatpush1.msra.mxu0 0.0
    %1590 = vmatprep.subr.mxu0 0.0
    %1591 = vmatpush1.msra.mxu0 0.0
    %1592 = vmatprep.subr.mxu0 0.0
    %1593 = vmatpush1.msra.mxu0 0.0
    %1594 = vmatprep.subr.mxu0 0.0
    %1595 = vmatpush1.msra.mxu0 0.0
    %1596 = vmatprep.subr.mxu0 0.0
    %1597 = vmatpush1.msra.mxu0 0.0
    %1598 = vmatprep.subr.mxu0 0.0
    %1599 = vmatpush1.msra.mxu0 0.0
    %1600 = vmatprep.subr.mxu0 0.0
    %1601 = vmatpush1.msra.mxu0 0.0
    %1602 = vmatprep.subr.mxu0 0.0
    %1603 = vmatpush1.msra.mxu0 0.0
    %1604 = vmatprep.subr.mxu0 0.0
    %1605 = vmatpush1.msra.mxu0 0.0
    %1606 = vmatprep.subr.mxu0 0.0
    %1607 = vmatpush1.msra.mxu0 0.0
    %1608 = vmatprep.subr.mxu0 0.0
    %1609 = vmatpush1.msra.mxu0 0.0
    %1610 = vmatprep.subr.mxu0 0.0
    %1611 = vmatpush1.msra.mxu0 0.0
    %1612 = vmatprep.subr.mxu0 0.0
    %1613 = vmatpush1.msra.mxu0 0.0
    %1614 = vmatprep.subr.mxu0 0.0
    %1615 = vmatpush1.msra.mxu0 0.0
    %1616 = vmatprep.subr.mxu0 0.0
    %1617 = vmatpush1.msra.mxu0 0.0
    %1618 = vmatprep.subr.mxu0 0.0
    %1619 = vmatpush1.msra.mxu0 0.0
    %1620 = vmatprep.subr.mxu0 0.0
    %1621 = vmatpush1.msra.mxu0 0.0
    %1622 = vmatprep.subr.mxu0 0.0
    %1623 = vmatpush1.msra.mxu0 0.0
    %1624 = vmatprep.subr.mxu0 0.0
    %1625 = vmatpush1.msra.mxu0 0.0
    %1626 = vmatprep.subr.mxu0 0.0
    %1627 = vmatpush1.msra.mxu0 0.0
    %1628 = vmatprep.subr.mxu0 0.0
    %1629 = vmatpush1.msra.mxu0 0.0
    %1630 = vmatprep.subr.mxu0 0.0
    %1631 = vmatpush1.msra.mxu0 0.0
    %1632 = vmatprep.mubr.f32.mxu0 0.0
    %1633 = vmatmul.mubr.f32.gmra.mrb[0].mxu0 %v1563
    %v1634 = vpop.f32.mrb[0].mxu0
    %v1635 = vadd.f32 %v1554, %v1634
    %v1636 = vpop.f32.mrb[0].mxu0
    %1637 = vmatprep.mubr.f32.mxu0 0.0
    %1638 = vmatmul.mubr.f32.gmra.mrb[0].mxu0 %v1566
    %v1639 = vpop.f32.mrb[0].mxu0
    %v1640 = vadd.f32 %v1554, %v1639
    %v1641 = vpop.f32.mrb[0].mxu0
    %1642 = vdwg.mxu0
    %v1643 = vmax.f32 %v1635, 0.0
    %v1644 = vmax.f32 %v1640, 0.0
    %v1645 = vld [vmem:[#allocation53] sm:$0xff]
    %v1646 = vld [vmem:[#allocation53 + $0x8] sm:$0xff]
    %v1647 = vld [vmem:[#allocation53 + $0x10] sm:$0xff]
    %v1648 = vld [vmem:[#allocation53 + $0x18] sm:$0xff]
    %v1650 = vsel %vm932, %v1643, 0
    %v1653 = vsel %vm932, %v1644, 0
    %1655 = vmatprep.subr.mxu0 0.0
    %1656 = vmatpush1.msra.mxu0 %v1645
    %1657 = vmatprep.subr.mxu0 0.0
    %1658 = vmatpush1.msra.mxu0 %v1646
    %1659 = vmatprep.subr.mxu0 0.0
    %1660 = vmatpush1.msra.mxu0 %v1647
    %1661 = vmatprep.subr.mxu0 0.0
    %1662 = vmatpush1.msra.mxu0 %v1648
    %1663 = vmatprep.subr.mxu0 0.0
    %1664 = vmatpush1.msra.mxu0 0.0
    %1665 = vmatprep.subr.mxu0 0.0
    %1666 = vmatpush1.msra.mxu0 0.0
    %1667 = vmatprep.subr.mxu0 0.0
    %1668 = vmatpush1.msra.mxu0 0.0
    %1669 = vmatprep.subr.mxu0 0.0
    %1670 = vmatpush1.msra.mxu0 0.0
    %1671 = vmatprep.subr.mxu0 0.0
    %1672 = vmatpush1.msra.mxu0 0.0
    %1673 = vmatprep.subr.mxu0 0.0
    %1674 = vmatpush1.msra.mxu0 0.0
    %1675 = vmatprep.subr.mxu0 0.0
    %1676 = vmatpush1.msra.mxu0 0.0
    %1677 = vmatprep.subr.mxu0 0.0
    %1678 = vmatpush1.msra.mxu0 0.0
    %1679 = vmatprep.subr.mxu0 0.0
    %1680 = vmatpush1.msra.mxu0 0.0
    %1681 = vmatprep.subr.mxu0 0.0
    %1682 = vmatpush1.msra.mxu0 0.0
    %1683 = vmatprep.subr.mxu0 0.0
    %1684 = vmatpush1.msra.mxu0 0.0
    %1685 = vmatprep.subr.mxu0 0.0
    %1686 = vmatpush1.msra.mxu0 0.0
    %1687 = vmatprep.subr.mxu0 0.0
    %1688 = vmatpush1.msra.mxu0 0.0
    %1689 = vmatprep.subr.mxu0 0.0
    %1690 = vmatpush1.msra.mxu0 0.0
    %1691 = vmatprep.subr.mxu0 0.0
    %1692 = vmatpush1.msra.mxu0 0.0
    %1693 = vmatprep.subr.mxu0 0.0
    %1694 = vmatpush1.msra.mxu0 0.0
    %1695 = vmatprep.subr.mxu0 0.0
    %1696 = vmatpush1.msra.mxu0 0.0
    %1697 = vmatprep.subr.mxu0 0.0
    %1698 = vmatpush1.msra.mxu0 0.0
    %1699 = vmatprep.subr.mxu0 0.0
    %1700 = vmatpush1.msra.mxu0 0.0
    %1701 = vmatprep.subr.mxu0 0.0
    %1702 = vmatpush1.msra.mxu0 0.0
    %1703 = vmatprep.subr.mxu0 0.0
    %1704 = vmatpush1.msra.mxu0 0.0
    %1705 = vmatprep.subr.mxu0 0.0
    %1706 = vmatpush1.msra.mxu0 0.0
    %1707 = vmatprep.subr.mxu0 0.0
    %1708 = vmatpush1.msra.mxu0 0.0
    %1709 = vmatprep.subr.mxu0 0.0
    %1710 = vmatpush1.msra.mxu0 0.0
    %1711 = vmatprep.subr.mxu0 0.0
    %1712 = vmatpush1.msra.mxu0 0.0
    %1713 = vmatprep.subr.mxu0 0.0
    %1714 = vmatpush1.msra.mxu0 0.0
    %1715 = vmatprep.subr.mxu0 0.0
    %1716 = vmatpush1.msra.mxu0 0.0
    %1717 = vmatprep.subr.mxu0 0.0
    %1718 = vmatpush1.msra.mxu0 0.0
    %1719 = vmatprep.mubr.f32.mxu0 0.0
    %1720 = vmatmul.mubr.f32.gmra.mrb[0].mxu0 %v1650
    %v1721 = vpop.f32.mrb[0].mxu0
    %v1722 = vadd.f32 0.0, %v1721
    %v1723 = vpop.f32.mrb[0].mxu0
    %1724 = vmatprep.mubr.f32.mxu0 0.0
    %1725 = vmatmul.mubr.f32.gmra.mrb[0].mxu0 %v1653
    %v1726 = vpop.f32.mrb[0].mxu0
    %v1727 = vadd.f32 0.0, %v1726
    %v1728 = vpop.f32.mrb[0].mxu0
    %1729 = vdwg.mxu0
    %v1730 = vld [vmem:[#allocation50] sm:$0x1]
    %v1732 = vlaneseq
    %v1733 = vshrl.u32 %v1732, 7
    %v1734 = vsub.s32 0, %v1733
    %v1735 = vrot.slane %v1730, %v1734
    %1737 = vmatprep.subr.mxu0 0.0
    %1738 = vmatpush1.msra.mxu0 %v1722
    %1739 = vmatprep.subr.mxu0 0.0
    %1740 = vmatpush1.msra.mxu0 %v1727
    %1741 = vmatprep.subr.mxu0 0.0
    %1742 = vmatpush1.msra.mxu0 0.0
    %1743 = vmatprep.subr.mxu0 0.0
    %1744 = vmatpush1.msra.mxu0 0.0
    %1745 = vmatprep.subr.mxu0 0.0
    %1746 = vmatpush1.msra.mxu0 0.0
    %1747 = vmatprep.subr.mxu0 0.0
    %1748 = vmatpush1.msra.mxu0 0.0
    %1749 = vmatprep.subr.mxu0 0.0
    %1750 = vmatpush1.msra.mxu0 0.0
    %1751 = vmatprep.subr.mxu0 0.0
    %1752 = vmatpush1.msra.mxu0 0.0
    %1753 = vmatprep.subr.mxu0 0.0
    %1754 = vmatpush1.msra.mxu0 0.0
    %1755 = vmatprep.subr.mxu0 0.0
    %1756 = vmatpush1.msra.mxu0 0.0
    %1757 = vmatprep.subr.mxu0 0.0
    %1758 = vmatpush1.msra.mxu0 0.0
    %1759 = vmatprep.subr.mxu0 0.0
    %1760 = vmatpush1.msra.mxu0 0.0
    %1761 = vmatprep.subr.mxu0 0.0
    %1762 = vmatpush1.msra.mxu0 0.0
    %1763 = vmatprep.subr.mxu0 0.0
    %1764 = vmatpush1.msra.mxu0 0.0
    %1765 = vmatprep.subr.mxu0 0.0
    %1766 = vmatpush1.msra.mxu0 0.0
    %1767 = vmatprep.subr.mxu0 0.0
    %1768 = vmatpush1.msra.mxu0 0.0
    %1769 = vmatprep.subr.mxu0 0.0
    %1770 = vmatpush1.msra.mxu0 0.0
    %1771 = vmatprep.subr.mxu0 0.0
    %1772 = vmatpush1.msra.mxu0 0.0
    %1773 = vmatprep.subr.mxu0 0.0
    %1774 = vmatpush1.msra.mxu0 0.0
    %1775 = vmatprep.subr.mxu0 0.0
    %1776 = vmatpush1.msra.mxu0 0.0
    %1777 = vmatprep.subr.mxu0 0.0
    %1778 = vmatpush1.msra.mxu0 0.0
    %1779 = vmatprep.subr.mxu0 0.0
    %1780 = vmatpush1.msra.mxu0 0.0
    %1781 = vmatprep.subr.mxu0 0.0
    %1782 = vmatpush1.msra.mxu0 0.0
    %1783 = vmatprep.subr.mxu0 0.0
    %1784 = vmatpush1.msra.mxu0 0.0
    %1785 = vmatprep.subr.mxu0 0.0
    %1786 = vmatpush1.msra.mxu0 0.0
    %1787 = vmatprep.subr.mxu0 0.0
    %1788 = vmatpush1.msra.mxu0 0.0
    %1789 = vmatprep.subr.mxu0 0.0
    %1790 = vmatpush1.msra.mxu0 0.0
    %1791 = vmatprep.subr.mxu0 0.0
    %1792 = vmatpush1.msra.mxu0 0.0
    %1793 = vmatprep.subr.mxu0 0.0
    %1794 = vmatpush1.msra.mxu0 0.0
    %1795 = vmatprep.subr.mxu0 0.0
    %1796 = vmatpush1.msra.mxu0 0.0
    %1797 = vmatprep.subr.mxu0 0.0
    %1798 = vmatpush1.msra.mxu0 0.0
    %1799 = vmatprep.subr.mxu0 0.0
    %1800 = vmatpush1.msra.mxu0 0.0
    %1801 = vmatprep.mubr.f32.mxu0 0.0
    %1802 = vmatmul.mubr.f32.gmra.mrb[0].mxu0 %v1563
    %v1803 = vpop.f32.mrb[0].mxu0
    %v1804 = vadd.f32 %v1735, %v1803
    %v1805 = vpop.f32.mrb[0].mxu0
    %1806 = vmatprep.mubr.f32.mxu0 0.0
    %1807 = vmatmul.mubr.f32.gmra.mrb[0].mxu0 %v1566
    %v1808 = vpop.f32.mrb[0].mxu0
    %v1809 = vadd.f32 %v1735, %v1808
    %v1810 = vpop.f32.mrb[0].mxu0
    %1811 = vdwg.mxu0
    %v1812 = vmax.f32 %v1804, 0.0
    %v1813 = vmax.f32 %v1809, 0.0
    %v1814 = vld [vmem:[#allocation65] sm:$0xff]
    %v1815 = vld [vmem:[#allocation65 + $0x8] sm:$0xff]
    %v1816 = vld [vmem:[#allocation65 + $0x10] sm:$0xff]
    %v1817 = vld [vmem:[#allocation65 + $0x18] sm:$0xff]
    %v1818 = vld [vmem:[#allocation65 + $0x20] sm:$0xff]
    %v1819 = vld [vmem:[#allocation65 + $0x28] sm:$0xff]
    %v1820 = vld [vmem:[#allocation65 + $0x30] sm:$0xff]
    %v1821 = vld [vmem:[#allocation65 + $0x38] sm:$0xff]
    %v1822 = vld [vmem:[#allocation61] sm:$0x3]
    %v1824 = vlaneseq
    %v1825 = vshrl.u32 %v1824, 7
    %v1826 = vsub.s32 0, %v1825
    %v1827 = vrot.slane %v1822, %v1826
    %v1828 = vlaneseq
    %v1829 = vshrl.u32 %v1828, 7
    %v1830 = vsub.s32 1, %v1829
    %v1831 = vrot.slane %v1822, %v1830
    %v1835 = vsel %vm932, %v1280, 0
    %v1838 = vsel %vm932, %v1281, 0
    %v1841 = vsel %vm932, %v1547, 0
    %v1844 = vsel %vm932, %v1548, 0
    %v1847 = vsel %vm932, %v1812, 0
    %v1850 = vsel %vm932, %v1813, 0
    %1852 = vmatprep.subr.mxu0 %v1815
    %1853 = vmatpush1.msra.mxu0 %v1814
    %1854 = vmatprep.subr.mxu0 %v1817
    %1855 = vmatpush1.msra.mxu0 %v1816
    %1856 = vmatprep.subr.mxu0 %v1819
    %1857 = vmatpush1.msra.mxu0 %v1818
    %1858 = vmatprep.subr.mxu0 %v1821
    %1859 = vmatpush1.msra.mxu0 %v1820
    %1860 = vmatprep.subr.mxu0 0.0
    %1861 = vmatpush1.msra.mxu0 0.0
    %1862 = vmatprep.subr.mxu0 0.0
    %1863 = vmatpush1.msra.mxu0 0.0
    %1864 = vmatprep.subr.mxu0 0.0
    %1865 = vmatpush1.msra.mxu0 0.0
    %1866 = vmatprep.subr.mxu0 0.0
    %1867 = vmatpush1.msra.mxu0 0.0
    %1868 = vmatprep.subr.mxu0 0.0
    %1869 = vmatpush1.msra.mxu0 0.0
    %1870 = vmatprep.subr.mxu0 0.0
    %1871 = vmatpush1.msra.mxu0 0.0
    %1872 = vmatprep.subr.mxu0 0.0
    %1873 = vmatpush1.msra.mxu0 0.0
    %1874 = vmatprep.subr.mxu0 0.0
    %1875 = vmatpush1.msra.mxu0 0.0
    %1876 = vmatprep.subr.mxu0 0.0
    %1877 = vmatpush1.msra.mxu0 0.0
    %1878 = vmatprep.subr.mxu0 0.0
    %1879 = vmatpush1.msra.mxu0 0.0
    %1880 = vmatprep.subr.mxu0 0.0
    %1881 = vmatpush1.msra.mxu0 0.0
    %1882 = vmatprep.subr.mxu0 0.0
    %1883 = vmatpush1.msra.mxu0 0.0
    %1884 = vmatprep.subr.mxu0 0.0
    %1885 = vmatpush1.msra.mxu0 0.0
    %1886 = vmatprep.subr.mxu0 0.0
    %1887 = vmatpush1.msra.mxu0 0.0
    %1888 = vmatprep.subr.mxu0 0.0
    %1889 = vmatpush1.msra.mxu0 0.0
    %1890 = vmatprep.subr.mxu0 0.0
    %1891 = vmatpush1.msra.mxu0 0.0
    %1892 = vmatprep.subr.mxu0 0.0
    %1893 = vmatpush1.msra.mxu0 0.0
    %1894 = vmatprep.subr.mxu0 0.0
    %1895 = vmatpush1.msra.mxu0 0.0
    %1896 = vmatprep.subr.mxu0 0.0
    %1897 = vmatpush1.msra.mxu0 0.0
    %1898 = vmatprep.subr.mxu0 0.0
    %1899 = vmatpush1.msra.mxu0 0.0
    %1900 = vmatprep.subr.mxu0 0.0
    %1901 = vmatpush1.msra.mxu0 0.0
    %1902 = vmatprep.subr.mxu0 0.0
    %1903 = vmatpush1.msra.mxu0 0.0
    %1904 = vmatprep.subr.mxu0 0.0
    %1905 = vmatpush1.msra.mxu0 0.0
    %1906 = vmatprep.subr.mxu0 0.0
    %1907 = vmatpush1.msra.mxu0 0.0
    %1908 = vmatprep.subr.mxu0 0.0
    %1909 = vmatpush1.msra.mxu0 0.0
    %1910 = vmatprep.subr.mxu0 0.0
    %1911 = vmatpush1.msra.mxu0 0.0
    %1912 = vmatprep.subr.mxu0 0.0
    %1913 = vmatpush1.msra.mxu0 0.0
    %1914 = vmatprep.subr.mxu0 0.0
    %1915 = vmatpush1.msra.mxu0 0.0
    %1916 = vmatprep.mubr.f32.mxu0 0.0
    %1917 = vmatmul.mubr.f32.gmra.mrb[0].mxu0 %v1835
    %v1918 = vpop.f32.mrb[0].mxu0
    %v1919 = vadd.f32 %v1827, %v1918
    %v1920 = vpop.f32.mrb[0].mxu0
    %v1921 = vadd.f32 %v1831, %v1920
    %1922 = vmatprep.mubr.f32.mxu0 0.0
    %1923 = vmatmul.mubr.f32.gmra.mrb[0].mxu0 %v1838
    %v1924 = vpop.f32.mrb[0].mxu0
    %v1925 = vadd.f32 %v1827, %v1924
    %v1926 = vpop.f32.mrb[0].mxu0
    %v1927 = vadd.f32 %v1831, %v1926
    %1928 = vmatprep.mubr.f32.mxu0 0.0
    %1929 = vmatmul.mubr.f32.gmra.mrb[0].mxu0 %v1841
    %v1930 = vpop.f32.mrb[0].mxu0
    %v1931 = vadd.f32 %v1827, %v1930
    %v1932 = vpop.f32.mrb[0].mxu0
    %v1933 = vadd.f32 %v1831, %v1932
    %1934 = vmatprep.mubr.f32.mxu0 0.0
    %1935 = vmatmul.mubr.f32.gmra.mrb[0].mxu0 %v1844
    %v1936 = vpop.f32.mrb[0].mxu0
    %v1937 = vadd.f32 %v1827, %v1936
    %v1938 = vpop.f32.mrb[0].mxu0
    %v1939 = vadd.f32 %v1831, %v1938
    %1940 = vmatprep.mubr.f32.mxu0 0.0
    %1941 = vmatmul.mubr.f32.gmra.mrb[0].mxu0 %v1847
    %v1942 = vpop.f32.mrb[0].mxu0
    %v1943 = vadd.f32 %v1827, %v1942
    %v1944 = vpop.f32.mrb[0].mxu0
    %v1945 = vadd.f32 %v1831, %v1944
    %1946 = vmatprep.mubr.f32.mxu0 0.0
    %1947 = vmatmul.mubr.f32.gmra.mrb[0].mxu0 %v1850
    %v1948 = vpop.f32.mrb[0].mxu0
    %v1949 = vadd.f32 %v1827, %v1948
    %v1950 = vpop.f32.mrb[0].mxu0
    %v1951 = vadd.f32 %v1831, %v1950
    %1952 = vdwg.mxu0
    %v1953 = vmax.f32 %v1919, 0.0
    %v1954 = vmax.f32 %v1921, 0.0
    %v1955 = vmax.f32 %v1925, 0.0
    %v1956 = vmax.f32 %v1927, 0.0
    %v1957 = vmax.f32 %v1931, 0.0
    %v1958 = vmax.f32 %v1933, 0.0
    %v1959 = vmax.f32 %v1937, 0.0
    %v1960 = vmax.f32 %v1939, 0.0
    %v1961 = vmax.f32 %v1943, 0.0
    %v1962 = vmax.f32 %v1945, 0.0
    %v1963 = vmax.f32 %v1949, 0.0
    %v1964 = vmax.f32 %v1951, 0.0
    %v1965 = vld [vmem:[#allocation67] sm:$0xff]
    %v1966 = vld [vmem:[#allocation67 + $0x8] sm:$0xff]
    %v1967 = vld [vmem:[#allocation67 + $0x10] sm:$0xff]
    %v1968 = vld [vmem:[#allocation67 + $0x18] sm:$0xff]
    %v1969 = vld [vmem:[#allocation67 + $0x20] sm:$0xff]
    %v1970 = vld [vmem:[#allocation67 + $0x28] sm:$0xff]
    %v1971 = vld [vmem:[#allocation67 + $0x30] sm:$0xff]
    %v1972 = vld [vmem:[#allocation67 + $0x38] sm:$0xff]
    %v1973 = vld [vmem:[#allocation67 + $0x40] sm:$0xff]
    %v1974 = vld [vmem:[#allocation67 + $0x48] sm:$0xff]
    %v1975 = vld [vmem:[#allocation67 + $0x50] sm:$0xff]
    %v1976 = vld [vmem:[#allocation67 + $0x58] sm:$0xff]
    %v1977 = vld [vmem:[#allocation67 + $0x60] sm:$0xff]
    %v1978 = vld [vmem:[#allocation67 + $0x68] sm:$0xff]
    %v1979 = vld [vmem:[#allocation67 + $0x70] sm:$0xff]
    %v1980 = vld [vmem:[#allocation67 + $0x78] sm:$0xff]
    %v1981 = vld [vmem:[#allocation67 + $0x80] sm:$0xff]
    %v1982 = vld [vmem:[#allocation67 + $0x88] sm:$0xff]
    %v1983 = vld [vmem:[#allocation67 + $0x90] sm:$0xff]
    %v1984 = vld [vmem:[#allocation67 + $0x98] sm:$0xff]
    %v1985 = vld [vmem:[#allocation67 + $0xa0] sm:$0xff]
    %v1986 = vld [vmem:[#allocation67 + $0xa8] sm:$0xff]
    %v1987 = vld [vmem:[#allocation67 + $0xb0] sm:$0xff]
    %v1988 = vld [vmem:[#allocation67 + $0xb8] sm:$0xff]
    %v1989 = vld [vmem:[#allocation67 + $0xc0] sm:$0xff]
    %v1990 = vld [vmem:[#allocation67 + $0xc8] sm:$0xff]
    %v1991 = vld [vmem:[#allocation67 + $0xd0] sm:$0xff]
    %v1992 = vld [vmem:[#allocation67 + $0xd8] sm:$0xff]
    %v1993 = vld [vmem:[#allocation67 + $0xe0] sm:$0xff]
    %v1994 = vld [vmem:[#allocation67 + $0xe8] sm:$0xff]
    %v1995 = vld [vmem:[#allocation67 + $0xf0] sm:$0xff]
    %v1996 = vld [vmem:[#allocation67 + $0xf8] sm:$0xff]
    %v1997 = vld [vmem:[#allocation62] sm:$0x1]
    %v1999 = vlaneseq
    %v2000 = vshrl.u32 %v1999, 7
    %v2001 = vsub.s32 0, %v2000
    %v2002 = vrot.slane %v1997, %v2001
    %2004 = vmatprep.subr.mxu0 0.0
    %2005 = vmatpush1.msra.mxu0 %v1965
    %2006 = vmatprep.subr.mxu0 0.0
    %2007 = vmatpush1.msra.mxu0 %v1966
    %2008 = vmatprep.subr.mxu0 0.0
    %2009 = vmatpush1.msra.mxu0 %v1967
    %2010 = vmatprep.subr.mxu0 0.0
    %2011 = vmatpush1.msra.mxu0 %v1968
    %2012 = vmatprep.subr.mxu0 0.0
    %2013 = vmatpush1.msra.mxu0 %v1969
    %2014 = vmatprep.subr.mxu0 0.0
    %2015 = vmatpush1.msra.mxu0 %v1970
    %2016 = vmatprep.subr.mxu0 0.0
    %2017 = vmatpush1.msra.mxu0 %v1971
    %2018 = vmatprep.subr.mxu0 0.0
    %2019 = vmatpush1.msra.mxu0 %v1972
    %2020 = vmatprep.subr.mxu0 0.0
    %2021 = vmatpush1.msra.mxu0 %v1973
    %2022 = vmatprep.subr.mxu0 0.0
    %2023 = vmatpush1.msra.mxu0 %v1974
    %2024 = vmatprep.subr.mxu0 0.0
    %2025 = vmatpush1.msra.mxu0 %v1975
    %2026 = vmatprep.subr.mxu0 0.0
    %2027 = vmatpush1.msra.mxu0 %v1976
    %2028 = vmatprep.subr.mxu0 0.0
    %2029 = vmatpush1.msra.mxu0 %v1977
    %2030 = vmatprep.subr.mxu0 0.0
    %2031 = vmatpush1.msra.mxu0 %v1978
    %2032 = vmatprep.subr.mxu0 0.0
    %2033 = vmatpush1.msra.mxu0 %v1979
    %2034 = vmatprep.subr.mxu0 0.0
    %2035 = vmatpush1.msra.mxu0 %v1980
    %2036 = vmatprep.subr.mxu0 0.0
    %2037 = vmatpush1.msra.mxu0 %v1981
    %2038 = vmatprep.subr.mxu0 0.0
    %2039 = vmatpush1.msra.mxu0 %v1982
    %2040 = vmatprep.subr.mxu0 0.0
    %2041 = vmatpush1.msra.mxu0 %v1983
    %2042 = vmatprep.subr.mxu0 0.0
    %2043 = vmatpush1.msra.mxu0 %v1984
    %2044 = vmatprep.subr.mxu0 0.0
    %2045 = vmatpush1.msra.mxu0 %v1985
    %2046 = vmatprep.subr.mxu0 0.0
    %2047 = vmatpush1.msra.mxu0 %v1986
    %2048 = vmatprep.subr.mxu0 0.0
    %2049 = vmatpush1.msra.mxu0 %v1987
    %2050 = vmatprep.subr.mxu0 0.0
    %2051 = vmatpush1.msra.mxu0 %v1988
    %2052 = vmatprep.subr.mxu0 0.0
    %2053 = vmatpush1.msra.mxu0 %v1989
    %2054 = vmatprep.subr.mxu0 0.0
    %2055 = vmatpush1.msra.mxu0 %v1990
    %2056 = vmatprep.subr.mxu0 0.0
    %2057 = vmatpush1.msra.mxu0 %v1991
    %2058 = vmatprep.subr.mxu0 0.0
    %2059 = vmatpush1.msra.mxu0 %v1992
    %2060 = vmatprep.subr.mxu0 0.0
    %2061 = vmatpush1.msra.mxu0 %v1993
    %2062 = vmatprep.subr.mxu0 0.0
    %2063 = vmatpush1.msra.mxu0 %v1994
    %2064 = vmatprep.subr.mxu0 0.0
    %2065 = vmatpush1.msra.mxu0 %v1995
    %2066 = vmatprep.subr.mxu0 0.0
    %2067 = vmatpush1.msra.mxu0 %v1996
    %2068 = vmatprep.mubr.f32.mxu0 %v1954
    %2069 = vmatmul.mubr.f32.gmra.mrb[0].mxu0 %v1953
    %v2070 = vpop.f32.mrb[0].mxu0
    %v2071 = vadd.f32 %v2002, %v2070
    %v2072 = vpop.f32.mrb[0].mxu0
    %2073 = vmatprep.mubr.f32.mxu0 %v1956
    %2074 = vmatmul.mubr.f32.gmra.mrb[0].mxu0 %v1955
    %v2075 = vpop.f32.mrb[0].mxu0
    %v2076 = vadd.f32 %v2002, %v2075
    %v2077 = vpop.f32.mrb[0].mxu0
    %2078 = vmatprep.mubr.f32.mxu0 %v1958
    %2079 = vmatmul.mubr.f32.gmra.mrb[0].mxu0 %v1957
    %v2080 = vpop.f32.mrb[0].mxu0
    %v2081 = vadd.f32 %v2002, %v2080
    %v2082 = vpop.f32.mrb[0].mxu0
    %2083 = vmatprep.mubr.f32.mxu0 %v1960
    %2084 = vmatmul.mubr.f32.gmra.mrb[0].mxu0 %v1959
    %v2085 = vpop.f32.mrb[0].mxu0
    %v2086 = vadd.f32 %v2002, %v2085
    %v2087 = vpop.f32.mrb[0].mxu0
    %2088 = vmatprep.mubr.f32.mxu0 %v1962
    %2089 = vmatmul.mubr.f32.gmra.mrb[0].mxu0 %v1961
    %v2090 = vpop.f32.mrb[0].mxu0
    %v2091 = vadd.f32 %v2002, %v2090
    %v2092 = vpop.f32.mrb[0].mxu0
    %2093 = vmatprep.mubr.f32.mxu0 %v1964
    %2094 = vmatmul.mubr.f32.gmra.mrb[0].mxu0 %v1963
    %v2095 = vpop.f32.mrb[0].mxu0
    %v2096 = vadd.f32 %v2002, %v2095
    %v2097 = vpop.f32.mrb[0].mxu0
    %2098 = vdwg.mxu0
    %v2099 = vmax.f32 %v2071, 0.0
    %v2100 = vmax.f32 %v2076, 0.0
    %v2101 = vmax.f32 %v2081, 0.0
    %v2102 = vmax.f32 %v2086, 0.0
    %v2103 = vmax.f32 %v2091, 0.0
    %v2104 = vmax.f32 %v2096, 0.0
    %v2105 = vld [vmem:[%s109] sm:$0xff]
    %v2106 = vld [vmem:[%s109 + $0x8] sm:$0xff]
    %v2107 = vld [vmem:[%s109 + $0x10] sm:$0xff]
    %v2108 = vld [vmem:[%s109 + $0x18] sm:$0xff]
    %v2109 = vld [vmem:[%s109 + $0x20] sm:$0xff]
    %v2110 = vld [vmem:[%s109 + $0x28] sm:$0xff]
    %v2111 = vld [vmem:[%s109 + $0x30] sm:$0xff]
    %v2112 = vld [vmem:[%s109 + $0x38] sm:$0xff]
    %v2113 = vld [vmem:[%s109 + $0x40] sm:$0xff]
    %v2114 = vld [vmem:[%s109 + $0x48] sm:$0xff]
    %v2115 = vld [vmem:[%s109 + $0x50] sm:$0xff]
    %v2116 = vld [vmem:[%s109 + $0x58] sm:$0xff]
    %v2117 = vld [vmem:[%s109 + $0x60] sm:$0xff]
    %v2118 = vld [vmem:[%s109 + $0x68] sm:$0xff]
    %v2119 = vld [vmem:[%s109 + $0x70] sm:$0xff]
    %v2120 = vld [vmem:[%s109 + $0x78] sm:$0xff]
    %v2121 = vld [vmem:[#allocation64] sm:$0x1]
    %v2123 = vlaneseq
    %v2124 = vshrl.u32 %v2123, 7
    %v2125 = vsub.s32 0, %v2124
    %v2126 = vrot.slane %v2121, %v2125
    %2128 = vmatprep.subr.mxu0 0.0
    %2129 = vmatpush1.msra.mxu0 %v2105
    %2130 = vmatprep.subr.mxu0 0.0
    %2131 = vmatpush1.msra.mxu0 %v2106
    %2132 = vmatprep.subr.mxu0 0.0
    %2133 = vmatpush1.msra.mxu0 %v2107
    %2134 = vmatprep.subr.mxu0 0.0
    %2135 = vmatpush1.msra.mxu0 %v2108
    %2136 = vmatprep.subr.mxu0 0.0
    %2137 = vmatpush1.msra.mxu0 %v2109
    %2138 = vmatprep.subr.mxu0 0.0
    %2139 = vmatpush1.msra.mxu0 %v2110
    %2140 = vmatprep.subr.mxu0 0.0
    %2141 = vmatpush1.msra.mxu0 %v2111
    %2142 = vmatprep.subr.mxu0 0.0
    %2143 = vmatpush1.msra.mxu0 %v2112
    %2144 = vmatprep.subr.mxu0 0.0
    %2145 = vmatpush1.msra.mxu0 %v2113
    %2146 = vmatprep.subr.mxu0 0.0
    %2147 = vmatpush1.msra.mxu0 %v2114
    %2148 = vmatprep.subr.mxu0 0.0
    %2149 = vmatpush1.msra.mxu0 %v2115
    %2150 = vmatprep.subr.mxu0 0.0
    %2151 = vmatpush1.msra.mxu0 %v2116
    %2152 = vmatprep.subr.mxu0 0.0
    %2153 = vmatpush1.msra.mxu0 %v2117
    %2154 = vmatprep.subr.mxu0 0.0
    %2155 = vmatpush1.msra.mxu0 %v2118
    %2156 = vmatprep.subr.mxu0 0.0
    %2157 = vmatpush1.msra.mxu0 %v2119
    %2158 = vmatprep.subr.mxu0 0.0
    %2159 = vmatpush1.msra.mxu0 %v2120
    %2160 = vmatprep.subr.mxu0 0.0
    %2161 = vmatpush1.msra.mxu0 0.0
    %2162 = vmatprep.subr.mxu0 0.0
    %2163 = vmatpush1.msra.mxu0 0.0
    %2164 = vmatprep.subr.mxu0 0.0
    %2165 = vmatpush1.msra.mxu0 0.0
    %2166 = vmatprep.subr.mxu0 0.0
    %2167 = vmatpush1.msra.mxu0 0.0
    %2168 = vmatprep.subr.mxu0 0.0
    %2169 = vmatpush1.msra.mxu0 0.0
    %2170 = vmatprep.subr.mxu0 0.0
    %2171 = vmatpush1.msra.mxu0 0.0
    %2172 = vmatprep.subr.mxu0 0.0
    %2173 = vmatpush1.msra.mxu0 0.0
    %2174 = vmatprep.subr.mxu0 0.0
    %2175 = vmatpush1.msra.mxu0 0.0
    %2176 = vmatprep.subr.mxu0 0.0
    %2177 = vmatpush1.msra.mxu0 0.0
    %2178 = vmatprep.subr.mxu0 0.0
    %2179 = vmatpush1.msra.mxu0 0.0
    %2180 = vmatprep.subr.mxu0 0.0
    %2181 = vmatpush1.msra.mxu0 0.0
    %2182 = vmatprep.subr.mxu0 0.0
    %2183 = vmatpush1.msra.mxu0 0.0
    %2184 = vmatprep.subr.mxu0 0.0
    %2185 = vmatpush1.msra.mxu0 0.0
    %2186 = vmatprep.subr.mxu0 0.0
    %2187 = vmatpush1.msra.mxu0 0.0
    %2188 = vmatprep.subr.mxu0 0.0
    %2189 = vmatpush1.msra.mxu0 0.0
    %2190 = vmatprep.subr.mxu0 0.0
    %2191 = vmatpush1.msra.mxu0 0.0
    %2192 = vmatprep.mubr.f32.mxu0 0.0
    %2193 = vmatmul.mubr.f32.gmra.mrb[0].mxu0 %v2099
    %v2194 = vpop.f32.mrb[0].mxu0
    %v2195 = vadd.f32 %v2126, %v2194
    %v2196 = vpop.f32.mrb[0].mxu0
    %2197 = vmatprep.mubr.f32.mxu0 0.0
    %2198 = vmatmul.mubr.f32.gmra.mrb[0].mxu0 %v2100
    %v2199 = vpop.f32.mrb[0].mxu0
    %v2200 = vadd.f32 %v2126, %v2199
    %v2201 = vpop.f32.mrb[0].mxu0
    %2202 = vmatprep.mubr.f32.mxu0 0.0
    %2203 = vmatmul.mubr.f32.gmra.mrb[0].mxu0 %v2101
    %v2204 = vpop.f32.mrb[0].mxu0
    %v2205 = vadd.f32 %v2126, %v2204
    %v2206 = vpop.f32.mrb[0].mxu0
    %2207 = vmatprep.mubr.f32.mxu0 0.0
    %2208 = vmatmul.mubr.f32.gmra.mrb[0].mxu0 %v2102
    %v2209 = vpop.f32.mrb[0].mxu0
    %v2210 = vadd.f32 %v2126, %v2209
    %v2211 = vpop.f32.mrb[0].mxu0
    %2212 = vmatprep.mubr.f32.mxu0 0.0
    %2213 = vmatmul.mubr.f32.gmra.mrb[0].mxu0 %v2103
    %v2214 = vpop.f32.mrb[0].mxu0
    %v2215 = vadd.f32 %v2126, %v2214
    %v2216 = vpop.f32.mrb[0].mxu0
    %2217 = vmatprep.mubr.f32.mxu0 0.0
    %2218 = vmatmul.mubr.f32.gmra.mrb[0].mxu0 %v2104
    %v2219 = vpop.f32.mrb[0].mxu0
    %v2220 = vadd.f32 %v2126, %v2219
    %v2221 = vpop.f32.mrb[0].mxu0
    %2222 = vdwg.mxu0
    %v2223 = vmax.f32 %v2195, 0.0
    %v2224 = vmax.f32 %v2200, 0.0
    %v2225 = vmax.f32 %v2205, 0.0
    %v2226 = vmax.f32 %v2210, 0.0
    %v2227 = vmax.f32 %v2215, 0.0
    %v2228 = vmax.f32 %v2220, 0.0
    %v2229 = vld [vmem:[#allocation59] sm:$0xff]
    %v2230 = vld [vmem:[#allocation59 + $0x8] sm:$0xff]
    %v2231 = vld [vmem:[#allocation59 + $0x10] sm:$0xff]
    %v2232 = vld [vmem:[#allocation59 + $0x18] sm:$0xff]
    %v2233 = vld [vmem:[#allocation59 + $0x20] sm:$0xff]
    %v2234 = vld [vmem:[#allocation59 + $0x28] sm:$0xff]
    %v2235 = vld [vmem:[#allocation59 + $0x30] sm:$0xff]
    %v2236 = vld [vmem:[#allocation59 + $0x38] sm:$0xff]
    %v2237 = vld [vmem:[#allocation55] sm:$0x3]
    %v2239 = vlaneseq
    %v2240 = vshrl.u32 %v2239, 7
    %v2241 = vsub.s32 0, %v2240
    %v2242 = vrot.slane %v2237, %v2241
    %v2243 = vlaneseq
    %v2244 = vshrl.u32 %v2243, 7
    %v2245 = vsub.s32 1, %v2244
    %v2246 = vrot.slane %v2237, %v2245
    %2249 = vmatprep.subr.mxu0 %v2230
    %2250 = vmatpush1.msra.mxu0 %v2229
    %2251 = vmatprep.subr.mxu0 %v2232
    %2252 = vmatpush1.msra.mxu0 %v2231
    %2253 = vmatprep.subr.mxu0 %v2234
    %2254 = vmatpush1.msra.mxu0 %v2233
    %2255 = vmatprep.subr.mxu0 %v2236
    %2256 = vmatpush1.msra.mxu0 %v2235
    %2257 = vmatprep.subr.mxu0 0.0
    %2258 = vmatpush1.msra.mxu0 0.0
    %2259 = vmatprep.subr.mxu0 0.0
    %2260 = vmatpush1.msra.mxu0 0.0
    %2261 = vmatprep.subr.mxu0 0.0
    %2262 = vmatpush1.msra.mxu0 0.0
    %2263 = vmatprep.subr.mxu0 0.0
    %2264 = vmatpush1.msra.mxu0 0.0
    %2265 = vmatprep.subr.mxu0 0.0
    %2266 = vmatpush1.msra.mxu0 0.0
    %2267 = vmatprep.subr.mxu0 0.0
    %2268 = vmatpush1.msra.mxu0 0.0
    %2269 = vmatprep.subr.mxu0 0.0
    %2270 = vmatpush1.msra.mxu0 0.0
    %2271 = vmatprep.subr.mxu0 0.0
    %2272 = vmatpush1.msra.mxu0 0.0
    %2273 = vmatprep.subr.mxu0 0.0
    %2274 = vmatpush1.msra.mxu0 0.0
    %2275 = vmatprep.subr.mxu0 0.0
    %2276 = vmatpush1.msra.mxu0 0.0
    %2277 = vmatprep.subr.mxu0 0.0
    %2278 = vmatpush1.msra.mxu0 0.0
    %2279 = vmatprep.subr.mxu0 0.0
    %2280 = vmatpush1.msra.mxu0 0.0
    %2281 = vmatprep.subr.mxu0 0.0
    %2282 = vmatpush1.msra.mxu0 0.0
    %2283 = vmatprep.subr.mxu0 0.0
    %2284 = vmatpush1.msra.mxu0 0.0
    %2285 = vmatprep.subr.mxu0 0.0
    %2286 = vmatpush1.msra.mxu0 0.0
    %2287 = vmatprep.subr.mxu0 0.0
    %2288 = vmatpush1.msra.mxu0 0.0
    %2289 = vmatprep.subr.mxu0 0.0
    %2290 = vmatpush1.msra.mxu0 0.0
    %2291 = vmatprep.subr.mxu0 0.0
    %2292 = vmatpush1.msra.mxu0 0.0
    %2293 = vmatprep.subr.mxu0 0.0
    %2294 = vmatpush1.msra.mxu0 0.0
    %2295 = vmatprep.subr.mxu0 0.0
    %2296 = vmatpush1.msra.mxu0 0.0
    %2297 = vmatprep.subr.mxu0 0.0
    %2298 = vmatpush1.msra.mxu0 0.0
    %2299 = vmatprep.subr.mxu0 0.0
    %2300 = vmatpush1.msra.mxu0 0.0
    %2301 = vmatprep.subr.mxu0 0.0
    %2302 = vmatpush1.msra.mxu0 0.0
    %2303 = vmatprep.subr.mxu0 0.0
    %2304 = vmatpush1.msra.mxu0 0.0
    %2305 = vmatprep.subr.mxu0 0.0
    %2306 = vmatpush1.msra.mxu0 0.0
    %2307 = vmatprep.subr.mxu0 0.0
    %2308 = vmatpush1.msra.mxu0 0.0
    %2309 = vmatprep.subr.mxu0 0.0
    %2310 = vmatpush1.msra.mxu0 0.0
    %2311 = vmatprep.subr.mxu0 0.0
    %2312 = vmatpush1.msra.mxu0 0.0
    %2313 = vmatprep.mubr.f32.mxu0 0.0
    %2314 = vmatmul.mubr.f32.gmra.mrb[0].mxu0 %v943
    %v2315 = vpop.f32.mrb[0].mxu0
    %v2316 = vadd.f32 %v2242, %v2315
    %v2317 = vpop.f32.mrb[0].mxu0
    %v2318 = vadd.f32 %v2246, %v2317
    %2319 = vmatprep.mubr.f32.mxu0 0.0
    %2320 = vmatmul.mubr.f32.gmra.mrb[0].mxu0 %v946
    %v2321 = vpop.f32.mrb[0].mxu0
    %v2322 = vadd.f32 %v2242, %v2321
    %v2323 = vpop.f32.mrb[0].mxu0
    %v2324 = vadd.f32 %v2246, %v2323
    %2325 = vdwg.mxu0
    %v2326 = vmax.f32 %v2316, 0.0
    %v2327 = vmax.f32 %v2318, 0.0
    %v2328 = vmax.f32 %v2322, 0.0
    %v2329 = vmax.f32 %v2324, 0.0
    %v2330 = vld [vmem:[%s95] sm:$0xff]
    %v2331 = vld [vmem:[%s95 + $0x8] sm:$0xff]
    %v2332 = vld [vmem:[%s95 + $0x10] sm:$0xff]
    %v2333 = vld [vmem:[%s95 + $0x18] sm:$0xff]
    %v2334 = vld [vmem:[%s95 + $0x20] sm:$0xff]
    %v2335 = vld [vmem:[%s95 + $0x28] sm:$0xff]
    %v2336 = vld [vmem:[%s95 + $0x30] sm:$0xff]
    %v2337 = vld [vmem:[%s95 + $0x38] sm:$0xff]
    %v2338 = vld [vmem:[%s95 + $0x40] sm:$0xff]
    %v2339 = vld [vmem:[%s95 + $0x48] sm:$0xff]
    %v2340 = vld [vmem:[%s95 + $0x50] sm:$0xff]
    %v2341 = vld [vmem:[%s95 + $0x58] sm:$0xff]
    %v2342 = vld [vmem:[%s95 + $0x60] sm:$0xff]
    %v2343 = vld [vmem:[%s95 + $0x68] sm:$0xff]
    %v2344 = vld [vmem:[%s95 + $0x70] sm:$0xff]
    %v2345 = vld [vmem:[%s95 + $0x78] sm:$0xff]
    %v2346 = vld [vmem:[%s95 + $0x80] sm:$0xff]
    %v2347 = vld [vmem:[%s95 + $0x88] sm:$0xff]
    %v2348 = vld [vmem:[%s95 + $0x90] sm:$0xff]
    %v2349 = vld [vmem:[%s95 + $0x98] sm:$0xff]
    %v2350 = vld [vmem:[%s95 + $0xa0] sm:$0xff]
    %v2351 = vld [vmem:[%s95 + $0xa8] sm:$0xff]
    %v2352 = vld [vmem:[%s95 + $0xb0] sm:$0xff]
    %v2353 = vld [vmem:[%s95 + $0xb8] sm:$0xff]
    %v2354 = vld [vmem:[%s95 + $0xc0] sm:$0xff]
    %v2355 = vld [vmem:[%s95 + $0xc8] sm:$0xff]
    %v2356 = vld [vmem:[%s95 + $0xd0] sm:$0xff]
    %v2357 = vld [vmem:[%s95 + $0xd8] sm:$0xff]
    %v2358 = vld [vmem:[%s95 + $0xe0] sm:$0xff]
    %v2359 = vld [vmem:[%s95 + $0xe8] sm:$0xff]
    %v2360 = vld [vmem:[%s95 + $0xf0] sm:$0xff]
    %v2361 = vld [vmem:[%s95 + $0xf8] sm:$0xff]
    %v2362 = vld [vmem:[#allocation56] sm:$0x1]
    %v2364 = vlaneseq
    %v2365 = vshrl.u32 %v2364, 7
    %v2366 = vsub.s32 0, %v2365
    %v2367 = vrot.slane %v2362, %v2366
    %2369 = vmatprep.subr.mxu0 0.0
    %2370 = vmatpush1.msra.mxu0 %v2330
    %2371 = vmatprep.subr.mxu0 0.0
    %2372 = vmatpush1.msra.mxu0 %v2331
    %2373 = vmatprep.subr.mxu0 0.0
    %2374 = vmatpush1.msra.mxu0 %v2332
    %2375 = vmatprep.subr.mxu0 0.0
    %2376 = vmatpush1.msra.mxu0 %v2333
    %2377 = vmatprep.subr.mxu0 0.0
    %2378 = vmatpush1.msra.mxu0 %v2334
    %2379 = vmatprep.subr.mxu0 0.0
    %2380 = vmatpush1.msra.mxu0 %v2335
    %2381 = vmatprep.subr.mxu0 0.0
    %2382 = vmatpush1.msra.mxu0 %v2336
    %2383 = vmatprep.subr.mxu0 0.0
    %2384 = vmatpush1.msra.mxu0 %v2337
    %2385 = vmatprep.subr.mxu0 0.0
    %2386 = vmatpush1.msra.mxu0 %v2338
    %2387 = vmatprep.subr.mxu0 0.0
    %2388 = vmatpush1.msra.mxu0 %v2339
    %2389 = vmatprep.subr.mxu0 0.0
    %2390 = vmatpush1.msra.mxu0 %v2340
    %2391 = vmatprep.subr.mxu0 0.0
    %2392 = vmatpush1.msra.mxu0 %v2341
    %2393 = vmatprep.subr.mxu0 0.0
    %2394 = vmatpush1.msra.mxu0 %v2342
    %2395 = vmatprep.subr.mxu0 0.0
    %2396 = vmatpush1.msra.mxu0 %v2343
    %2397 = vmatprep.subr.mxu0 0.0
    %2398 = vmatpush1.msra.mxu0 %v2344
    %2399 = vmatprep.subr.mxu0 0.0
    %2400 = vmatpush1.msra.mxu0 %v2345
    %2401 = vmatprep.subr.mxu0 0.0
    %2402 = vmatpush1.msra.mxu0 %v2346
    %2403 = vmatprep.subr.mxu0 0.0
    %2404 = vmatpush1.msra.mxu0 %v2347
    %2405 = vmatprep.subr.mxu0 0.0
    %2406 = vmatpush1.msra.mxu0 %v2348
    %2407 = vmatprep.subr.mxu0 0.0
    %2408 = vmatpush1.msra.mxu0 %v2349
    %2409 = vmatprep.subr.mxu0 0.0
    %2410 = vmatpush1.msra.mxu0 %v2350
    %2411 = vmatprep.subr.mxu0 0.0
    %2412 = vmatpush1.msra.mxu0 %v2351
    %2413 = vmatprep.subr.mxu0 0.0
    %2414 = vmatpush1.msra.mxu0 %v2352
    %2415 = vmatprep.subr.mxu0 0.0
    %2416 = vmatpush1.msra.mxu0 %v2353
    %2417 = vmatprep.subr.mxu0 0.0
    %2418 = vmatpush1.msra.mxu0 %v2354
    %2419 = vmatprep.subr.mxu0 0.0
    %2420 = vmatpush1.msra.mxu0 %v2355
    %2421 = vmatprep.subr.mxu0 0.0
    %2422 = vmatpush1.msra.mxu0 %v2356
    %2423 = vmatprep.subr.mxu0 0.0
    %2424 = vmatpush1.msra.mxu0 %v2357
    %2425 = vmatprep.subr.mxu0 0.0
    %2426 = vmatpush1.msra.mxu0 %v2358
    %2427 = vmatprep.subr.mxu0 0.0
    %2428 = vmatpush1.msra.mxu0 %v2359
    %2429 = vmatprep.subr.mxu0 0.0
    %2430 = vmatpush1.msra.mxu0 %v2360
    %2431 = vmatprep.subr.mxu0 0.0
    %2432 = vmatpush1.msra.mxu0 %v2361
    %2433 = vmatprep.mubr.f32.mxu0 %v2327
    %2434 = vmatmul.mubr.f32.gmra.mrb[0].mxu0 %v2326
    %v2435 = vpop.f32.mrb[0].mxu0
    %v2436 = vadd.f32 %v2367, %v2435
    %v2437 = vpop.f32.mrb[0].mxu0
    %2438 = vmatprep.mubr.f32.mxu0 %v2329
    %2439 = vmatmul.mubr.f32.gmra.mrb[0].mxu0 %v2328
    %v2440 = vpop.f32.mrb[0].mxu0
    %v2441 = vadd.f32 %v2367, %v2440
    %v2442 = vpop.f32.mrb[0].mxu0
    %2443 = vdwg.mxu0
    %v2444 = vmax.f32 %v2436, 0.0
    %v2445 = vmax.f32 %v2441, 0.0
    %v2446 = vld [vmem:[%s97] sm:$0xff]
    %v2447 = vld [vmem:[%s97 + $0x8] sm:$0xff]
    %v2448 = vld [vmem:[%s97 + $0x10] sm:$0xff]
    %v2449 = vld [vmem:[%s97 + $0x18] sm:$0xff]
    %v2450 = vld [vmem:[%s97 + $0x20] sm:$0xff]
    %v2451 = vld [vmem:[%s97 + $0x28] sm:$0xff]
    %v2452 = vld [vmem:[%s97 + $0x30] sm:$0xff]
    %v2453 = vld [vmem:[%s97 + $0x38] sm:$0xff]
    %v2454 = vld [vmem:[%s97 + $0x40] sm:$0xff]
    %v2455 = vld [vmem:[%s97 + $0x48] sm:$0xff]
    %v2456 = vld [vmem:[%s97 + $0x50] sm:$0xff]
    %v2457 = vld [vmem:[%s97 + $0x58] sm:$0xff]
    %v2458 = vld [vmem:[%s97 + $0x60] sm:$0xff]
    %v2459 = vld [vmem:[%s97 + $0x68] sm:$0xff]
    %v2460 = vld [vmem:[%s97 + $0x70] sm:$0xff]
    %v2461 = vld [vmem:[%s97 + $0x78] sm:$0xff]
    %v2462 = vld [vmem:[#allocation58] sm:$0x1]
    %v2464 = vlaneseq
    %v2465 = vshrl.u32 %v2464, 7
    %v2466 = vsub.s32 0, %v2465
    %v2467 = vrot.slane %v2462, %v2466
    %2469 = vmatprep.subr.mxu0 0.0
    %2470 = vmatpush1.msra.mxu0 %v2446
    %2471 = vmatprep.subr.mxu0 0.0
    %2472 = vmatpush1.msra.mxu0 %v2447
    %2473 = vmatprep.subr.mxu0 0.0
    %2474 = vmatpush1.msra.mxu0 %v2448
    %2475 = vmatprep.subr.mxu0 0.0
    %2476 = vmatpush1.msra.mxu0 %v2449
    %2477 = vmatprep.subr.mxu0 0.0
    %2478 = vmatpush1.msra.mxu0 %v2450
    %2479 = vmatprep.subr.mxu0 0.0
    %2480 = vmatpush1.msra.mxu0 %v2451
    %2481 = vmatprep.subr.mxu0 0.0
    %2482 = vmatpush1.msra.mxu0 %v2452
    %2483 = vmatprep.subr.mxu0 0.0
    %2484 = vmatpush1.msra.mxu0 %v2453
    %2485 = vmatprep.subr.mxu0 0.0
    %2486 = vmatpush1.msra.mxu0 %v2454
    %2487 = vmatprep.subr.mxu0 0.0
    %2488 = vmatpush1.msra.mxu0 %v2455
    %2489 = vmatprep.subr.mxu0 0.0
    %2490 = vmatpush1.msra.mxu0 %v2456
    %2491 = vmatprep.subr.mxu0 0.0
    %2492 = vmatpush1.msra.mxu0 %v2457
    %2493 = vmatprep.subr.mxu0 0.0
    %2494 = vmatpush1.msra.mxu0 %v2458
    %2495 = vmatprep.subr.mxu0 0.0
    %2496 = vmatpush1.msra.mxu0 %v2459
    %2497 = vmatprep.subr.mxu0 0.0
    %2498 = vmatpush1.msra.mxu0 %v2460
    %2499 = vmatprep.subr.mxu0 0.0
    %2500 = vmatpush1.msra.mxu0 %v2461
    %2501 = vmatprep.subr.mxu0 0.0
    %2502 = vmatpush1.msra.mxu0 0.0
    %2503 = vmatprep.subr.mxu0 0.0
    %2504 = vmatpush1.msra.mxu0 0.0
    %2505 = vmatprep.subr.mxu0 0.0
    %2506 = vmatpush1.msra.mxu0 0.0
    %2507 = vmatprep.subr.mxu0 0.0
    %2508 = vmatpush1.msra.mxu0 0.0
    %2509 = vmatprep.subr.mxu0 0.0
    %2510 = vmatpush1.msra.mxu0 0.0
    %2511 = vmatprep.subr.mxu0 0.0
    %2512 = vmatpush1.msra.mxu0 0.0
    %2513 = vmatprep.subr.mxu0 0.0
    %2514 = vmatpush1.msra.mxu0 0.0
    %2515 = vmatprep.subr.mxu0 0.0
    %2516 = vmatpush1.msra.mxu0 0.0
    %2517 = vmatprep.subr.mxu0 0.0
    %2518 = vmatpush1.msra.mxu0 0.0
    %2519 = vmatprep.subr.mxu0 0.0
    %2520 = vmatpush1.msra.mxu0 0.0
    %2521 = vmatprep.subr.mxu0 0.0
    %2522 = vmatpush1.msra.mxu0 0.0
    %2523 = vmatprep.subr.mxu0 0.0
    %2524 = vmatpush1.msra.mxu0 0.0
    %2525 = vmatprep.subr.mxu0 0.0
    %2526 = vmatpush1.msra.mxu0 0.0
    %2527 = vmatprep.subr.mxu0 0.0
    %2528 = vmatpush1.msra.mxu0 0.0
    %2529 = vmatprep.subr.mxu0 0.0
    %2530 = vmatpush1.msra.mxu0 0.0
    %2531 = vmatprep.subr.mxu0 0.0
    %2532 = vmatpush1.msra.mxu0 0.0
    %2533 = vmatprep.mubr.f32.mxu0 0.0
    %2534 = vmatmul.mubr.f32.gmra.mrb[0].mxu0 %v2444
    %v2535 = vpop.f32.mrb[0].mxu0
    %v2536 = vadd.f32 %v2467, %v2535
    %v2537 = vpop.f32.mrb[0].mxu0
    %2538 = vmatprep.mubr.f32.mxu0 0.0
    %2539 = vmatmul.mubr.f32.gmra.mrb[0].mxu0 %v2445
    %v2540 = vpop.f32.mrb[0].mxu0
    %v2541 = vadd.f32 %v2467, %v2540
    %v2542 = vpop.f32.mrb[0].mxu0
    %2543 = vdwg.mxu0
    %v2544 = vmax.f32 %v2536, 0.0
    %v2545 = vmax.f32 %v2541, 0.0
    %v2546 = vadd.f32 %v2544, %v2223
    %v2547 = vadd.f32 %v2545, %v2224
    %v2548 = vadd.f32 %v2546, %v2225
    %v2549 = vadd.f32 %v2547, %v2226
    %v2550 = vadd.f32 %v2548, %v2227
    %v2551 = vadd.f32 %v2549, %v2228
    %v2552 = vld [vmem:[#allocation31] sm:$0xff]
    %v2553 = vld [vmem:[#allocation31 + $0x8] sm:$0xf]
    %v2554 = vld [vmem:[#allocation2] sm:$0xff]
    %v2555 = vld [vmem:[#allocation2 + $0x8] sm:$0xf]
    %v2556 = vadd.f32 %v2554, %v806
    %v2557 = vadd.f32 %v2555, %v807
    %vm2558 = vcmask 97280
    %v2559 = vsel %vm2558, %v2556, 0.0
    %2560 = vadd.xlane.f32.xlu0 %v2559
    %v2561 = vpop.xlane.xlu0 %2560
    %vm2562 = vcmask 93184
    %v2563 = vsel %vm2562, %v2557, 0.0
    %2564 = vadd.xlane.f32.xlu0 %v2563
    %v2565 = vpop.xlane.xlu0 %2564
    %v2566 = vmax.f32 %v2561, 1e-12
    %v2567 = vmax.f32 %v2565, 1e-12
    %v2568 = vrsqrt.pop %v2566
    %v2569 = vrsqrt.pop %v2567
    %v2570 = vadd.f32 %v2559, %v2563
    %v2571 = vrot.slane %v2570, 4
    %v2572 = vadd.f32 %v2570, %v2571
    %v2573 = vrot.slane %v2572, 2
    %v2574 = vadd.f32 %v2572, %v2573
    %v2575 = vrot.slane %v2574, 1
    %v2576 = vadd.f32 %v2574, %v2575
    %v2577 = vmax.f32 %v2576, 1e-12
    %v2578 = vrsqrt.pop %v2577
    %v2579 = vmul.f32 %v2556, %v2568
    %v2580 = vmul.f32 %v2557, %v2569
    %v2581 = vmul.f32 %v2579, %v2578
    %v2582 = vmul.f32 %v2580, %v2578
    %v2583 = vld [vmem:[#allocation5] sm:$0xff]
    %v2584 = vld [vmem:[#allocation5 + $0x8] sm:$0xf]
    %v2585 = vadd.f32 %v2583, %v806
    %v2586 = vadd.f32 %v2584, %v807
    %v2587 = vsel %vm2558, %v2585, 0.0
    %2588 = vadd.xlane.f32.xlu0 %v2587
    %v2589 = vpop.xlane.xlu0 %2588
    %v2590 = vsel %vm2562, %v2586, 0.0
    %2591 = vadd.xlane.f32.xlu0 %v2590
    %v2592 = vpop.xlane.xlu0 %2591
    %v2593 = vmax.f32 %v2589, 1e-12
    %v2594 = vmax.f32 %v2592, 1e-12
    %v2595 = vrsqrt.pop %v2593
    %v2596 = vrsqrt.pop %v2594
    %v2597 = vadd.f32 %v2587, %v2590
    %v2598 = vrot.slane %v2597, 4
    %v2599 = vadd.f32 %v2597, %v2598
    %v2600 = vrot.slane %v2599, 2
    %v2601 = vadd.f32 %v2599, %v2600
    %v2602 = vrot.slane %v2601, 1
    %v2603 = vadd.f32 %v2601, %v2602
    %v2604 = vmax.f32 %v2603, 1e-12
    %v2605 = vrsqrt.pop %v2604
    %v2606 = vmul.f32 %v2585, %v2595
    %v2607 = vmul.f32 %v2586, %v2596
    %v2608 = vmul.f32 %v2606, %v2605
    %v2609 = vmul.f32 %v2607, %v2605
    %v2610 = vld [vmem:[#allocation7] sm:$0xff]
    %v2611 = vld [vmem:[#allocation7 + $0x8] sm:$0xf]
    %v2612 = vadd.f32 %v2610, %v806
    %v2613 = vadd.f32 %v2611, %v807
    %v2614 = vsel %vm2558, %v2612, 0.0
    %2615 = vadd.xlane.f32.xlu0 %v2614
    %v2616 = vpop.xlane.xlu0 %2615
    %v2617 = vsel %vm2562, %v2613, 0.0
    %2618 = vadd.xlane.f32.xlu0 %v2617
    %v2619 = vpop.xlane.xlu0 %2618
    %v2620 = vmax.f32 %v2616, 1e-12
    %v2621 = vmax.f32 %v2619, 1e-12
    %v2622 = vrsqrt.pop %v2620
    %v2623 = vrsqrt.pop %v2621
    %v2624 = vadd.f32 %v2614, %v2617
    %v2625 = vrot.slane %v2624, 4
    %v2626 = vadd.f32 %v2624, %v2625
    %v2627 = vrot.slane %v2626, 2
    %v2628 = vadd.f32 %v2626, %v2627
    %v2629 = vrot.slane %v2628, 1
    %v2630 = vadd.f32 %v2628, %v2629
    %v2631 = vmax.f32 %v2630, 1e-12
    %v2632 = vrsqrt.pop %v2631
    %v2633 = vmul.f32 %v2612, %v2622
    %v2634 = vmul.f32 %v2613, %v2623
    %v2635 = vmul.f32 %v2633, %v2632
    %v2636 = vmul.f32 %v2634, %v2632
    %v2637 = vld [vmem:[#allocation10] sm:$0xff]
    %v2638 = vld [vmem:[#allocation10 + $0x8] sm:$0xff]
    %v2639 = vld [vmem:[#allocation10 + $0x10] sm:$0xff]
    %v2640 = vld [vmem:[#allocation10 + $0x18] sm:$0xff]
    %v2641 = vld [vmem:[#allocation16] sm:$0xff]
    %v2642 = vld [vmem:[#allocation16 + $0x8] sm:$0xff]
    %v2643 = vld [vmem:[#allocation16 + $0x10] sm:$0xff]
    %v2644 = vld [vmem:[#allocation16 + $0x18] sm:$0xff]
    %v2645 = vld [vmem:[#allocation22] sm:$0xff]
    %v2646 = vld [vmem:[#allocation22 + $0x8] sm:$0xff]
    %v2647 = vld [vmem:[#allocation22 + $0x10] sm:$0xff]
    %v2648 = vld [vmem:[#allocation22 + $0x18] sm:$0xff]
    %2653 = vrot.lane.b32.xlu0 %v2641, 32
    %v2654 = vpop.permute.xlu0 %2653
    %2655 = vrot.lane.b32.xlu0 %v2642, 32
    %v2656 = vpop.permute.xlu0 %2655
    %2657 = vrot.lane.b32.xlu0 %v2643, 32
    %v2658 = vpop.permute.xlu0 %2657
    %2659 = vrot.lane.b32.xlu0 %v2644, 32
    %v2660 = vpop.permute.xlu0 %2659
    %2669 = vrot.lane.b32.xlu0 %v2645, 64
    %v2670 = vpop.permute.xlu0 %2669
    %2671 = vrot.lane.b32.xlu0 %v2646, 64
    %v2672 = vpop.permute.xlu0 %2671
    %2673 = vrot.lane.b32.xlu0 %v2647, 64
    %v2674 = vpop.permute.xlu0 %2673
    %2675 = vrot.lane.b32.xlu0 %v2648, 64
    %v2676 = vpop.permute.xlu0 %2675
    %v2681 = vsel %vm932, %v2637, %v2654
    %v2682 = vsel %vm932, %v2638, %v2656
    %v2683 = vsel %vm932, %v2639, %v2658
    %v2684 = vsel %vm932, %v2640, %v2660
    %v2685 = vsel %vm937, %v2681, %v2670
    %v2686 = vsel %vm937, %v2682, %v2672
    %v2687 = vsel %vm937, %v2683, %v2674
    %v2688 = vsel %vm937, %v2684, %v2676
    %v2690 = vsel %vm932, %v2552, 0
    %v2693 = vsel %vm932, %v2553, 0
    %2695 = vmatprep.subr.mxu0 0.0
    %2696 = vmatpush1.msra.mxu0 %v2685
    %2697 = vmatprep.subr.mxu0 0.0
    %2698 = vmatpush1.msra.mxu0 %v2686
    %2699 = vmatprep.subr.mxu0 0.0
    %2700 = vmatpush1.msra.mxu0 %v2687
    %2701 = vmatprep.subr.mxu0 0.0
    %2702 = vmatpush1.msra.mxu0 %v2688
    %2703 = vmatprep.subr.mxu0 0.0
    %2704 = vmatpush1.msra.mxu0 0.0
    %2705 = vmatprep.subr.mxu0 0.0
    %2706 = vmatpush1.msra.mxu0 0.0
    %2707 = vmatprep.subr.mxu0 0.0
    %2708 = vmatpush1.msra.mxu0 0.0
    %2709 = vmatprep.subr.mxu0 0.0
    %2710 = vmatpush1.msra.mxu0 0.0
    %2711 = vmatprep.subr.mxu0 0.0
    %2712 = vmatpush1.msra.mxu0 0.0
    %2713 = vmatprep.subr.mxu0 0.0
    %2714 = vmatpush1.msra.mxu0 0.0
    %2715 = vmatprep.subr.mxu0 0.0
    %2716 = vmatpush1.msra.mxu0 0.0
    %2717 = vmatprep.subr.mxu0 0.0
    %2718 = vmatpush1.msra.mxu0 0.0
    %2719 = vmatprep.subr.mxu0 0.0
    %2720 = vmatpush1.msra.mxu0 0.0
    %2721 = vmatprep.subr.mxu0 0.0
    %2722 = vmatpush1.msra.mxu0 0.0
    %2723 = vmatprep.subr.mxu0 0.0
    %2724 = vmatpush1.msra.mxu0 0.0
    %2725 = vmatprep.subr.mxu0 0.0
    %2726 = vmatpush1.msra.mxu0 0.0
    %2727 = vmatprep.subr.mxu0 0.0
    %2728 = vmatpush1.msra.mxu0 0.0
    %2729 = vmatprep.subr.mxu0 0.0
    %2730 = vmatpush1.msra.mxu0 0.0
    %2731 = vmatprep.subr.mxu0 0.0
    %2732 = vmatpush1.msra.mxu0 0.0
    %2733 = vmatprep.subr.mxu0 0.0
    %2734 = vmatpush1.msra.mxu0 0.0
    %2735 = vmatprep.subr.mxu0 0.0
    %2736 = vmatpush1.msra.mxu0 0.0
    %2737 = vmatprep.subr.mxu0 0.0
    %2738 = vmatpush1.msra.mxu0 0.0
    %2739 = vmatprep.subr.mxu0 0.0
    %2740 = vmatpush1.msra.mxu0 0.0
    %2741 = vmatprep.subr.mxu0 0.0
    %2742 = vmatpush1.msra.mxu0 0.0
    %2743 = vmatprep.subr.mxu0 0.0
    %2744 = vmatpush1.msra.mxu0 0.0
    %2745 = vmatprep.subr.mxu0 0.0
    %2746 = vmatpush1.msra.mxu0 0.0
    %2747 = vmatprep.subr.mxu0 0.0
    %2748 = vmatpush1.msra.mxu0 0.0
    %2749 = vmatprep.subr.mxu0 0.0
    %2750 = vmatpush1.msra.mxu0 0.0
    %2751 = vmatprep.subr.mxu0 0.0
    %2752 = vmatpush1.msra.mxu0 0.0
    %2753 = vmatprep.subr.mxu0 0.0
    %2754 = vmatpush1.msra.mxu0 0.0
    %2755 = vmatprep.subr.mxu0 0.0
    %2756 = vmatpush1.msra.mxu0 0.0
    %2757 = vmatprep.subr.mxu0 0.0
    %2758 = vmatpush1.msra.mxu0 0.0
    %2759 = vmatprep.mubr.f32.mxu0 0.0
    %2760 = vmatmul.mubr.f32.gmra.mrb[0].mxu0 %v2690
    %v2761 = vpop.f32.mrb[0].mxu0
    %v2762 = vadd.f32 0.0, %v2761
    %v2763 = vpop.f32.mrb[0].mxu0
    %2764 = vmatprep.mubr.f32.mxu0 0.0
    %2765 = vmatmul.mubr.f32.gmra.mrb[0].mxu0 %v2693
    %v2766 = vpop.f32.mrb[0].mxu0
    %v2767 = vadd.f32 0.0, %v2766
    %v2768 = vpop.f32.mrb[0].mxu0
    %2769 = vdwg.mxu0
    %v2770 = vld [vmem:[%s7] sm:$0x1]
    %v2772 = vlaneseq
    %v2773 = vshrl.u32 %v2772, 7
    %v2774 = vsub.s32 0, %v2773
    %v2775 = vrot.slane %v2770, %v2774
    %v2778 = vsel %vm2558, %v2581, 0
    %v2781 = vsel %vm2558, %v2582, 0
    %vm2783 = vcmask 1043456
    %v2785 = vsel %vm2783, %v2767, 0
    %2787 = vmatprep.subr.mxu0 0.0
    %2788 = vmatpush1.msra.mxu0 %v2762
    %2789 = vmatprep.subr.mxu0 0.0
    %2790 = vmatpush1.msra.mxu0 %v2785
    %2791 = vmatprep.subr.mxu0 0.0
    %2792 = vmatpush1.msra.mxu0 0.0
    %2793 = vmatprep.subr.mxu0 0.0
    %2794 = vmatpush1.msra.mxu0 0.0
    %2795 = vmatprep.subr.mxu0 0.0
    %2796 = vmatpush1.msra.mxu0 0.0
    %2797 = vmatprep.subr.mxu0 0.0
    %2798 = vmatpush1.msra.mxu0 0.0
    %2799 = vmatprep.subr.mxu0 0.0
    %2800 = vmatpush1.msra.mxu0 0.0
    %2801 = vmatprep.subr.mxu0 0.0
    %2802 = vmatpush1.msra.mxu0 0.0
    %2803 = vmatprep.subr.mxu0 0.0
    %2804 = vmatpush1.msra.mxu0 0.0
    %2805 = vmatprep.subr.mxu0 0.0
    %2806 = vmatpush1.msra.mxu0 0.0
    %2807 = vmatprep.subr.mxu0 0.0
    %2808 = vmatpush1.msra.mxu0 0.0
    %2809 = vmatprep.subr.mxu0 0.0
    %2810 = vmatpush1.msra.mxu0 0.0
    %2811 = vmatprep.subr.mxu0 0.0
    %2812 = vmatpush1.msra.mxu0 0.0
    %2813 = vmatprep.subr.mxu0 0.0
    %2814 = vmatpush1.msra.mxu0 0.0
    %2815 = vmatprep.subr.mxu0 0.0
    %2816 = vmatpush1.msra.mxu0 0.0
    %2817 = vmatprep.subr.mxu0 0.0
    %2818 = vmatpush1.msra.mxu0 0.0
    %2819 = vmatprep.subr.mxu0 0.0
    %2820 = vmatpush1.msra.mxu0 0.0
    %2821 = vmatprep.subr.mxu0 0.0
    %2822 = vmatpush1.msra.mxu0 0.0
    %2823 = vmatprep.subr.mxu0 0.0
    %2824 = vmatpush1.msra.mxu0 0.0
    %2825 = vmatprep.subr.mxu0 0.0
    %2826 = vmatpush1.msra.mxu0 0.0
    %2827 = vmatprep.subr.mxu0 0.0
    %2828 = vmatpush1.msra.mxu0 0.0
    %2829 = vmatprep.subr.mxu0 0.0
    %2830 = vmatpush1.msra.mxu0 0.0
    %2831 = vmatprep.subr.mxu0 0.0
    %2832 = vmatpush1.msra.mxu0 0.0
    %2833 = vmatprep.subr.mxu0 0.0
    %2834 = vmatpush1.msra.mxu0 0.0
    %2835 = vmatprep.subr.mxu0 0.0
    %2836 = vmatpush1.msra.mxu0 0.0
    %2837 = vmatprep.subr.mxu0 0.0
    %2838 = vmatpush1.msra.mxu0 0.0
    %2839 = vmatprep.subr.mxu0 0.0
    %2840 = vmatpush1.msra.mxu0 0.0
    %2841 = vmatprep.subr.mxu0 0.0
    %2842 = vmatpush1.msra.mxu0 0.0
    %2843 = vmatprep.subr.mxu0 0.0
    %2844 = vmatpush1.msra.mxu0 0.0
    %2845 = vmatprep.subr.mxu0 0.0
    %2846 = vmatpush1.msra.mxu0 0.0
    %2847 = vmatprep.subr.mxu0 0.0
    %2848 = vmatpush1.msra.mxu0 0.0
    %2849 = vmatprep.subr.mxu0 0.0
    %2850 = vmatpush1.msra.mxu0 0.0
    %2851 = vmatprep.mubr.f32.mxu0 0.0
    %2852 = vmatmul.mubr.f32.gmra.mrb[0].mxu0 %v2778
    %v2853 = vpop.f32.mrb[0].mxu0
    %v2854 = vadd.f32 %v2775, %v2853
    %v2855 = vpop.f32.mrb[0].mxu0
    %2856 = vmatprep.mubr.f32.mxu0 0.0
    %2857 = vmatmul.mubr.f32.gmra.mrb[0].mxu0 %v2781
    %v2858 = vpop.f32.mrb[0].mxu0
    %v2859 = vadd.f32 %v2775, %v2858
    %v2860 = vpop.f32.mrb[0].mxu0
    %2861 = vdwg.mxu0
    %v2862 = vmax.f32 %v2854, 0.0
    %v2863 = vmax.f32 %v2859, 0.0
    %v2864 = vld [vmem:[#allocation11] sm:$0xff]
    %v2865 = vld [vmem:[#allocation11 + $0x8] sm:$0xff]
    %v2866 = vld [vmem:[#allocation11 + $0x10] sm:$0xff]
    %v2867 = vld [vmem:[#allocation11 + $0x18] sm:$0xff]
    %v2869 = vsel %vm932, %v2862, 0
    %v2872 = vsel %vm932, %v2863, 0
    %2874 = vmatprep.subr.mxu0 0.0
    %2875 = vmatpush1.msra.mxu0 %v2864
    %2876 = vmatprep.subr.mxu0 0.0
    %2877 = vmatpush1.msra.mxu0 %v2865
    %2878 = vmatprep.subr.mxu0 0.0
    %2879 = vmatpush1.msra.mxu0 %v2866
    %2880 = vmatprep.subr.mxu0 0.0
    %2881 = vmatpush1.msra.mxu0 %v2867
    %2882 = vmatprep.subr.mxu0 0.0
    %2883 = vmatpush1.msra.mxu0 0.0
    %2884 = vmatprep.subr.mxu0 0.0
    %2885 = vmatpush1.msra.mxu0 0.0
    %2886 = vmatprep.subr.mxu0 0.0
    %2887 = vmatpush1.msra.mxu0 0.0
    %2888 = vmatprep.subr.mxu0 0.0
    %2889 = vmatpush1.msra.mxu0 0.0
    %2890 = vmatprep.subr.mxu0 0.0
    %2891 = vmatpush1.msra.mxu0 0.0
    %2892 = vmatprep.subr.mxu0 0.0
    %2893 = vmatpush1.msra.mxu0 0.0
    %2894 = vmatprep.subr.mxu0 0.0
    %2895 = vmatpush1.msra.mxu0 0.0
    %2896 = vmatprep.subr.mxu0 0.0
    %2897 = vmatpush1.msra.mxu0 0.0
    %2898 = vmatprep.subr.mxu0 0.0
    %2899 = vmatpush1.msra.mxu0 0.0
    %2900 = vmatprep.subr.mxu0 0.0
    %2901 = vmatpush1.msra.mxu0 0.0
    %2902 = vmatprep.subr.mxu0 0.0
    %2903 = vmatpush1.msra.mxu0 0.0
    %2904 = vmatprep.subr.mxu0 0.0
    %2905 = vmatpush1.msra.mxu0 0.0
    %2906 = vmatprep.subr.mxu0 0.0
    %2907 = vmatpush1.msra.mxu0 0.0
    %2908 = vmatprep.subr.mxu0 0.0
    %2909 = vmatpush1.msra.mxu0 0.0
    %2910 = vmatprep.subr.mxu0 0.0
    %2911 = vmatpush1.msra.mxu0 0.0
    %2912 = vmatprep.subr.mxu0 0.0
    %2913 = vmatpush1.msra.mxu0 0.0
    %2914 = vmatprep.subr.mxu0 0.0
    %2915 = vmatpush1.msra.mxu0 0.0
    %2916 = vmatprep.subr.mxu0 0.0
    %2917 = vmatpush1.msra.mxu0 0.0
    %2918 = vmatprep.subr.mxu0 0.0
    %2919 = vmatpush1.msra.mxu0 0.0
    %2920 = vmatprep.subr.mxu0 0.0
    %2921 = vmatpush1.msra.mxu0 0.0
    %2922 = vmatprep.subr.mxu0 0.0
    %2923 = vmatpush1.msra.mxu0 0.0
    %2924 = vmatprep.subr.mxu0 0.0
    %2925 = vmatpush1.msra.mxu0 0.0
    %2926 = vmatprep.subr.mxu0 0.0
    %2927 = vmatpush1.msra.mxu0 0.0
    %2928 = vmatprep.subr.mxu0 0.0
    %2929 = vmatpush1.msra.mxu0 0.0
    %2930 = vmatprep.subr.mxu0 0.0
    %2931 = vmatpush1.msra.mxu0 0.0
    %2932 = vmatprep.subr.mxu0 0.0
    %2933 = vmatpush1.msra.mxu0 0.0
    %2934 = vmatprep.subr.mxu0 0.0
    %2935 = vmatpush1.msra.mxu0 0.0
    %2936 = vmatprep.subr.mxu0 0.0
    %2937 = vmatpush1.msra.mxu0 0.0
    %2938 = vmatprep.mubr.f32.mxu0 0.0
    %2939 = vmatmul.mubr.f32.gmra.mrb[0].mxu0 %v2869
    %v2940 = vpop.f32.mrb[0].mxu0
    %v2941 = vadd.f32 0.0, %v2940
    %v2942 = vpop.f32.mrb[0].mxu0
    %2943 = vmatprep.mubr.f32.mxu0 0.0
    %2944 = vmatmul.mubr.f32.gmra.mrb[0].mxu0 %v2872
    %v2945 = vpop.f32.mrb[0].mxu0
    %v2946 = vadd.f32 0.0, %v2945
    %v2947 = vpop.f32.mrb[0].mxu0
    %2948 = vdwg.mxu0
    %v2949 = vld [vmem:[#allocation8] sm:$0x1]
    %v2951 = vlaneseq
    %v2952 = vshrl.u32 %v2951, 7
    %v2953 = vsub.s32 0, %v2952
    %v2954 = vrot.slane %v2949, %v2953
    %v2957 = vsel %vm2783, %v2946, 0
    %2959 = vmatprep.subr.mxu0 0.0
    %2960 = vmatpush1.msra.mxu0 %v2941
    %2961 = vmatprep.subr.mxu0 0.0
    %2962 = vmatpush1.msra.mxu0 %v2957
    %2963 = vmatprep.subr.mxu0 0.0
    %2964 = vmatpush1.msra.mxu0 0.0
    %2965 = vmatprep.subr.mxu0 0.0
    %2966 = vmatpush1.msra.mxu0 0.0
    %2967 = vmatprep.subr.mxu0 0.0
    %2968 = vmatpush1.msra.mxu0 0.0
    %2969 = vmatprep.subr.mxu0 0.0
    %2970 = vmatpush1.msra.mxu0 0.0
    %2971 = vmatprep.subr.mxu0 0.0
    %2972 = vmatpush1.msra.mxu0 0.0
    %2973 = vmatprep.subr.mxu0 0.0
    %2974 = vmatpush1.msra.mxu0 0.0
    %2975 = vmatprep.subr.mxu0 0.0
    %2976 = vmatpush1.msra.mxu0 0.0
    %2977 = vmatprep.subr.mxu0 0.0
    %2978 = vmatpush1.msra.mxu0 0.0
    %2979 = vmatprep.subr.mxu0 0.0
    %2980 = vmatpush1.msra.mxu0 0.0
    %2981 = vmatprep.subr.mxu0 0.0
    %2982 = vmatpush1.msra.mxu0 0.0
    %2983 = vmatprep.subr.mxu0 0.0
    %2984 = vmatpush1.msra.mxu0 0.0
    %2985 = vmatprep.subr.mxu0 0.0
    %2986 = vmatpush1.msra.mxu0 0.0
    %2987 = vmatprep.subr.mxu0 0.0
    %2988 = vmatpush1.msra.mxu0 0.0
    %2989 = vmatprep.subr.mxu0 0.0
    %2990 = vmatpush1.msra.mxu0 0.0
    %2991 = vmatprep.subr.mxu0 0.0
    %2992 = vmatpush1.msra.mxu0 0.0
    %2993 = vmatprep.subr.mxu0 0.0
    %2994 = vmatpush1.msra.mxu0 0.0
    %2995 = vmatprep.subr.mxu0 0.0
    %2996 = vmatpush1.msra.mxu0 0.0
    %2997 = vmatprep.subr.mxu0 0.0
    %2998 = vmatpush1.msra.mxu0 0.0
    %2999 = vmatprep.subr.mxu0 0.0
    %3000 = vmatpush1.msra.mxu0 0.0
    %3001 = vmatprep.subr.mxu0 0.0
    %3002 = vmatpush1.msra.mxu0 0.0
    %3003 = vmatprep.subr.mxu0 0.0
    %3004 = vmatpush1.msra.mxu0 0.0
    %3005 = vmatprep.subr.mxu0 0.0
    %3006 = vmatpush1.msra.mxu0 0.0
    %3007 = vmatprep.subr.mxu0 0.0
    %3008 = vmatpush1.msra.mxu0 0.0
    %3009 = vmatprep.subr.mxu0 0.0
    %3010 = vmatpush1.msra.mxu0 0.0
    %3011 = vmatprep.subr.mxu0 0.0
    %3012 = vmatpush1.msra.mxu0 0.0
    %3013 = vmatprep.subr.mxu0 0.0
    %3014 = vmatpush1.msra.mxu0 0.0
    %3015 = vmatprep.subr.mxu0 0.0
    %3016 = vmatpush1.msra.mxu0 0.0
    %3017 = vmatprep.subr.mxu0 0.0
    %3018 = vmatpush1.msra.mxu0 0.0
    %3019 = vmatprep.subr.mxu0 0.0
    %3020 = vmatpush1.msra.mxu0 0.0
    %3021 = vmatprep.subr.mxu0 0.0
    %3022 = vmatpush1.msra.mxu0 0.0
    %3023 = vmatprep.mubr.f32.mxu0 0.0
    %3024 = vmatmul.mubr.f32.gmra.mrb[0].mxu0 %v2778
    %v3025 = vpop.f32.mrb[0].mxu0
    %v3026 = vadd.f32 %v2954, %v3025
    %v3027 = vpop.f32.mrb[0].mxu0
    %3028 = vmatprep.mubr.f32.mxu0 0.0
    %3029 = vmatmul.mubr.f32.gmra.mrb[0].mxu0 %v2781
    %v3030 = vpop.f32.mrb[0].mxu0
    %v3031 = vadd.f32 %v2954, %v3030
    %v3032 = vpop.f32.mrb[0].mxu0
    %3033 = vdwg.mxu0
    %v3034 = vmax.f32 %v3026, 0.0
    %v3035 = vmax.f32 %v3031, 0.0
    %v3036 = vld [vmem:[#allocation13] sm:$0x1]
    %v3038 = vlaneseq
    %v3039 = vshrl.u32 %v3038, 7
    %v3040 = vsub.s32 0, %v3039
    %v3041 = vrot.slane %v3036, %v3040
    %3044 = vrot.lane.b32.xlu0 %v2762, 96
    %v3045 = vpop.permute.xlu0 %3044
    %3046 = vrot.lane.b32.xlu0 %v2767, 96
    %v3047 = vpop.permute.xlu0 %3046
    %v3050 = vsel %vm2558, %v2608, 0
    %v3053 = vsel %vm2558, %v2609, 0
    %v3055 = vsel %vm2783, %v3047, 0
    %3057 = vmatprep.subr.mxu0 0.0
    %3058 = vmatpush1.msra.mxu0 %v3045
    %3059 = vmatprep.subr.mxu0 0.0
    %3060 = vmatpush1.msra.mxu0 %v3055
    %3061 = vmatprep.subr.mxu0 0.0
    %3062 = vmatpush1.msra.mxu0 0.0
    %3063 = vmatprep.subr.mxu0 0.0
    %3064 = vmatpush1.msra.mxu0 0.0
    %3065 = vmatprep.subr.mxu0 0.0
    %3066 = vmatpush1.msra.mxu0 0.0
    %3067 = vmatprep.subr.mxu0 0.0
    %3068 = vmatpush1.msra.mxu0 0.0
    %3069 = vmatprep.subr.mxu0 0.0
    %3070 = vmatpush1.msra.mxu0 0.0
    %3071 = vmatprep.subr.mxu0 0.0
    %3072 = vmatpush1.msra.mxu0 0.0
    %3073 = vmatprep.subr.mxu0 0.0
    %3074 = vmatpush1.msra.mxu0 0.0
    %3075 = vmatprep.subr.mxu0 0.0
    %3076 = vmatpush1.msra.mxu0 0.0
    %3077 = vmatprep.subr.mxu0 0.0
    %3078 = vmatpush1.msra.mxu0 0.0
    %3079 = vmatprep.subr.mxu0 0.0
    %3080 = vmatpush1.msra.mxu0 0.0
    %3081 = vmatprep.subr.mxu0 0.0
    %3082 = vmatpush1.msra.mxu0 0.0
    %3083 = vmatprep.subr.mxu0 0.0
    %3084 = vmatpush1.msra.mxu0 0.0
    %3085 = vmatprep.subr.mxu0 0.0
    %3086 = vmatpush1.msra.mxu0 0.0
    %3087 = vmatprep.subr.mxu0 0.0
    %3088 = vmatpush1.msra.mxu0 0.0
    %3089 = vmatprep.subr.mxu0 0.0
    %3090 = vmatpush1.msra.mxu0 0.0
    %3091 = vmatprep.subr.mxu0 0.0
    %3092 = vmatpush1.msra.mxu0 0.0
    %3093 = vmatprep.subr.mxu0 0.0
    %3094 = vmatpush1.msra.mxu0 0.0
    %3095 = vmatprep.subr.mxu0 0.0
    %3096 = vmatpush1.msra.mxu0 0.0
    %3097 = vmatprep.subr.mxu0 0.0
    %3098 = vmatpush1.msra.mxu0 0.0
    %3099 = vmatprep.subr.mxu0 0.0
    %3100 = vmatpush1.msra.mxu0 0.0
    %3101 = vmatprep.subr.mxu0 0.0
    %3102 = vmatpush1.msra.mxu0 0.0
    %3103 = vmatprep.subr.mxu0 0.0
    %3104 = vmatpush1.msra.mxu0 0.0
    %3105 = vmatprep.subr.mxu0 0.0
    %3106 = vmatpush1.msra.mxu0 0.0
    %3107 = vmatprep.subr.mxu0 0.0
    %3108 = vmatpush1.msra.mxu0 0.0
    %3109 = vmatprep.subr.mxu0 0.0
    %3110 = vmatpush1.msra.mxu0 0.0
    %3111 = vmatprep.subr.mxu0 0.0
    %3112 = vmatpush1.msra.mxu0 0.0
    %3113 = vmatprep.subr.mxu0 0.0
    %3114 = vmatpush1.msra.mxu0 0.0
    %3115 = vmatprep.subr.mxu0 0.0
    %3116 = vmatpush1.msra.mxu0 0.0
    %3117 = vmatprep.subr.mxu0 0.0
    %3118 = vmatpush1.msra.mxu0 0.0
    %3119 = vmatprep.subr.mxu0 0.0
    %3120 = vmatpush1.msra.mxu0 0.0
    %3121 = vmatprep.mubr.f32.mxu0 0.0
    %3122 = vmatmul.mubr.f32.gmra.mrb[0].mxu0 %v3050
    %v3123 = vpop.f32.mrb[0].mxu0
    %v3124 = vadd.f32 %v3041, %v3123
    %v3125 = vpop.f32.mrb[0].mxu0
    %3126 = vmatprep.mubr.f32.mxu0 0.0
    %3127 = vmatmul.mubr.f32.gmra.mrb[0].mxu0 %v3053
    %v3128 = vpop.f32.mrb[0].mxu0
    %v3129 = vadd.f32 %v3041, %v3128
    %v3130 = vpop.f32.mrb[0].mxu0
    %3131 = vdwg.mxu0
    %v3132 = vmax.f32 %v3124, 0.0
    %v3133 = vmax.f32 %v3129, 0.0
    %v3134 = vld [vmem:[#allocation17] sm:$0xff]
    %v3135 = vld [vmem:[#allocation17 + $0x8] sm:$0xff]
    %v3136 = vld [vmem:[#allocation17 + $0x10] sm:$0xff]
    %v3137 = vld [vmem:[#allocation17 + $0x18] sm:$0xff]
    %v3139 = vsel %vm932, %v3132, 0
    %v3142 = vsel %vm932, %v3133, 0
    %3144 = vmatprep.subr.mxu0 0.0
    %3145 = vmatpush1.msra.mxu0 %v3134
    %3146 = vmatprep.subr.mxu0 0.0
    %3147 = vmatpush1.msra.mxu0 %v3135
    %3148 = vmatprep.subr.mxu0 0.0
    %3149 = vmatpush1.msra.mxu0 %v3136
    %3150 = vmatprep.subr.mxu0 0.0
    %3151 = vmatpush1.msra.mxu0 %v3137
    %3152 = vmatprep.subr.mxu0 0.0
    %3153 = vmatpush1.msra.mxu0 0.0
    %3154 = vmatprep.subr.mxu0 0.0
    %3155 = vmatpush1.msra.mxu0 0.0
    %3156 = vmatprep.subr.mxu0 0.0
    %3157 = vmatpush1.msra.mxu0 0.0
    %3158 = vmatprep.subr.mxu0 0.0
    %3159 = vmatpush1.msra.mxu0 0.0
    %3160 = vmatprep.subr.mxu0 0.0
    %3161 = vmatpush1.msra.mxu0 0.0
    %3162 = vmatprep.subr.mxu0 0.0
    %3163 = vmatpush1.msra.mxu0 0.0
    %3164 = vmatprep.subr.mxu0 0.0
    %3165 = vmatpush1.msra.mxu0 0.0
    %3166 = vmatprep.subr.mxu0 0.0
    %3167 = vmatpush1.msra.mxu0 0.0
    %3168 = vmatprep.subr.mxu0 0.0
    %3169 = vmatpush1.msra.mxu0 0.0
    %3170 = vmatprep.subr.mxu0 0.0
    %3171 = vmatpush1.msra.mxu0 0.0
    %3172 = vmatprep.subr.mxu0 0.0
    %3173 = vmatpush1.msra.mxu0 0.0
    %3174 = vmatprep.subr.mxu0 0.0
    %3175 = vmatpush1.msra.mxu0 0.0
    %3176 = vmatprep.subr.mxu0 0.0
    %3177 = vmatpush1.msra.mxu0 0.0
    %3178 = vmatprep.subr.mxu0 0.0
    %3179 = vmatpush1.msra.mxu0 0.0
    %3180 = vmatprep.subr.mxu0 0.0
    %3181 = vmatpush1.msra.mxu0 0.0
    %3182 = vmatprep.subr.mxu0 0.0
    %3183 = vmatpush1.msra.mxu0 0.0
    %3184 = vmatprep.subr.mxu0 0.0
    %3185 = vmatpush1.msra.mxu0 0.0
    %3186 = vmatprep.subr.mxu0 0.0
    %3187 = vmatpush1.msra.mxu0 0.0
    %3188 = vmatprep.subr.mxu0 0.0
    %3189 = vmatpush1.msra.mxu0 0.0
    %3190 = vmatprep.subr.mxu0 0.0
    %3191 = vmatpush1.msra.mxu0 0.0
    %3192 = vmatprep.subr.mxu0 0.0
    %3193 = vmatpush1.msra.mxu0 0.0
    %3194 = vmatprep.subr.mxu0 0.0
    %3195 = vmatpush1.msra.mxu0 0.0
    %3196 = vmatprep.subr.mxu0 0.0
    %3197 = vmatpush1.msra.mxu0 0.0
    %3198 = vmatprep.subr.mxu0 0.0
    %3199 = vmatpush1.msra.mxu0 0.0
    %3200 = vmatprep.subr.mxu0 0.0
    %3201 = vmatpush1.msra.mxu0 0.0
    %3202 = vmatprep.subr.mxu0 0.0
    %3203 = vmatpush1.msra.mxu0 0.0
    %3204 = vmatprep.subr.mxu0 0.0
    %3205 = vmatpush1.msra.mxu0 0.0
    %3206 = vmatprep.subr.mxu0 0.0
    %3207 = vmatpush1.msra.mxu0 0.0
    %3208 = vmatprep.mubr.f32.mxu0 0.0
    %3209 = vmatmul.mubr.f32.gmra.mrb[0].mxu0 %v3139
    %v3210 = vpop.f32.mrb[0].mxu0
    %v3211 = vadd.f32 0.0, %v3210
    %v3212 = vpop.f32.mrb[0].mxu0
    %3213 = vmatprep.mubr.f32.mxu0 0.0
    %3214 = vmatmul.mubr.f32.gmra.mrb[0].mxu0 %v3142
    %v3215 = vpop.f32.mrb[0].mxu0
    %v3216 = vadd.f32 0.0, %v3215
    %v3217 = vpop.f32.mrb[0].mxu0
    %3218 = vdwg.mxu0
    %v3219 = vld [vmem:[#allocation14] sm:$0x1]
    %v3221 = vlaneseq
    %v3222 = vshrl.u32 %v3221, 7
    %v3223 = vsub.s32 0, %v3222
    %v3224 = vrot.slane %v3219, %v3223
    %v3227 = vsel %vm2783, %v3216, 0
    %3229 = vmatprep.subr.mxu0 0.0
    %3230 = vmatpush1.msra.mxu0 %v3211
    %3231 = vmatprep.subr.mxu0 0.0
    %3232 = vmatpush1.msra.mxu0 %v3227
    %3233 = vmatprep.subr.mxu0 0.0
    %3234 = vmatpush1.msra.mxu0 0.0
    %3235 = vmatprep.subr.mxu0 0.0
    %3236 = vmatpush1.msra.mxu0 0.0
    %3237 = vmatprep.subr.mxu0 0.0
    %3238 = vmatpush1.msra.mxu0 0.0
    %3239 = vmatprep.subr.mxu0 0.0
    %3240 = vmatpush1.msra.mxu0 0.0
    %3241 = vmatprep.subr.mxu0 0.0
    %3242 = vmatpush1.msra.mxu0 0.0
    %3243 = vmatprep.subr.mxu0 0.0
    %3244 = vmatpush1.msra.mxu0 0.0
    %3245 = vmatprep.subr.mxu0 0.0
    %3246 = vmatpush1.msra.mxu0 0.0
    %3247 = vmatprep.subr.mxu0 0.0
    %3248 = vmatpush1.msra.mxu0 0.0
    %3249 = vmatprep.subr.mxu0 0.0
    %3250 = vmatpush1.msra.mxu0 0.0
    %3251 = vmatprep.subr.mxu0 0.0
    %3252 = vmatpush1.msra.mxu0 0.0
    %3253 = vmatprep.subr.mxu0 0.0
    %3254 = vmatpush1.msra.mxu0 0.0
    %3255 = vmatprep.subr.mxu0 0.0
    %3256 = vmatpush1.msra.mxu0 0.0
    %3257 = vmatprep.subr.mxu0 0.0
    %3258 = vmatpush1.msra.mxu0 0.0
    %3259 = vmatprep.subr.mxu0 0.0
    %3260 = vmatpush1.msra.mxu0 0.0
    %3261 = vmatprep.subr.mxu0 0.0
    %3262 = vmatpush1.msra.mxu0 0.0
    %3263 = vmatprep.subr.mxu0 0.0
    %3264 = vmatpush1.msra.mxu0 0.0
    %3265 = vmatprep.subr.mxu0 0.0
    %3266 = vmatpush1.msra.mxu0 0.0
    %3267 = vmatprep.subr.mxu0 0.0
    %3268 = vmatpush1.msra.mxu0 0.0
    %3269 = vmatprep.subr.mxu0 0.0
    %3270 = vmatpush1.msra.mxu0 0.0
    %3271 = vmatprep.subr.mxu0 0.0
    %3272 = vmatpush1.msra.mxu0 0.0
    %3273 = vmatprep.subr.mxu0 0.0
    %3274 = vmatpush1.msra.mxu0 0.0
    %3275 = vmatprep.subr.mxu0 0.0
    %3276 = vmatpush1.msra.mxu0 0.0
    %3277 = vmatprep.subr.mxu0 0.0
    %3278 = vmatpush1.msra.mxu0 0.0
    %3279 = vmatprep.subr.mxu0 0.0
    %3280 = vmatpush1.msra.mxu0 0.0
    %3281 = vmatprep.subr.mxu0 0.0
    %3282 = vmatpush1.msra.mxu0 0.0
    %3283 = vmatprep.subr.mxu0 0.0
    %3284 = vmatpush1.msra.mxu0 0.0
    %3285 = vmatprep.subr.mxu0 0.0
    %3286 = vmatpush1.msra.mxu0 0.0
    %3287 = vmatprep.subr.mxu0 0.0
    %3288 = vmatpush1.msra.mxu0 0.0
    %3289 = vmatprep.subr.mxu0 0.0
    %3290 = vmatpush1.msra.mxu0 0.0
    %3291 = vmatprep.subr.mxu0 0.0
    %3292 = vmatpush1.msra.mxu0 0.0
    %3293 = vmatprep.mubr.f32.mxu0 0.0
    %3294 = vmatmul.mubr.f32.gmra.mrb[0].mxu0 %v3050
    %v3295 = vpop.f32.mrb[0].mxu0
    %v3296 = vadd.f32 %v3224, %v3295
    %v3297 = vpop.f32.mrb[0].mxu0
    %3298 = vmatprep.mubr.f32.mxu0 0.0
    %3299 = vmatmul.mubr.f32.gmra.mrb[0].mxu0 %v3053
    %v3300 = vpop.f32.mrb[0].mxu0
    %v3301 = vadd.f32 %v3224, %v3300
    %v3302 = vpop.f32.mrb[0].mxu0
    %3303 = vdwg.mxu0
    %v3304 = vmax.f32 %v3296, 0.0
    %v3305 = vmax.f32 %v3301, 0.0
    %v3306 = vld [vmem:[#allocation19] sm:$0x1]
    %v3308 = vlaneseq
    %v3309 = vshrl.u32 %v3308, 7
    %v3310 = vsub.s32 0, %v3309
    %v3311 = vrot.slane %v3306, %v3310
    %3313 = vrot.lane.b32.xlu0 %v2762, 64
    %v3314 = vpop.permute.xlu0 %3313
    %3315 = vrot.lane.b32.xlu0 %v2767, 64
    %v3316 = vpop.permute.xlu0 %3315
    %v3319 = vsel %vm2558, %v2635, 0
    %v3322 = vsel %vm2558, %v2636, 0
    %v3324 = vsel %vm2783, %v3316, 0
    %3326 = vmatprep.subr.mxu0 0.0
    %3327 = vmatpush1.msra.mxu0 %v3314
    %3328 = vmatprep.subr.mxu0 0.0
    %3329 = vmatpush1.msra.mxu0 %v3324
    %3330 = vmatprep.subr.mxu0 0.0
    %3331 = vmatpush1.msra.mxu0 0.0
    %3332 = vmatprep.subr.mxu0 0.0
    %3333 = vmatpush1.msra.mxu0 0.0
    %3334 = vmatprep.subr.mxu0 0.0
    %3335 = vmatpush1.msra.mxu0 0.0
    %3336 = vmatprep.subr.mxu0 0.0
    %3337 = vmatpush1.msra.mxu0 0.0
    %3338 = vmatprep.subr.mxu0 0.0
    %3339 = vmatpush1.msra.mxu0 0.0
    %3340 = vmatprep.subr.mxu0 0.0
    %3341 = vmatpush1.msra.mxu0 0.0
    %3342 = vmatprep.subr.mxu0 0.0
    %3343 = vmatpush1.msra.mxu0 0.0
    %3344 = vmatprep.subr.mxu0 0.0
    %3345 = vmatpush1.msra.mxu0 0.0
    %3346 = vmatprep.subr.mxu0 0.0
    %3347 = vmatpush1.msra.mxu0 0.0
    %3348 = vmatprep.subr.mxu0 0.0
    %3349 = vmatpush1.msra.mxu0 0.0
    %3350 = vmatprep.subr.mxu0 0.0
    %3351 = vmatpush1.msra.mxu0 0.0
    %3352 = vmatprep.subr.mxu0 0.0
    %3353 = vmatpush1.msra.mxu0 0.0
    %3354 = vmatprep.subr.mxu0 0.0
    %3355 = vmatpush1.msra.mxu0 0.0
    %3356 = vmatprep.subr.mxu0 0.0
    %3357 = vmatpush1.msra.mxu0 0.0
    %3358 = vmatprep.subr.mxu0 0.0
    %3359 = vmatpush1.msra.mxu0 0.0
    %3360 = vmatprep.subr.mxu0 0.0
    %3361 = vmatpush1.msra.mxu0 0.0
    %3362 = vmatprep.subr.mxu0 0.0
    %3363 = vmatpush1.msra.mxu0 0.0
    %3364 = vmatprep.subr.mxu0 0.0
    %3365 = vmatpush1.msra.mxu0 0.0
    %3366 = vmatprep.subr.mxu0 0.0
    %3367 = vmatpush1.msra.mxu0 0.0
    %3368 = vmatprep.subr.mxu0 0.0
    %3369 = vmatpush1.msra.mxu0 0.0
    %3370 = vmatprep.subr.mxu0 0.0
    %3371 = vmatpush1.msra.mxu0 0.0
    %3372 = vmatprep.subr.mxu0 0.0
    %3373 = vmatpush1.msra.mxu0 0.0
    %3374 = vmatprep.subr.mxu0 0.0
    %3375 = vmatpush1.msra.mxu0 0.0
    %3376 = vmatprep.subr.mxu0 0.0
    %3377 = vmatpush1.msra.mxu0 0.0
    %3378 = vmatprep.subr.mxu0 0.0
    %3379 = vmatpush1.msra.mxu0 0.0
    %3380 = vmatprep.subr.mxu0 0.0
    %3381 = vmatpush1.msra.mxu0 0.0
    %3382 = vmatprep.subr.mxu0 0.0
    %3383 = vmatpush1.msra.mxu0 0.0
    %3384 = vmatprep.subr.mxu0 0.0
    %3385 = vmatpush1.msra.mxu0 0.0
    %3386 = vmatprep.subr.mxu0 0.0
    %3387 = vmatpush1.msra.mxu0 0.0
    %3388 = vmatprep.subr.mxu0 0.0
    %3389 = vmatpush1.msra.mxu0 0.0
    %3390 = vmatprep.mubr.f32.mxu0 0.0
    %3391 = vmatmul.mubr.f32.gmra.mrb[0].mxu0 %v3319
    %v3392 = vpop.f32.mrb[0].mxu0
    %v3393 = vadd.f32 %v3311, %v3392
    %v3394 = vpop.f32.mrb[0].mxu0
    %3395 = vmatprep.mubr.f32.mxu0 0.0
    %3396 = vmatmul.mubr.f32.gmra.mrb[0].mxu0 %v3322
    %v3397 = vpop.f32.mrb[0].mxu0
    %v3398 = vadd.f32 %v3311, %v3397
    %v3399 = vpop.f32.mrb[0].mxu0
    %3400 = vdwg.mxu0
    %v3401 = vmax.f32 %v3393, 0.0
    %v3402 = vmax.f32 %v3398, 0.0
    %v3403 = vld [vmem:[#allocation23] sm:$0xff]
    %v3404 = vld [vmem:[#allocation23 + $0x8] sm:$0xff]
    %v3405 = vld [vmem:[#allocation23 + $0x10] sm:$0xff]
    %v3406 = vld [vmem:[#allocation23 + $0x18] sm:$0xff]
    %v3408 = vsel %vm932, %v3401, 0
    %v3411 = vsel %vm932, %v3402, 0
    %3413 = vmatprep.subr.mxu0 0.0
    %3414 = vmatpush1.msra.mxu0 %v3403
    %3415 = vmatprep.subr.mxu0 0.0
    %3416 = vmatpush1.msra.mxu0 %v3404
    %3417 = vmatprep.subr.mxu0 0.0
    %3418 = vmatpush1.msra.mxu0 %v3405
    %3419 = vmatprep.subr.mxu0 0.0
    %3420 = vmatpush1.msra.mxu0 %v3406
    %3421 = vmatprep.subr.mxu0 0.0
    %3422 = vmatpush1.msra.mxu0 0.0
    %3423 = vmatprep.subr.mxu0 0.0
    %3424 = vmatpush1.msra.mxu0 0.0
    %3425 = vmatprep.subr.mxu0 0.0
    %3426 = vmatpush1.msra.mxu0 0.0
    %3427 = vmatprep.subr.mxu0 0.0
    %3428 = vmatpush1.msra.mxu0 0.0
    %3429 = vmatprep.subr.mxu0 0.0
    %3430 = vmatpush1.msra.mxu0 0.0
    %3431 = vmatprep.subr.mxu0 0.0
    %3432 = vmatpush1.msra.mxu0 0.0
    %3433 = vmatprep.subr.mxu0 0.0
    %3434 = vmatpush1.msra.mxu0 0.0
    %3435 = vmatprep.subr.mxu0 0.0
    %3436 = vmatpush1.msra.mxu0 0.0
    %3437 = vmatprep.subr.mxu0 0.0
    %3438 = vmatpush1.msra.mxu0 0.0
    %3439 = vmatprep.subr.mxu0 0.0
    %3440 = vmatpush1.msra.mxu0 0.0
    %3441 = vmatprep.subr.mxu0 0.0
    %3442 = vmatpush1.msra.mxu0 0.0
    %3443 = vmatprep.subr.mxu0 0.0
    %3444 = vmatpush1.msra.mxu0 0.0
    %3445 = vmatprep.subr.mxu0 0.0
    %3446 = vmatpush1.msra.mxu0 0.0
    %3447 = vmatprep.subr.mxu0 0.0
    %3448 = vmatpush1.msra.mxu0 0.0
    %3449 = vmatprep.subr.mxu0 0.0
    %3450 = vmatpush1.msra.mxu0 0.0
    %3451 = vmatprep.subr.mxu0 0.0
    %3452 = vmatpush1.msra.mxu0 0.0
    %3453 = vmatprep.subr.mxu0 0.0
    %3454 = vmatpush1.msra.mxu0 0.0
    %3455 = vmatprep.subr.mxu0 0.0
    %3456 = vmatpush1.msra.mxu0 0.0
    %3457 = vmatprep.subr.mxu0 0.0
    %3458 = vmatpush1.msra.mxu0 0.0
    %3459 = vmatprep.subr.mxu0 0.0
    %3460 = vmatpush1.msra.mxu0 0.0
    %3461 = vmatprep.subr.mxu0 0.0
    %3462 = vmatpush1.msra.mxu0 0.0
    %3463 = vmatprep.subr.mxu0 0.0
    %3464 = vmatpush1.msra.mxu0 0.0
    %3465 = vmatprep.subr.mxu0 0.0
    %3466 = vmatpush1.msra.mxu0 0.0
    %3467 = vmatprep.subr.mxu0 0.0
    %3468 = vmatpush1.msra.mxu0 0.0
    %3469 = vmatprep.subr.mxu0 0.0
    %3470 = vmatpush1.msra.mxu0 0.0
    %3471 = vmatprep.subr.mxu0 0.0
    %3472 = vmatpush1.msra.mxu0 0.0
    %3473 = vmatprep.subr.mxu0 0.0
    %3474 = vmatpush1.msra.mxu0 0.0
    %3475 = vmatprep.subr.mxu0 0.0
    %3476 = vmatpush1.msra.mxu0 0.0
    %3477 = vmatprep.mubr.f32.mxu0 0.0
    %3478 = vmatmul.mubr.f32.gmra.mrb[0].mxu0 %v3408
    %v3479 = vpop.f32.mrb[0].mxu0
    %v3480 = vadd.f32 0.0, %v3479
    %v3481 = vpop.f32.mrb[0].mxu0
    %3482 = vmatprep.mubr.f32.mxu0 0.0
    %3483 = vmatmul.mubr.f32.gmra.mrb[0].mxu0 %v3411
    %v3484 = vpop.f32.mrb[0].mxu0
    %v3485 = vadd.f32 0.0, %v3484
    %v3486 = vpop.f32.mrb[0].mxu0
    %3487 = vdwg.mxu0
    %v3488 = vld [vmem:[#allocation20] sm:$0x1]
    %v3490 = vlaneseq
    %v3491 = vshrl.u32 %v3490, 7
    %v3492 = vsub.s32 0, %v3491
    %v3493 = vrot.slane %v3488, %v3492
    %v3496 = vsel %vm2783, %v3485, 0
    %3498 = vmatprep.subr.mxu0 0.0
    %3499 = vmatpush1.msra.mxu0 %v3480
    %3500 = vmatprep.subr.mxu0 0.0
    %3501 = vmatpush1.msra.mxu0 %v3496
    %3502 = vmatprep.subr.mxu0 0.0
    %3503 = vmatpush1.msra.mxu0 0.0
    %3504 = vmatprep.subr.mxu0 0.0
    %3505 = vmatpush1.msra.mxu0 0.0
    %3506 = vmatprep.subr.mxu0 0.0
    %3507 = vmatpush1.msra.mxu0 0.0
    %3508 = vmatprep.subr.mxu0 0.0
    %3509 = vmatpush1.msra.mxu0 0.0
    %3510 = vmatprep.subr.mxu0 0.0
    %3511 = vmatpush1.msra.mxu0 0.0
    %3512 = vmatprep.subr.mxu0 0.0
    %3513 = vmatpush1.msra.mxu0 0.0
    %3514 = vmatprep.subr.mxu0 0.0
    %3515 = vmatpush1.msra.mxu0 0.0
    %3516 = vmatprep.subr.mxu0 0.0
    %3517 = vmatpush1.msra.mxu0 0.0
    %3518 = vmatprep.subr.mxu0 0.0
    %3519 = vmatpush1.msra.mxu0 0.0
    %3520 = vmatprep.subr.mxu0 0.0
    %3521 = vmatpush1.msra.mxu0 0.0
    %3522 = vmatprep.subr.mxu0 0.0
    %3523 = vmatpush1.msra.mxu0 0.0
    %3524 = vmatprep.subr.mxu0 0.0
    %3525 = vmatpush1.msra.mxu0 0.0
    %3526 = vmatprep.subr.mxu0 0.0
    %3527 = vmatpush1.msra.mxu0 0.0
    %3528 = vmatprep.subr.mxu0 0.0
    %3529 = vmatpush1.msra.mxu0 0.0
    %3530 = vmatprep.subr.mxu0 0.0
    %3531 = vmatpush1.msra.mxu0 0.0
    %3532 = vmatprep.subr.mxu0 0.0
    %3533 = vmatpush1.msra.mxu0 0.0
    %3534 = vmatprep.subr.mxu0 0.0
    %3535 = vmatpush1.msra.mxu0 0.0
    %3536 = vmatprep.subr.mxu0 0.0
    %3537 = vmatpush1.msra.mxu0 0.0
    %3538 = vmatprep.subr.mxu0 0.0
    %3539 = vmatpush1.msra.mxu0 0.0
    %3540 = vmatprep.subr.mxu0 0.0
    %3541 = vmatpush1.msra.mxu0 0.0
    %3542 = vmatprep.subr.mxu0 0.0
    %3543 = vmatpush1.msra.mxu0 0.0
    %3544 = vmatprep.subr.mxu0 0.0
    %3545 = vmatpush1.msra.mxu0 0.0
    %3546 = vmatprep.subr.mxu0 0.0
    %3547 = vmatpush1.msra.mxu0 0.0
    %3548 = vmatprep.subr.mxu0 0.0
    %3549 = vmatpush1.msra.mxu0 0.0
    %3550 = vmatprep.subr.mxu0 0.0
    %3551 = vmatpush1.msra.mxu0 0.0
    %3552 = vmatprep.subr.mxu0 0.0
    %3553 = vmatpush1.msra.mxu0 0.0
    %3554 = vmatprep.subr.mxu0 0.0
    %3555 = vmatpush1.msra.mxu0 0.0
    %3556 = vmatprep.subr.mxu0 0.0
    %3557 = vmatpush1.msra.mxu0 0.0
    %3558 = vmatprep.subr.mxu0 0.0
    %3559 = vmatpush1.msra.mxu0 0.0
    %3560 = vmatprep.subr.mxu0 0.0
    %3561 = vmatpush1.msra.mxu0 0.0
    %3562 = vmatprep.mubr.f32.mxu0 0.0
    %3563 = vmatmul.mubr.f32.gmra.mrb[0].mxu0 %v3319
    %v3564 = vpop.f32.mrb[0].mxu0
    %v3565 = vadd.f32 %v3493, %v3564
    %v3566 = vpop.f32.mrb[0].mxu0
    %3567 = vmatprep.mubr.f32.mxu0 0.0
    %3568 = vmatmul.mubr.f32.gmra.mrb[0].mxu0 %v3322
    %v3569 = vpop.f32.mrb[0].mxu0
    %v3570 = vadd.f32 %v3493, %v3569
    %v3571 = vpop.f32.mrb[0].mxu0
    %3572 = vdwg.mxu0
    %v3573 = vmax.f32 %v3565, 0.0
    %v3574 = vmax.f32 %v3570, 0.0
    %v3577 = vrot.slane %v3304, 4
    %v3578 = vrot.slane %v3305, 4
    %v3579 = vsel %vm2783, %v3577, %v3578
    %v3581 = vsel %vm2783, %v3035, %v3577
    %v3582 = vld [vmem:[#allocation29] sm:$0xff]
    %v3583 = vld [vmem:[#allocation29 + $0x8] sm:$0xff]
    %v3584 = vld [vmem:[#allocation29 + $0x10] sm:$0xff]
    %v3585 = vld [vmem:[#allocation29 + $0x18] sm:$0xff]
    %v3586 = vld [vmem:[#allocation29 + $0x20] sm:$0xff]
    %v3587 = vld [vmem:[#allocation29 + $0x28] sm:$0xff]
    %v3588 = vld [vmem:[#allocation29 + $0x30] sm:$0xff]
    %v3589 = vld [vmem:[#allocation29 + $0x38] sm:$0xff]
    %v3590 = vld [vmem:[%s43] sm:$0x3]
    %v3592 = vlaneseq
    %v3593 = vshrl.u32 %v3592, 7
    %v3594 = vsub.s32 0, %v3593
    %v3595 = vrot.slane %v3590, %v3594
    %v3596 = vlaneseq
    %v3597 = vshrl.u32 %v3596, 7
    %v3598 = vsub.s32 1, %v3597
    %v3599 = vrot.slane %v3590, %v3598
    %v3603 = vsel %vm932, %v3034, 0
    %v3606 = vsel %vm932, %v3581, 0
    %v3608 = vsel %vm932, %v3579, 0
    %v3611 = vsel %vm932, %v3573, 0
    %v3614 = vsel %vm932, %v3574, 0
    %3616 = vmatprep.subr.mxu0 %v3583
    %3617 = vmatpush1.msra.mxu0 %v3582
    %3618 = vmatprep.subr.mxu0 %v3585
    %3619 = vmatpush1.msra.mxu0 %v3584
    %3620 = vmatprep.subr.mxu0 %v3587
    %3621 = vmatpush1.msra.mxu0 %v3586
    %3622 = vmatprep.subr.mxu0 %v3589
    %3623 = vmatpush1.msra.mxu0 %v3588
    %3624 = vmatprep.subr.mxu0 0.0
    %3625 = vmatpush1.msra.mxu0 0.0
    %3626 = vmatprep.subr.mxu0 0.0
    %3627 = vmatpush1.msra.mxu0 0.0
    %3628 = vmatprep.subr.mxu0 0.0
    %3629 = vmatpush1.msra.mxu0 0.0
    %3630 = vmatprep.subr.mxu0 0.0
    %3631 = vmatpush1.msra.mxu0 0.0
    %3632 = vmatprep.subr.mxu0 0.0
    %3633 = vmatpush1.msra.mxu0 0.0
    %3634 = vmatprep.subr.mxu0 0.0
    %3635 = vmatpush1.msra.mxu0 0.0
    %3636 = vmatprep.subr.mxu0 0.0
    %3637 = vmatpush1.msra.mxu0 0.0
    %3638 = vmatprep.subr.mxu0 0.0
    %3639 = vmatpush1.msra.mxu0 0.0
    %3640 = vmatprep.subr.mxu0 0.0
    %3641 = vmatpush1.msra.mxu0 0.0
    %3642 = vmatprep.subr.mxu0 0.0
    %3643 = vmatpush1.msra.mxu0 0.0
    %3644 = vmatprep.subr.mxu0 0.0
    %3645 = vmatpush1.msra.mxu0 0.0
    %3646 = vmatprep.subr.mxu0 0.0
    %3647 = vmatpush1.msra.mxu0 0.0
    %3648 = vmatprep.subr.mxu0 0.0
    %3649 = vmatpush1.msra.mxu0 0.0
    %3650 = vmatprep.subr.mxu0 0.0
    %3651 = vmatpush1.msra.mxu0 0.0
    %3652 = vmatprep.subr.mxu0 0.0
    %3653 = vmatpush1.msra.mxu0 0.0
    %3654 = vmatprep.subr.mxu0 0.0
    %3655 = vmatpush1.msra.mxu0 0.0
    %3656 = vmatprep.subr.mxu0 0.0
    %3657 = vmatpush1.msra.mxu0 0.0
    %3658 = vmatprep.subr.mxu0 0.0
    %3659 = vmatpush1.msra.mxu0 0.0
    %3660 = vmatprep.subr.mxu0 0.0
    %3661 = vmatpush1.msra.mxu0 0.0
    %3662 = vmatprep.subr.mxu0 0.0
    %3663 = vmatpush1.msra.mxu0 0.0
    %3664 = vmatprep.subr.mxu0 0.0
    %3665 = vmatpush1.msra.mxu0 0.0
    %3666 = vmatprep.subr.mxu0 0.0
    %3667 = vmatpush1.msra.mxu0 0.0
    %3668 = vmatprep.subr.mxu0 0.0
    %3669 = vmatpush1.msra.mxu0 0.0
    %3670 = vmatprep.subr.mxu0 0.0
    %3671 = vmatpush1.msra.mxu0 0.0
    %3672 = vmatprep.subr.mxu0 0.0
    %3673 = vmatpush1.msra.mxu0 0.0
    %3674 = vmatprep.subr.mxu0 0.0
    %3675 = vmatpush1.msra.mxu0 0.0
    %3676 = vmatprep.subr.mxu0 0.0
    %3677 = vmatpush1.msra.mxu0 0.0
    %3678 = vmatprep.subr.mxu0 0.0
    %3679 = vmatpush1.msra.mxu0 0.0
    %3680 = vmatprep.mubr.f32.mxu0 0.0
    %3681 = vmatmul.mubr.f32.gmra.mrb[0].mxu0 %v3603
    %v3682 = vpop.f32.mrb[0].mxu0
    %v3683 = vadd.f32 %v3595, %v3682
    %v3684 = vpop.f32.mrb[0].mxu0
    %v3685 = vadd.f32 %v3599, %v3684
    %3686 = vmatprep.mubr.f32.mxu0 0.0
    %3687 = vmatmul.mubr.f32.gmra.mrb[0].mxu0 %v3606
    %v3688 = vpop.f32.mrb[0].mxu0
    %v3689 = vadd.f32 %v3595, %v3688
    %v3690 = vpop.f32.mrb[0].mxu0
    %v3691 = vadd.f32 %v3599, %v3690
    %3692 = vmatprep.mubr.f32.mxu0 0.0
    %3693 = vmatmul.mubr.f32.gmra.mrb[0].mxu0 %v3608
    %v3694 = vpop.f32.mrb[0].mxu0
    %v3695 = vadd.f32 %v3595, %v3694
    %v3696 = vpop.f32.mrb[0].mxu0
    %v3697 = vadd.f32 %v3599, %v3696
    %3698 = vmatprep.mubr.f32.mxu0 0.0
    %3699 = vmatmul.mubr.f32.gmra.mrb[0].mxu0 %v3611
    %v3700 = vpop.f32.mrb[0].mxu0
    %v3701 = vadd.f32 %v3595, %v3700
    %v3702 = vpop.f32.mrb[0].mxu0
    %v3703 = vadd.f32 %v3599, %v3702
    %3704 = vmatprep.mubr.f32.mxu0 0.0
    %3705 = vmatmul.mubr.f32.gmra.mrb[0].mxu0 %v3614
    %v3706 = vpop.f32.mrb[0].mxu0
    %v3707 = vadd.f32 %v3595, %v3706
    %v3708 = vpop.f32.mrb[0].mxu0
    %v3709 = vadd.f32 %v3599, %v3708
    %3710 = vdwg.mxu0
    %v3711 = vmax.f32 %v3683, 0.0
    %v3712 = vmax.f32 %v3685, 0.0
    %v3713 = vmax.f32 %v3689, 0.0
    %v3714 = vmax.f32 %v3691, 0.0
    %v3715 = vmax.f32 %v3695, 0.0
    %v3716 = vmax.f32 %v3697, 0.0
    %v3717 = vmax.f32 %v3701, 0.0
    %v3718 = vmax.f32 %v3703, 0.0
    %v3719 = vmax.f32 %v3707, 0.0
    %v3720 = vmax.f32 %v3709, 0.0
    %v3721 = vld [vmem:[%s51] sm:$0xff]
    %v3722 = vld [vmem:[%s51 + $0x8] sm:$0xff]
    %v3723 = vld [vmem:[%s51 + $0x10] sm:$0xff]
    %v3724 = vld [vmem:[%s51 + $0x18] sm:$0xff]
    %v3725 = vld [vmem:[%s51 + $0x20] sm:$0xff]
    %v3726 = vld [vmem:[%s51 + $0x28] sm:$0xff]
    %v3727 = vld [vmem:[%s51 + $0x30] sm:$0xff]
    %v3728 = vld [vmem:[%s51 + $0x38] sm:$0xff]
    %v3729 = vld [vmem:[%s51 + $0x40] sm:$0xff]
    %v3730 = vld [vmem:[%s51 + $0x48] sm:$0xff]
    %v3731 = vld [vmem:[%s51 + $0x50] sm:$0xff]
    %v3732 = vld [vmem:[%s51 + $0x58] sm:$0xff]
    %v3733 = vld [vmem:[%s51 + $0x60] sm:$0xff]
    %v3734 = vld [vmem:[%s51 + $0x68] sm:$0xff]
    %v3735 = vld [vmem:[%s51 + $0x70] sm:$0xff]
    %v3736 = vld [vmem:[%s51 + $0x78] sm:$0xff]
    %v3737 = vld [vmem:[%s51 + $0x80] sm:$0xff]
    %v3738 = vld [vmem:[%s51 + $0x88] sm:$0xff]
    %v3739 = vld [vmem:[%s51 + $0x90] sm:$0xff]
    %v3740 = vld [vmem:[%s51 + $0x98] sm:$0xff]
    %v3741 = vld [vmem:[%s51 + $0xa0] sm:$0xff]
    %v3742 = vld [vmem:[%s51 + $0xa8] sm:$0xff]
    %v3743 = vld [vmem:[%s51 + $0xb0] sm:$0xff]
    %v3744 = vld [vmem:[%s51 + $0xb8] sm:$0xff]
    %v3745 = vld [vmem:[%s51 + $0xc0] sm:$0xff]
    %v3746 = vld [vmem:[%s51 + $0xc8] sm:$0xff]
    %v3747 = vld [vmem:[%s51 + $0xd0] sm:$0xff]
    %v3748 = vld [vmem:[%s51 + $0xd8] sm:$0xff]
    %v3749 = vld [vmem:[%s51 + $0xe0] sm:$0xff]
    %v3750 = vld [vmem:[%s51 + $0xe8] sm:$0xff]
    %v3751 = vld [vmem:[%s51 + $0xf0] sm:$0xff]
    %v3752 = vld [vmem:[%s51 + $0xf8] sm:$0xff]
    %v3753 = vld [vmem:[%s45] sm:$0x1]
    %v3755 = vlaneseq
    %v3756 = vshrl.u32 %v3755, 7
    %v3757 = vsub.s32 0, %v3756
    %v3758 = vrot.slane %v3753, %v3757
    %3760 = vmatprep.subr.mxu0 0.0
    %3761 = vmatpush1.msra.mxu0 %v3721
    %3762 = vmatprep.subr.mxu0 0.0
    %3763 = vmatpush1.msra.mxu0 %v3722
    %3764 = vmatprep.subr.mxu0 0.0
    %3765 = vmatpush1.msra.mxu0 %v3723
    %3766 = vmatprep.subr.mxu0 0.0
    %3767 = vmatpush1.msra.mxu0 %v3724
    %3768 = vmatprep.subr.mxu0 0.0
    %3769 = vmatpush1.msra.mxu0 %v3725
    %3770 = vmatprep.subr.mxu0 0.0
    %3771 = vmatpush1.msra.mxu0 %v3726
    %3772 = vmatprep.subr.mxu0 0.0
    %3773 = vmatpush1.msra.mxu0 %v3727
    %3774 = vmatprep.subr.mxu0 0.0
    %3775 = vmatpush1.msra.mxu0 %v3728
    %3776 = vmatprep.subr.mxu0 0.0
    %3777 = vmatpush1.msra.mxu0 %v3729
    %3778 = vmatprep.subr.mxu0 0.0
    %3779 = vmatpush1.msra.mxu0 %v3730
    %3780 = vmatprep.subr.mxu0 0.0
    %3781 = vmatpush1.msra.mxu0 %v3731
    %3782 = vmatprep.subr.mxu0 0.0
    %3783 = vmatpush1.msra.mxu0 %v3732
    %3784 = vmatprep.subr.mxu0 0.0
    %3785 = vmatpush1.msra.mxu0 %v3733
    %3786 = vmatprep.subr.mxu0 0.0
    %3787 = vmatpush1.msra.mxu0 %v3734
    %3788 = vmatprep.subr.mxu0 0.0
    %3789 = vmatpush1.msra.mxu0 %v3735
    %3790 = vmatprep.subr.mxu0 0.0
    %3791 = vmatpush1.msra.mxu0 %v3736
    %3792 = vmatprep.subr.mxu0 0.0
    %3793 = vmatpush1.msra.mxu0 %v3737
    %3794 = vmatprep.subr.mxu0 0.0
    %3795 = vmatpush1.msra.mxu0 %v3738
    %3796 = vmatprep.subr.mxu0 0.0
    %3797 = vmatpush1.msra.mxu0 %v3739
    %3798 = vmatprep.subr.mxu0 0.0
    %3799 = vmatpush1.msra.mxu0 %v3740
    %3800 = vmatprep.subr.mxu0 0.0
    %3801 = vmatpush1.msra.mxu0 %v3741
    %3802 = vmatprep.subr.mxu0 0.0
    %3803 = vmatpush1.msra.mxu0 %v3742
    %3804 = vmatprep.subr.mxu0 0.0
    %3805 = vmatpush1.msra.mxu0 %v3743
    %3806 = vmatprep.subr.mxu0 0.0
    %3807 = vmatpush1.msra.mxu0 %v3744
    %3808 = vmatprep.subr.mxu0 0.0
    %3809 = vmatpush1.msra.mxu0 %v3745
    %3810 = vmatprep.subr.mxu0 0.0
    %3811 = vmatpush1.msra.mxu0 %v3746
    %3812 = vmatprep.subr.mxu0 0.0
    %3813 = vmatpush1.msra.mxu0 %v3747
    %3814 = vmatprep.subr.mxu0 0.0
    %3815 = vmatpush1.msra.mxu0 %v3748
    %3816 = vmatprep.subr.mxu0 0.0
    %3817 = vmatpush1.msra.mxu0 %v3749
    %3818 = vmatprep.subr.mxu0 0.0
    %3819 = vmatpush1.msra.mxu0 %v3750
    %3820 = vmatprep.subr.mxu0 0.0
    %3821 = vmatpush1.msra.mxu0 %v3751
    %3822 = vmatprep.subr.mxu0 0.0
    %3823 = vmatpush1.msra.mxu0 %v3752
    %3824 = vmatprep.mubr.f32.mxu0 %v3712
    %3825 = vmatmul.mubr.f32.gmra.mrb[0].mxu0 %v3711
    %v3826 = vpop.f32.mrb[0].mxu0
    %v3827 = vadd.f32 %v3758, %v3826
    %v3828 = vpop.f32.mrb[0].mxu0
    %3829 = vmatprep.mubr.f32.mxu0 %v3714
    %3830 = vmatmul.mubr.f32.gmra.mrb[0].mxu0 %v3713
    %v3831 = vpop.f32.mrb[0].mxu0
    %v3832 = vadd.f32 %v3758, %v3831
    %v3833 = vpop.f32.mrb[0].mxu0
    %3834 = vmatprep.mubr.f32.mxu0 %v3716
    %3835 = vmatmul.mubr.f32.gmra.mrb[0].mxu0 %v3715
    %v3836 = vpop.f32.mrb[0].mxu0
    %v3837 = vadd.f32 %v3758, %v3836
    %v3838 = vpop.f32.mrb[0].mxu0
    %3839 = vmatprep.mubr.f32.mxu0 %v3718
    %3840 = vmatmul.mubr.f32.gmra.mrb[0].mxu0 %v3717
    %v3841 = vpop.f32.mrb[0].mxu0
    %v3842 = vadd.f32 %v3758, %v3841
    %v3843 = vpop.f32.mrb[0].mxu0
    %3844 = vmatprep.mubr.f32.mxu0 %v3720
    %3845 = vmatmul.mubr.f32.gmra.mrb[0].mxu0 %v3719
    %v3846 = vpop.f32.mrb[0].mxu0
    %v3847 = vadd.f32 %v3758, %v3846
    %v3848 = vpop.f32.mrb[0].mxu0
    %3849 = vdwg.mxu0
    %v3850 = vmax.f32 %v3827, 0.0
    %v3851 = vmax.f32 %v3832, 0.0
    %v3852 = vmax.f32 %v3837, 0.0
    %v3853 = vmax.f32 %v3842, 0.0
    %v3854 = vmax.f32 %v3847, 0.0
    %v3855 = vld [vmem:[%s53] sm:$0xff]
    %v3856 = vld [vmem:[%s53 + $0x8] sm:$0xff]
    %v3857 = vld [vmem:[%s53 + $0x10] sm:$0xff]
    %v3858 = vld [vmem:[%s53 + $0x18] sm:$0xff]
    %v3859 = vld [vmem:[%s53 + $0x20] sm:$0xff]
    %v3860 = vld [vmem:[%s53 + $0x28] sm:$0xff]
    %v3861 = vld [vmem:[%s53 + $0x30] sm:$0xff]
    %v3862 = vld [vmem:[%s53 + $0x38] sm:$0xff]
    %v3863 = vld [vmem:[%s53 + $0x40] sm:$0xff]
    %v3864 = vld [vmem:[%s53 + $0x48] sm:$0xff]
    %v3865 = vld [vmem:[%s53 + $0x50] sm:$0xff]
    %v3866 = vld [vmem:[%s53 + $0x58] sm:$0xff]
    %v3867 = vld [vmem:[%s53 + $0x60] sm:$0xff]
    %v3868 = vld [vmem:[%s53 + $0x68] sm:$0xff]
    %v3869 = vld [vmem:[%s53 + $0x70] sm:$0xff]
    %v3870 = vld [vmem:[%s53 + $0x78] sm:$0xff]
    %v3871 = vld [vmem:[%s47] sm:$0x1]
    %v3873 = vlaneseq
    %v3874 = vshrl.u32 %v3873, 7
    %v3875 = vsub.s32 0, %v3874
    %v3876 = vrot.slane %v3871, %v3875
    %3878 = vmatprep.subr.mxu0 0.0
    %3879 = vmatpush1.msra.mxu0 %v3855
    %3880 = vmatprep.subr.mxu0 0.0
    %3881 = vmatpush1.msra.mxu0 %v3856
    %3882 = vmatprep.subr.mxu0 0.0
    %3883 = vmatpush1.msra.mxu0 %v3857
    %3884 = vmatprep.subr.mxu0 0.0
    %3885 = vmatpush1.msra.mxu0 %v3858
    %3886 = vmatprep.subr.mxu0 0.0
    %3887 = vmatpush1.msra.mxu0 %v3859
    %3888 = vmatprep.subr.mxu0 0.0
    %3889 = vmatpush1.msra.mxu0 %v3860
    %3890 = vmatprep.subr.mxu0 0.0
    %3891 = vmatpush1.msra.mxu0 %v3861
    %3892 = vmatprep.subr.mxu0 0.0
    %3893 = vmatpush1.msra.mxu0 %v3862
    %3894 = vmatprep.subr.mxu0 0.0
    %3895 = vmatpush1.msra.mxu0 %v3863
    %3896 = vmatprep.subr.mxu0 0.0
    %3897 = vmatpush1.msra.mxu0 %v3864
    %3898 = vmatprep.subr.mxu0 0.0
    %3899 = vmatpush1.msra.mxu0 %v3865
    %3900 = vmatprep.subr.mxu0 0.0
    %3901 = vmatpush1.msra.mxu0 %v3866
    %3902 = vmatprep.subr.mxu0 0.0
    %3903 = vmatpush1.msra.mxu0 %v3867
    %3904 = vmatprep.subr.mxu0 0.0
    %3905 = vmatpush1.msra.mxu0 %v3868
    %3906 = vmatprep.subr.mxu0 0.0
    %3907 = vmatpush1.msra.mxu0 %v3869
    %3908 = vmatprep.subr.mxu0 0.0
    %3909 = vmatpush1.msra.mxu0 %v3870
    %3910 = vmatprep.subr.mxu0 0.0
    %3911 = vmatpush1.msra.mxu0 0.0
    %3912 = vmatprep.subr.mxu0 0.0
    %3913 = vmatpush1.msra.mxu0 0.0
    %3914 = vmatprep.subr.mxu0 0.0
    %3915 = vmatpush1.msra.mxu0 0.0
    %3916 = vmatprep.subr.mxu0 0.0
    %3917 = vmatpush1.msra.mxu0 0.0
    %3918 = vmatprep.subr.mxu0 0.0
    %3919 = vmatpush1.msra.mxu0 0.0
    %3920 = vmatprep.subr.mxu0 0.0
    %3921 = vmatpush1.msra.mxu0 0.0
    %3922 = vmatprep.subr.mxu0 0.0
    %3923 = vmatpush1.msra.mxu0 0.0
    %3924 = vmatprep.subr.mxu0 0.0
    %3925 = vmatpush1.msra.mxu0 0.0
    %3926 = vmatprep.subr.mxu0 0.0
    %3927 = vmatpush1.msra.mxu0 0.0
    %3928 = vmatprep.subr.mxu0 0.0
    %3929 = vmatpush1.msra.mxu0 0.0
    %3930 = vmatprep.subr.mxu0 0.0
    %3931 = vmatpush1.msra.mxu0 0.0
    %3932 = vmatprep.subr.mxu0 0.0
    %3933 = vmatpush1.msra.mxu0 0.0
    %3934 = vmatprep.subr.mxu0 0.0
    %3935 = vmatpush1.msra.mxu0 0.0
    %3936 = vmatprep.subr.mxu0 0.0
    %3937 = vmatpush1.msra.mxu0 0.0
    %3938 = vmatprep.subr.mxu0 0.0
    %3939 = vmatpush1.msra.mxu0 0.0
    %3940 = vmatprep.subr.mxu0 0.0
    %3941 = vmatpush1.msra.mxu0 0.0
    %3942 = vmatprep.mubr.f32.mxu0 0.0
    %3943 = vmatmul.mubr.f32.gmra.mrb[0].mxu0 %v3850
    %v3944 = vpop.f32.mrb[0].mxu0
    %v3945 = vadd.f32 %v3876, %v3944
    %v3946 = vpop.f32.mrb[0].mxu0
    %3947 = vmatprep.mubr.f32.mxu0 0.0
    %3948 = vmatmul.mubr.f32.gmra.mrb[0].mxu0 %v3851
    %v3949 = vpop.f32.mrb[0].mxu0
    %v3950 = vadd.f32 %v3876, %v3949
    %v3951 = vpop.f32.mrb[0].mxu0
    %3952 = vmatprep.mubr.f32.mxu0 0.0
    %3953 = vmatmul.mubr.f32.gmra.mrb[0].mxu0 %v3852
    %v3954 = vpop.f32.mrb[0].mxu0
    %v3955 = vadd.f32 %v3876, %v3954
    %v3956 = vpop.f32.mrb[0].mxu0
    %3957 = vmatprep.mubr.f32.mxu0 0.0
    %3958 = vmatmul.mubr.f32.gmra.mrb[0].mxu0 %v3853
    %v3959 = vpop.f32.mrb[0].mxu0
    %v3960 = vadd.f32 %v3876, %v3959
    %v3961 = vpop.f32.mrb[0].mxu0
    %3962 = vmatprep.mubr.f32.mxu0 0.0
    %3963 = vmatmul.mubr.f32.gmra.mrb[0].mxu0 %v3854
    %v3964 = vpop.f32.mrb[0].mxu0
    %v3965 = vadd.f32 %v3876, %v3964
    %v3966 = vpop.f32.mrb[0].mxu0
    %3967 = vdwg.mxu0
    %v3968 = vmax.f32 %v3945, 0.0
    %v3969 = vmax.f32 %v3950, 0.0
    %v3970 = vmax.f32 %v3955, 0.0
    %v3971 = vmax.f32 %v3960, 0.0
    %v3972 = vmax.f32 %v3965, 0.0
    %v3973 = vld [vmem:[#allocation28] sm:$0xff]
    %v3974 = vld [vmem:[#allocation28 + $0x8] sm:$0xff]
    %v3975 = vld [vmem:[#allocation28 + $0x10] sm:$0xff]
    %v3976 = vld [vmem:[#allocation28 + $0x18] sm:$0xff]
    %v3977 = vld [vmem:[#allocation28 + $0x20] sm:$0xff]
    %v3978 = vld [vmem:[#allocation28 + $0x28] sm:$0xff]
    %v3979 = vld [vmem:[#allocation28 + $0x30] sm:$0xff]
    %v3980 = vld [vmem:[#allocation28 + $0x38] sm:$0xff]
    %v3981 = vld [vmem:[%s31] sm:$0x3]
    %v3983 = vlaneseq
    %v3984 = vshrl.u32 %v3983, 7
    %v3985 = vsub.s32 0, %v3984
    %v3986 = vrot.slane %v3981, %v3985
    %v3987 = vlaneseq
    %v3988 = vshrl.u32 %v3987, 7
    %v3989 = vsub.s32 1, %v3988
    %v3990 = vrot.slane %v3981, %v3989
    %3993 = vmatprep.subr.mxu0 %v3974
    %3994 = vmatpush1.msra.mxu0 %v3973
    %3995 = vmatprep.subr.mxu0 %v3976
    %3996 = vmatpush1.msra.mxu0 %v3975
    %3997 = vmatprep.subr.mxu0 %v3978
    %3998 = vmatpush1.msra.mxu0 %v3977
    %3999 = vmatprep.subr.mxu0 %v3980
    %4000 = vmatpush1.msra.mxu0 %v3979
    %4001 = vmatprep.subr.mxu0 0.0
    %4002 = vmatpush1.msra.mxu0 0.0
    %4003 = vmatprep.subr.mxu0 0.0
    %4004 = vmatpush1.msra.mxu0 0.0
    %4005 = vmatprep.subr.mxu0 0.0
    %4006 = vmatpush1.msra.mxu0 0.0
    %4007 = vmatprep.subr.mxu0 0.0
    %4008 = vmatpush1.msra.mxu0 0.0
    %4009 = vmatprep.subr.mxu0 0.0
    %4010 = vmatpush1.msra.mxu0 0.0
    %4011 = vmatprep.subr.mxu0 0.0
    %4012 = vmatpush1.msra.mxu0 0.0
    %4013 = vmatprep.subr.mxu0 0.0
    %4014 = vmatpush1.msra.mxu0 0.0
    %4015 = vmatprep.subr.mxu0 0.0
    %4016 = vmatpush1.msra.mxu0 0.0
    %4017 = vmatprep.subr.mxu0 0.0
    %4018 = vmatpush1.msra.mxu0 0.0
    %4019 = vmatprep.subr.mxu0 0.0
    %4020 = vmatpush1.msra.mxu0 0.0
    %4021 = vmatprep.subr.mxu0 0.0
    %4022 = vmatpush1.msra.mxu0 0.0
    %4023 = vmatprep.subr.mxu0 0.0
    %4024 = vmatpush1.msra.mxu0 0.0
    %4025 = vmatprep.subr.mxu0 0.0
    %4026 = vmatpush1.msra.mxu0 0.0
    %4027 = vmatprep.subr.mxu0 0.0
    %4028 = vmatpush1.msra.mxu0 0.0
    %4029 = vmatprep.subr.mxu0 0.0
    %4030 = vmatpush1.msra.mxu0 0.0
    %4031 = vmatprep.subr.mxu0 0.0
    %4032 = vmatpush1.msra.mxu0 0.0
    %4033 = vmatprep.subr.mxu0 0.0
    %4034 = vmatpush1.msra.mxu0 0.0
    %4035 = vmatprep.subr.mxu0 0.0
    %4036 = vmatpush1.msra.mxu0 0.0
    %4037 = vmatprep.subr.mxu0 0.0
    %4038 = vmatpush1.msra.mxu0 0.0
    %4039 = vmatprep.subr.mxu0 0.0
    %4040 = vmatpush1.msra.mxu0 0.0
    %4041 = vmatprep.subr.mxu0 0.0
    %4042 = vmatpush1.msra.mxu0 0.0
    %4043 = vmatprep.subr.mxu0 0.0
    %4044 = vmatpush1.msra.mxu0 0.0
    %4045 = vmatprep.subr.mxu0 0.0
    %4046 = vmatpush1.msra.mxu0 0.0
    %4047 = vmatprep.subr.mxu0 0.0
    %4048 = vmatpush1.msra.mxu0 0.0
    %4049 = vmatprep.subr.mxu0 0.0
    %4050 = vmatpush1.msra.mxu0 0.0
    %4051 = vmatprep.subr.mxu0 0.0
    %4052 = vmatpush1.msra.mxu0 0.0
    %4053 = vmatprep.subr.mxu0 0.0
    %4054 = vmatpush1.msra.mxu0 0.0
    %4055 = vmatprep.subr.mxu0 0.0
    %4056 = vmatpush1.msra.mxu0 0.0
    %4057 = vmatprep.mubr.f32.mxu0 0.0
    %4058 = vmatmul.mubr.f32.gmra.mrb[0].mxu0 %v2690
    %v4059 = vpop.f32.mrb[0].mxu0
    %v4060 = vadd.f32 %v3986, %v4059
    %v4061 = vpop.f32.mrb[0].mxu0
    %v4062 = vadd.f32 %v3990, %v4061
    %4063 = vmatprep.mubr.f32.mxu0 0.0
    %4064 = vmatmul.mubr.f32.gmra.mrb[0].mxu0 %v2693
    %v4065 = vpop.f32.mrb[0].mxu0
    %v4066 = vadd.f32 %v3986, %v4065
    %v4067 = vpop.f32.mrb[0].mxu0
    %v4068 = vadd.f32 %v3990, %v4067
    %4069 = vdwg.mxu0
    %v4070 = vmax.f32 %v4060, 0.0
    %v4071 = vmax.f32 %v4062, 0.0
    %v4072 = vmax.f32 %v4066, 0.0
    %v4073 = vmax.f32 %v4068, 0.0
    %v4074 = vld [vmem:[%s39] sm:$0xff]
    %v4075 = vld [vmem:[%s39 + $0x8] sm:$0xff]
    %v4076 = vld [vmem:[%s39 + $0x10] sm:$0xff]
    %v4077 = vld [vmem:[%s39 + $0x18] sm:$0xff]
    %v4078 = vld [vmem:[%s39 + $0x20] sm:$0xff]
    %v4079 = vld [vmem:[%s39 + $0x28] sm:$0xff]
    %v4080 = vld [vmem:[%s39 + $0x30] sm:$0xff]
    %v4081 = vld [vmem:[%s39 + $0x38] sm:$0xff]
    %v4082 = vld [vmem:[%s39 + $0x40] sm:$0xff]
    %v4083 = vld [vmem:[%s39 + $0x48] sm:$0xff]
    %v4084 = vld [vmem:[%s39 + $0x50] sm:$0xff]
    %v4085 = vld [vmem:[%s39 + $0x58] sm:$0xff]
    %v4086 = vld [vmem:[%s39 + $0x60] sm:$0xff]
    %v4087 = vld [vmem:[%s39 + $0x68] sm:$0xff]
    %v4088 = vld [vmem:[%s39 + $0x70] sm:$0xff]
    %v4089 = vld [vmem:[%s39 + $0x78] sm:$0xff]
    %v4090 = vld [vmem:[%s39 + $0x80] sm:$0xff]
    %v4091 = vld [vmem:[%s39 + $0x88] sm:$0xff]
    %v4092 = vld [vmem:[%s39 + $0x90] sm:$0xff]
    %v4093 = vld [vmem:[%s39 + $0x98] sm:$0xff]
    %v4094 = vld [vmem:[%s39 + $0xa0] sm:$0xff]
    %v4095 = vld [vmem:[%s39 + $0xa8] sm:$0xff]
    %v4096 = vld [vmem:[%s39 + $0xb0] sm:$0xff]
    %v4097 = vld [vmem:[%s39 + $0xb8] sm:$0xff]
    %v4098 = vld [vmem:[%s39 + $0xc0] sm:$0xff]
    %v4099 = vld [vmem:[%s39 + $0xc8] sm:$0xff]
    %v4100 = vld [vmem:[%s39 + $0xd0] sm:$0xff]
    %v4101 = vld [vmem:[%s39 + $0xd8] sm:$0xff]
    %v4102 = vld [vmem:[%s39 + $0xe0] sm:$0xff]
    %v4103 = vld [vmem:[%s39 + $0xe8] sm:$0xff]
    %v4104 = vld [vmem:[%s39 + $0xf0] sm:$0xff]
    %v4105 = vld [vmem:[%s39 + $0xf8] sm:$0xff]
    %v4106 = vld [vmem:[#allocation25] sm:$0x1]
    %v4108 = vlaneseq
    %v4109 = vshrl.u32 %v4108, 7
    %v4110 = vsub.s32 0, %v4109
    %v4111 = vrot.slane %v4106, %v4110
    %4113 = vmatprep.subr.mxu0 0.0
    %4114 = vmatpush1.msra.mxu0 %v4074
    %4115 = vmatprep.subr.mxu0 0.0
    %4116 = vmatpush1.msra.mxu0 %v4075
    %4117 = vmatprep.subr.mxu0 0.0
    %4118 = vmatpush1.msra.mxu0 %v4076
    %4119 = vmatprep.subr.mxu0 0.0
    %4120 = vmatpush1.msra.mxu0 %v4077
    %4121 = vmatprep.subr.mxu0 0.0
    %4122 = vmatpush1.msra.mxu0 %v4078
    %4123 = vmatprep.subr.mxu0 0.0
    %4124 = vmatpush1.msra.mxu0 %v4079
    %4125 = vmatprep.subr.mxu0 0.0
    %4126 = vmatpush1.msra.mxu0 %v4080
    %4127 = vmatprep.subr.mxu0 0.0
    %4128 = vmatpush1.msra.mxu0 %v4081
    %4129 = vmatprep.subr.mxu0 0.0
    %4130 = vmatpush1.msra.mxu0 %v4082
    %4131 = vmatprep.subr.mxu0 0.0
    %4132 = vmatpush1.msra.mxu0 %v4083
    %4133 = vmatprep.subr.mxu0 0.0
    %4134 = vmatpush1.msra.mxu0 %v4084
    %4135 = vmatprep.subr.mxu0 0.0
    %4136 = vmatpush1.msra.mxu0 %v4085
    %4137 = vmatprep.subr.mxu0 0.0
    %4138 = vmatpush1.msra.mxu0 %v4086
    %4139 = vmatprep.subr.mxu0 0.0
    %4140 = vmatpush1.msra.mxu0 %v4087
    %4141 = vmatprep.subr.mxu0 0.0
    %4142 = vmatpush1.msra.mxu0 %v4088
    %4143 = vmatprep.subr.mxu0 0.0
    %4144 = vmatpush1.msra.mxu0 %v4089
    %4145 = vmatprep.subr.mxu0 0.0
    %4146 = vmatpush1.msra.mxu0 %v4090
    %4147 = vmatprep.subr.mxu0 0.0
    %4148 = vmatpush1.msra.mxu0 %v4091
    %4149 = vmatprep.subr.mxu0 0.0
    %4150 = vmatpush1.msra.mxu0 %v4092
    %4151 = vmatprep.subr.mxu0 0.0
    %4152 = vmatpush1.msra.mxu0 %v4093
    %4153 = vmatprep.subr.mxu0 0.0
    %4154 = vmatpush1.msra.mxu0 %v4094
    %4155 = vmatprep.subr.mxu0 0.0
    %4156 = vmatpush1.msra.mxu0 %v4095
    %4157 = vmatprep.subr.mxu0 0.0
    %4158 = vmatpush1.msra.mxu0 %v4096
    %4159 = vmatprep.subr.mxu0 0.0
    %4160 = vmatpush1.msra.mxu0 %v4097
    %4161 = vmatprep.subr.mxu0 0.0
    %4162 = vmatpush1.msra.mxu0 %v4098
    %4163 = vmatprep.subr.mxu0 0.0
    %4164 = vmatpush1.msra.mxu0 %v4099
    %4165 = vmatprep.subr.mxu0 0.0
    %4166 = vmatpush1.msra.mxu0 %v4100
    %4167 = vmatprep.subr.mxu0 0.0
    %4168 = vmatpush1.msra.mxu0 %v4101
    %4169 = vmatprep.subr.mxu0 0.0
    %4170 = vmatpush1.msra.mxu0 %v4102
    %4171 = vmatprep.subr.mxu0 0.0
    %4172 = vmatpush1.msra.mxu0 %v4103
    %4173 = vmatprep.subr.mxu0 0.0
    %4174 = vmatpush1.msra.mxu0 %v4104
    %4175 = vmatprep.subr.mxu0 0.0
    %4176 = vmatpush1.msra.mxu0 %v4105
    %4177 = vmatprep.mubr.f32.mxu0 %v4071
    %4178 = vmatmul.mubr.f32.gmra.mrb[0].mxu0 %v4070
    %v4179 = vpop.f32.mrb[0].mxu0
    %v4180 = vadd.f32 %v4111, %v4179
    %v4181 = vpop.f32.mrb[0].mxu0
    %4182 = vmatprep.mubr.f32.mxu0 %v4073
    %4183 = vmatmul.mubr.f32.gmra.mrb[0].mxu0 %v4072
    %v4184 = vpop.f32.mrb[0].mxu0
    %v4185 = vadd.f32 %v4111, %v4184
    %v4186 = vpop.f32.mrb[0].mxu0
    %4187 = vdwg.mxu0
    %v4188 = vmax.f32 %v4180, 0.0
    %v4189 = vmax.f32 %v4185, 0.0
    %v4190 = vld [vmem:[%s41] sm:$0xff]
    %v4191 = vld [vmem:[%s41 + $0x8] sm:$0xff]
    %v4192 = vld [vmem:[%s41 + $0x10] sm:$0xff]
    %v4193 = vld [vmem:[%s41 + $0x18] sm:$0xff]
    %v4194 = vld [vmem:[%s41 + $0x20] sm:$0xff]
    %v4195 = vld [vmem:[%s41 + $0x28] sm:$0xff]
    %v4196 = vld [vmem:[%s41 + $0x30] sm:$0xff]
    %v4197 = vld [vmem:[%s41 + $0x38] sm:$0xff]
    %v4198 = vld [vmem:[%s41 + $0x40] sm:$0xff]
    %v4199 = vld [vmem:[%s41 + $0x48] sm:$0xff]
    %v4200 = vld [vmem:[%s41 + $0x50] sm:$0xff]
    %v4201 = vld [vmem:[%s41 + $0x58] sm:$0xff]
    %v4202 = vld [vmem:[%s41 + $0x60] sm:$0xff]
    %v4203 = vld [vmem:[%s41 + $0x68] sm:$0xff]
    %v4204 = vld [vmem:[%s41 + $0x70] sm:$0xff]
    %v4205 = vld [vmem:[%s41 + $0x78] sm:$0xff]
    %v4206 = vld [vmem:[#allocation26] sm:$0x1]
    %v4208 = vlaneseq
    %v4209 = vshrl.u32 %v4208, 7
    %v4210 = vsub.s32 0, %v4209
    %v4211 = vrot.slane %v4206, %v4210
    %4213 = vmatprep.subr.mxu0 0.0
    %4214 = vmatpush1.msra.mxu0 %v4190
    %4215 = vmatprep.subr.mxu0 0.0
    %4216 = vmatpush1.msra.mxu0 %v4191
    %4217 = vmatprep.subr.mxu0 0.0
    %4218 = vmatpush1.msra.mxu0 %v4192
    %4219 = vmatprep.subr.mxu0 0.0
    %4220 = vmatpush1.msra.mxu0 %v4193
    %4221 = vmatprep.subr.mxu0 0.0
    %4222 = vmatpush1.msra.mxu0 %v4194
    %4223 = vmatprep.subr.mxu0 0.0
    %4224 = vmatpush1.msra.mxu0 %v4195
    %4225 = vmatprep.subr.mxu0 0.0
    %4226 = vmatpush1.msra.mxu0 %v4196
    %4227 = vmatprep.subr.mxu0 0.0
    %4228 = vmatpush1.msra.mxu0 %v4197
    %4229 = vmatprep.subr.mxu0 0.0
    %4230 = vmatpush1.msra.mxu0 %v4198
    %4231 = vmatprep.subr.mxu0 0.0
    %4232 = vmatpush1.msra.mxu0 %v4199
    %4233 = vmatprep.subr.mxu0 0.0
    %4234 = vmatpush1.msra.mxu0 %v4200
    %4235 = vmatprep.subr.mxu0 0.0
    %4236 = vmatpush1.msra.mxu0 %v4201
    %4237 = vmatprep.subr.mxu0 0.0
    %4238 = vmatpush1.msra.mxu0 %v4202
    %4239 = vmatprep.subr.mxu0 0.0
    %4240 = vmatpush1.msra.mxu0 %v4203
    %4241 = vmatprep.subr.mxu0 0.0
    %4242 = vmatpush1.msra.mxu0 %v4204
    %4243 = vmatprep.subr.mxu0 0.0
    %4244 = vmatpush1.msra.mxu0 %v4205
    %4245 = vmatprep.subr.mxu0 0.0
    %4246 = vmatpush1.msra.mxu0 0.0
    %4247 = vmatprep.subr.mxu0 0.0
    %4248 = vmatpush1.msra.mxu0 0.0
    %4249 = vmatprep.subr.mxu0 0.0
    %4250 = vmatpush1.msra.mxu0 0.0
    %4251 = vmatprep.subr.mxu0 0.0
    %4252 = vmatpush1.msra.mxu0 0.0
    %4253 = vmatprep.subr.mxu0 0.0
    %4254 = vmatpush1.msra.mxu0 0.0
    %4255 = vmatprep.subr.mxu0 0.0
    %4256 = vmatpush1.msra.mxu0 0.0
    %4257 = vmatprep.subr.mxu0 0.0
    %4258 = vmatpush1.msra.mxu0 0.0
    %4259 = vmatprep.subr.mxu0 0.0
    %4260 = vmatpush1.msra.mxu0 0.0
    %4261 = vmatprep.subr.mxu0 0.0
    %4262 = vmatpush1.msra.mxu0 0.0
    %4263 = vmatprep.subr.mxu0 0.0
    %4264 = vmatpush1.msra.mxu0 0.0
    %4265 = vmatprep.subr.mxu0 0.0
    %4266 = vmatpush1.msra.mxu0 0.0
    %4267 = vmatprep.subr.mxu0 0.0
    %4268 = vmatpush1.msra.mxu0 0.0
    %4269 = vmatprep.subr.mxu0 0.0
    %4270 = vmatpush1.msra.mxu0 0.0
    %4271 = vmatprep.subr.mxu0 0.0
    %4272 = vmatpush1.msra.mxu0 0.0
    %4273 = vmatprep.subr.mxu0 0.0
    %4274 = vmatpush1.msra.mxu0 0.0
    %4275 = vmatprep.subr.mxu0 0.0
    %4276 = vmatpush1.msra.mxu0 0.0
    %4277 = vmatprep.mubr.f32.mxu0 0.0
    %4278 = vmatmul.mubr.f32.gmra.mrb[0].mxu0 %v4188
    %v4279 = vpop.f32.mrb[0].mxu0
    %v4280 = vadd.f32 %v4211, %v4279
    %v4281 = vpop.f32.mrb[0].mxu0
    %4282 = vmatprep.mubr.f32.mxu0 0.0
    %4283 = vmatmul.mubr.f32.gmra.mrb[0].mxu0 %v4189
    %v4284 = vpop.f32.mrb[0].mxu0
    %v4285 = vadd.f32 %v4211, %v4284
    %v4286 = vpop.f32.mrb[0].mxu0
    %4287 = vdwg.mxu0
    %v4288 = vmax.f32 %v4280, 0.0
    %v4289 = vmax.f32 %v4285, 0.0
    %v4290 = vadd.f32 %v4288, %v3968
    %v4291 = vadd.f32 %v4289, %v3969
    %v4294 = vrot.slane %v3969, 4
    %v4295 = vrot.slane %v3970, 4
    %v4296 = vsel %vm2783, %v4294, %v4295
    %v4299 = vadd.f32 %v4290, %v4296
    %v4300 = vadd.f32 %v4291, %v4295
    %v4301 = vadd.f32 %v4299, %v3971
    %v4302 = vadd.f32 %v4300, %v3972
    %4305 = vrot.lane.b32.xlu0 %v2223, 64
    %v4306 = vpop.permute.xlu0 %4305
    %4307 = vrot.lane.b32.xlu0 %v2224, 64
    %v4308 = vpop.permute.xlu0 %4307
    %4313 = vrot.lane.b32.xlu0 %v2227, 64
    %v4314 = vpop.permute.xlu0 %4313
    %4315 = vrot.lane.b32.xlu0 %v2228, 64
    %v4316 = vpop.permute.xlu0 %4315
    %v4319 = vsel %vm937, %v2550, %v4306
    %v4320 = vsel %vm937, %v2551, %v4308
    %v4321 = vsel %vm937, %v2225, %v4314
    %v4322 = vsel %vm937, %v2226, %v4316
    %4323 = vst [vmem:[%s113] sm:$0xff] %v4319
    %4324 = vst [vmem:[%s113 + $0x8] sm:$0xff] %v4321
    %4325 = vst [vmem:[%s113 + $0x10] sm:$0xff] %v4320
    %4326 = vst [vmem:[%s113 + $0x18] sm:$0xff] %v4322
    %4328 = vrot.lane.b32.xlu0 %v3968, 64
    %v4329 = vpop.permute.xlu0 %4328
    %4330 = vrot.lane.b32.xlu0 %v3969, 64
    %v4331 = vpop.permute.xlu0 %4330
    %4336 = vrot.lane.b32.xlu0 %v3971, 64
    %v4337 = vpop.permute.xlu0 %4336
    %4338 = vrot.lane.b32.xlu0 %v3972, 64
    %v4339 = vpop.permute.xlu0 %4338
    %v4342 = vsel %vm937, %v4301, %v4329
    %v4343 = vsel %vm937, %v4302, %v4331
    %v4344 = vsel %vm937, %v4296, %v4337
    %v4345 = vsel %vm937, %v4295, %v4339
    %v4346 = vsel %vm2783, %v4343, 0.0
    %v4347 = vsel %vm2783, %v4345, 0.0
    %4348 = vst [vmem:[%s115] sm:$0xff] %v4342
    %4349 = vst [vmem:[%s115 + $0x8] sm:$0xff] %v4344
    %4350 = vst [vmem:[%s115 + $0x10] sm:$0xff] %v4346
    %4351 = vst [vmem:[%s115 + $0x18] sm:$0xff] %v4347
    %v4352 = vsel %vm2783, %v4302, 0.0
    %v4354 = vsel %vm937, %v2550, 0
    %v4357 = vsel %vm937, %v2551, 0
    %v4360 = vsel %vm937, %v4301, 0
    %v4363 = vsel %vm937, %v4352, 0
    %4365 = vmatprep.subr.mxu0 0.0
    %4366 = vmatpush1.xpose.msra.mxu0 %v4360
    %4367 = vmatprep.subr.mxu0 0.0
    %4368 = vmatpush1.xpose.msra.mxu0 %v4363
    %4369 = vmatprep.subr.mxu0 0.0
    %4370 = vmatpush1.xpose.msra.mxu0 0.0
    %4371 = vmatprep.subr.mxu0 0.0
    %4372 = vmatpush1.xpose.msra.mxu0 0.0
    %4373 = vmatprep.subr.mxu0 0.0
    %4374 = vmatpush1.xpose.msra.mxu0 0.0
    %4375 = vmatprep.subr.mxu0 0.0
    %4376 = vmatpush1.xpose.msra.mxu0 0.0
    %4377 = vmatprep.subr.mxu0 0.0
    %4378 = vmatpush1.xpose.msra.mxu0 0.0
    %4379 = vmatprep.subr.mxu0 0.0
    %4380 = vmatpush1.xpose.msra.mxu0 0.0
    %4381 = vmatprep.subr.mxu0 0.0
    %4382 = vmatpush1.xpose.msra.mxu0 0.0
    %4383 = vmatprep.subr.mxu0 0.0
    %4384 = vmatpush1.xpose.msra.mxu0 0.0
    %4385 = vmatprep.subr.mxu0 0.0
    %4386 = vmatpush1.xpose.msra.mxu0 0.0
    %4387 = vmatprep.subr.mxu0 0.0
    %4388 = vmatpush1.xpose.msra.mxu0 0.0
    %4389 = vmatprep.subr.mxu0 0.0
    %4390 = vmatpush1.xpose.msra.mxu0 0.0
    %4391 = vmatprep.subr.mxu0 0.0
    %4392 = vmatpush1.xpose.msra.mxu0 0.0
    %4393 = vmatprep.subr.mxu0 0.0
    %4394 = vmatpush1.xpose.msra.mxu0 0.0
    %4395 = vmatprep.subr.mxu0 0.0
    %4396 = vmatpush1.xpose.msra.mxu0 0.0
    %4397 = vmatprep.subr.mxu0 0.0
    %4398 = vmatpush1.xpose.msra.mxu0 0.0
    %4399 = vmatprep.subr.mxu0 0.0
    %4400 = vmatpush1.xpose.msra.mxu0 0.0
    %4401 = vmatprep.subr.mxu0 0.0
    %4402 = vmatpush1.xpose.msra.mxu0 0.0
    %4403 = vmatprep.subr.mxu0 0.0
    %4404 = vmatpush1.xpose.msra.mxu0 0.0
    %4405 = vmatprep.subr.mxu0 0.0
    %4406 = vmatpush1.xpose.msra.mxu0 0.0
    %4407 = vmatprep.subr.mxu0 0.0
    %4408 = vmatpush1.xpose.msra.mxu0 0.0
    %4409 = vmatprep.subr.mxu0 0.0
    %4410 = vmatpush1.xpose.msra.mxu0 0.0
    %4411 = vmatprep.subr.mxu0 0.0
    %4412 = vmatpush1.xpose.msra.mxu0 0.0
    %4413 = vmatprep.subr.mxu0 0.0
    %4414 = vmatpush1.xpose.msra.mxu0 0.0
    %4415 = vmatprep.subr.mxu0 0.0
    %4416 = vmatpush1.xpose.msra.mxu0 0.0
    %4417 = vmatprep.subr.mxu0 0.0
    %4418 = vmatpush1.xpose.msra.mxu0 0.0
    %4419 = vmatprep.subr.mxu0 0.0
    %4420 = vmatpush1.xpose.msra.mxu0 0.0
    %4421 = vmatprep.subr.mxu0 0.0
    %4422 = vmatpush1.xpose.msra.mxu0 0.0
    %4423 = vmatprep.subr.mxu0 0.0
    %4424 = vmatpush1.xpose.msra.mxu0 0.0
    %4425 = vmatprep.subr.mxu0 0.0
    %4426 = vmatpush1.xpose.msra.mxu0 0.0
    %4427 = vmatprep.subr.mxu0 0.0
    %4428 = vmatpush1.xpose.msra.mxu0 0.0
    %4429 = vmatprep.mubr.f32.mxu0 0.0
    %4430 = vmatmul.mubr.f32.gmra.mrb[0].mxu0 %v4354
    %v4431 = vpop.f32.mrb[0].mxu0
    %v4432 = vadd.f32 0.0, %v4431
    %v4433 = vpop.f32.mrb[0].mxu0
    %4434 = vmatprep.mubr.f32.mxu0 0.0
    %4435 = vmatmul.mubr.f32.gmra.mrb[0].mxu0 %v4357
    %v4436 = vpop.f32.mrb[0].mxu0
    %v4437 = vadd.f32 0.0, %v4436
    %v4438 = vpop.f32.mrb[0].mxu0
    %4439 = vdwg.mxu0
    %4440 = vst.msk [vmem:[#allocation70] sm:$0xff] %vm810, %v4432
    %4441 = vst.msk [vmem:[#allocation70 + $0x8] sm:$0xff] %vm810, %v4437
    // Predicated region
    $region402: #{my_model.1} parent=1 // pred_check
      _
    $region403: #{my_model.1} parent=1 // pred_check_branch
      %4443 = sbr.rel (0) target = $region405
    $region404: #{my_model.1} parent=1 // pred_region
      _
    $region405: #{my_model.1} parent=1 // pred_fallthru
      _
    // Predicated region
    $region406: #{my_model.1} parent=1 // pred_check
      _
    $region407: #{my_model.1} parent=1 // pred_check_branch
      %4445 = sbr.rel (0) target = $region409
    $region408: #{my_model.1} parent=1 // pred_region
      _
    $region409: #{my_model.1} parent=1 // pred_fallthru
      _
    // Predicated region
    $region410: #{my_model.1} parent=1 // pred_check
      _
    $region411: #{my_model.1} parent=1 // pred_check_branch
      %4447 = sbr.rel (0) target = $region413
    $region412: #{my_model.1} parent=1 // pred_region
      %s4449 = ssub.s32 256, 256
      %4450 = vsyncadd [#allocation4], %s4449
      %s4451 = sshll.u32 [#allocation70], 4
      %s4452 = int_to_ptr.vmem [resolvable:$true] %s4451
      %4457 = dma.vmem_to_hbm [thread:$0]  %s4452, 256, %s117, [#allocation4], 128, 128, 8
    $region413: #{my_model.1} parent=1 // pred_fallthru
      _
    // Predicated region
    $region414: #{my_model.1} parent=1 // pred_check
      _
    $region415: #{my_model.1} parent=1 // pred_check_branch
      %4459 = sbr.rel (0) target = $region417
    $region416: #{my_model.1} parent=1 // pred_region
      _
    $region417: #{my_model.1} parent=1 // pred_fallthru
      _
    // Predicated region
    $region418: #{my_model.1} parent=1 // pred_check
      _
    $region419: #{my_model.1} parent=1 // pred_check_branch
      %4461 = sbr.rel (0) target = $region421
    $region420: #{my_model.1} parent=1 // pred_region
      _
    $region421: #{my_model.1} parent=1 // pred_fallthru
      _
    // Predicated region
    $region422: #{my_model.1} parent=1 // pred_check
      _
    $region423: #{my_model.1} parent=1 // pred_check_branch
      %4463 = sbr.rel (0) target = $region425
    $region424: #{my_model.1} parent=1 // pred_region
      %4464 = dma.done [#allocation4], 256
    $region425: #{my_model.1} parent=1 // pred_fallthru
      _
    %4465 = vsyncpa [#allocation3], 1
    %4466 = vsyncpa [#allocation6], 1
    %4467 = vsyncpa [#allocation9], 1
    %4468 = vsyncpa [#allocation12], 1
    %4469 = vsyncpa [#allocation15], 1
    %4470 = vsyncpa [#allocation18], 1
    %4471 = vsyncpa [#allocation21], 1
    %4472 = vsyncpa [#allocation24], 1
    %4473 = vsyncpa [#allocation27], 1
    %4474 = vsyncpa [#allocation30], 1
    %4475 = vsyncpa [#allocation33], 1
    %4476 = vsyncpa [#allocation36], 1
    %4477 = vsyncpa [#allocation39], 1
    %4478 = vsyncpa [#allocation42], 1
    %4479 = vsyncpa [#allocation45], 1
    %4480 = vsyncpa [#allocation48], 1
    %4481 = vsyncpa [#allocation51], 1
    %4482 = vsyncpa [#allocation54], 1
    %4483 = vsyncpa [#allocation57], 1
    %4484 = vsyncpa [#allocation60], 1
    %4485 = vsyncpa [#allocation63], 1
    %4486 = vsyncpa [#allocation66], 1
    %4487 = vsyncpa [#allocation69], 1
    %4488 = vsyncpa [#allocation4], 1

</llo_original>
